<compile_context>
chip_gen: v6e
topology: v6e:2x2x1
jax: 0.10.0
libtpu: 0.0.40
codegen_flags: <defaults>
</compile_context>

<pallas_src>
import functools

import jax
import jax.numpy as jnp
import numpy as np
from jax import lax
from jax.experimental import pallas as pl
from jax.experimental.pallas import tpu as pltpu

_CompilerParams = getattr(pltpu, "CompilerParams", None) or getattr(
    pltpu, "TPUCompilerParams", None)
_MemSpace = getattr(pltpu, "MemorySpace", None) or getattr(
    pltpu, "TPUMemorySpace", None)


def _swap01(t):
    """(A, B, C) -> (B, A, C); the minor (lane) dim stays in place."""
    if hasattr(pltpu, "einshape"):
        return pltpu.einshape("abc->bac", t)
    # TODO(synk): fallback only taken if einshape is unavailable in this JAX.
    return jnp.transpose(t, (1, 0, 2))


def _proj(x2d_b16, w_ref, b_ref):
    """1x1 conv as one 2-D MXU matmul: (HW, Cin) @ (Cin, Cout) + b."""
    y = jnp.dot(x2d_b16, w_ref[...].astype(jnp.bfloat16),
                preferred_element_type=jnp.float32)
    return y + b_ref[...]


def cc_attention_kernel(x_ref, wq_ref, bq_ref, wk_ref, bk_ref, wv_ref, bv_ref,
                        gamma_ref, out_ref, *, H, W):
    x2 = x_ref[0]                                   # (H*W, C) f32, row = h*W + w
    C = x2.shape[-1]
    x2_b = x2.astype(jnp.bfloat16)

    # 1x1-conv projections: one MXU matmul each, f32 accumulation.
    q2 = _proj(x2_b, wq_ref, bq_ref)                # (H*W, C8)
    k2 = _proj(x2_b, wk_ref, bk_ref)                # (H*W, C8)
    v2 = _proj(x2_b, wv_ref, bv_ref)                # (H*W, C)

    q_hw = q2.reshape(H, W, -1)                     # (H, W, C8)
    k_hw = k2.reshape(H, W, -1)
    v_hw = v2.reshape(H, W, C)
    q_wh = _swap01(q_hw)                            # (W, H, C8)
    k_wh = _swap01(k_hw)
    v_wh = _swap01(v_hw)                            # (W, H, C)

    bf = jnp.bfloat16
    # energy_W[h, w, w'] = <q[h,w,:], k[h,w',:]>
    e_w = lax.dot_general(q_hw.astype(bf), k_hw.astype(bf),
                          (((2,), (2,)), ((0,), (0,))),
                          preferred_element_type=jnp.float32)    # (H, W, W)
    # energy_H[w, h, h'] = <q[h,w,:], k[h',w,:]>
    e_h = lax.dot_general(q_wh.astype(bf), k_wh.astype(bf),
                          (((2,), (2,)), ((0,), (0,))),
                          preferred_element_type=jnp.float32)    # (W, H, H)

    # Joint softmax per pixel (h, w) over the concatenated (H + W) logits.
    m_h = jnp.max(e_h, axis=2)                      # (W, H)
    m_w = jnp.max(e_w, axis=2)                      # (H, W)
    m = jnp.maximum(m_h.T, m_w)                     # (H, W)  (valid stabilizer)
    p_w = jnp.exp(e_w - m[:, :, None])              # (H, W, W)
    p_h = jnp.exp(e_h - m.T[:, :, None])            # (W, H, H)
    # Zero the h == h' diagonal (reference masks it with -inf pre-softmax).
    eye = (lax.broadcasted_iota(jnp.int32, (H, H), 0)
           == lax.broadcasted_iota(jnp.int32, (H, H), 1))
    p_h = p_h * jnp.where(eye, 0.0, 1.0)[None, :, :]
    denom = jnp.sum(p_h, axis=2).T + jnp.sum(p_w, axis=2)        # (H, W)
    inv = pl.reciprocal(denom, approx=True)                      # (H, W)

    # PV matmuls on unnormalized p; normalize once at the end.
    out_w = lax.dot_general(p_w.astype(bf), v_hw.astype(bf),
                            (((2,), (1,)), ((0,), (0,))),
                            preferred_element_type=jnp.float32)  # (H, W, C)
    out_h = lax.dot_general(p_h.astype(bf), v_wh.astype(bf),
                            (((2,), (1,)), ((0,), (0,))),
                            preferred_element_type=jnp.float32)  # (W, H, C)
    out_h = _swap01(out_h)                                       # (H, W, C)

    # Fused epilogue: gamma * (out_W + out_H) / denom + x, single output write.
    gamma = gamma_ref[0]
    x_hwc = x2.reshape(H, W, C)
    y = gamma * ((out_w + out_h) * inv[:, :, None]) + x_hwc
    out_ref[0] = y.astype(out_ref.dtype)


def cc_module_forward(x_nchw, params):
    wq, bq = params["wq"], params["bq"]
    wk, bk = params["wk"], params["bk"]
    wv, bv = params["wv"], params["bv"]
    gamma = jnp.reshape(jnp.asarray(params["gamma"], jnp.float32), (1,))

    B, C, H, W = x_nchw.shape
    C8 = wq.shape[1]
    # NCHW -> NHWC (unavoidable layout change), flattened to (B, H*W, C) so the
    # projections are plain 2-D matmuls inside the kernel.
    x_flat = jnp.transpose(x_nchw, (0, 2, 3, 1)).reshape(B, H * W, C)

    kernel = functools.partial(cc_attention_kernel, H=H, W=W)
    out_hwc = pl.pallas_call(
        kernel,
        out_shape=jax.ShapeDtypeStruct((B, H, W, C), jnp.float32),
        grid=(B,),
        in_specs=[
            pl.BlockSpec((1, H * W, C), lambda b: (b, 0, 0)),
            pl.BlockSpec((C, C8), lambda b: (0, 0)),
            pl.BlockSpec((1, C8), lambda b: (0, 0)),
            pl.BlockSpec((C, C8), lambda b: (0, 0)),
            pl.BlockSpec((1, C8), lambda b: (0, 0)),
            pl.BlockSpec((C, C), lambda b: (0, 0)),
            pl.BlockSpec((1, C), lambda b: (0, 0)),
            pl.BlockSpec(memory_space=_MemSpace.SMEM),   # gamma scalar
        ],
        out_specs=pl.BlockSpec((1, H, W, C), lambda b: (b, 0, 0, 0)),
        compiler_params=_CompilerParams(
            dimension_semantics=("parallel",),
            vmem_limit_bytes=64 * 1024 * 1024),
    )(x_flat, wq, bq, wk, bk, wv, bv, gamma)

    return jnp.transpose(out_hwc, (0, 3, 1, 2))      # NHWC -> NCHW


def cc_module_reference(x, params):
    """Pure-JAX (f32) replica of the PyTorch forward (NCHW) used for validation."""
    wq, bq = params["wq"], params["bq"]
    wk, bk = params["wk"], params["bk"]
    wv, bv = params["wv"], params["bv"]
    gamma = params["gamma"]
    B, C, H, W = x.shape
    q = jnp.einsum('bchw,cd->bdhw', x, wq) + bq.reshape(1, -1, 1, 1)
    k = jnp.einsum('bchw,cd->bdhw', x, wk) + bk.reshape(1, -1, 1, 1)
    v = jnp.einsum('bchw,cd->bdhw', x, wv) + bv.reshape(1, -1, 1, 1)
    e_h = jnp.einsum('bdhw,bdgw->bhwg', q, k)
    diag = jnp.eye(H, dtype=bool)[None, :, None, :]
    e_h = jnp.where(diag, -jnp.inf, e_h)
    e_w = jnp.einsum('bdhw,bdhg->bhwg', q, k)
    conc = jax.nn.softmax(jnp.concatenate([e_h, e_w], axis=3), axis=3)
    att_h, att_w = conc[..., :H], conc[..., H:]
    out_h = jnp.einsum('bdgw,bhwg->bdhw', v, att_h)
    out_w = jnp.einsum('bdhg,bhwg->bdhw', v, att_w)
    return gamma * (out_h + out_w) + x


if __name__ == "__main__":
    B, in_dim, H, W = 2, 32, 8, 8
    C8 = in_dim // 8

    key = jax.random.PRNGKey(0)
    kx, k1, k2, k3, k4, k5, k6 = jax.random.split(key, 7)
    x = jax.random.normal(kx, (B, in_dim, H, W), dtype=jnp.float32)

    params = {
        # Conv2d 1x1 weights stored as (C_in, C_out) for the matmul form.
        "wq": 0.1 * jax.random.normal(k1, (in_dim, C8), dtype=jnp.float32),
        "bq": 0.1 * jax.random.normal(k2, (1, C8), dtype=jnp.float32),
        "wk": 0.1 * jax.random.normal(k3, (in_dim, C8), dtype=jnp.float32),
        "bk": 0.1 * jax.random.normal(k4, (1, C8), dtype=jnp.float32),
        "wv": 0.1 * jax.random.normal(k5, (in_dim, in_dim), dtype=jnp.float32),
        "bv": 0.1 * jax.random.normal(k6, (1, in_dim), dtype=jnp.float32),
        # Module inits gamma to 0 (output == x); use a nonzero value so the
        # attention path is actually exercised.
        "gamma": jnp.float32(0.5),
    }

    fwd = jax.jit(cc_module_forward)
    out = jax.block_until_ready(fwd(x, params))

    ref = jax.block_until_ready(cc_module_reference(x, params))
    # Tolerance relaxed vs the pure-f32 version: the kernel uses bf16 MXU
    # operands (f32 accumulation) and an approximate EUP reciprocal.
    np.testing.assert_allclose(np.asarray(out), np.asarray(ref),
                               rtol=5e-2, atol=5e-2)
    assert out.shape == (B, in_dim, H, W)
    print("KERNEL_OK")
</pallas_src>

<mosaic_0001>
module attributes {stable_mosaic.version = 11 : i64} {
  func.func @cc_attention_kernel(%arg0: i32, %arg1: memref<1x64x32xf32, #tpu.memory_space<vmem>>, %arg2: memref<32x4xf32, #tpu.memory_space<vmem>>, %arg3: memref<1x4xf32, #tpu.memory_space<vmem>>, %arg4: memref<32x4xf32, #tpu.memory_space<vmem>>, %arg5: memref<1x4xf32, #tpu.memory_space<vmem>>, %arg6: memref<32x32xf32, #tpu.memory_space<vmem>>, %arg7: memref<1x32xf32, #tpu.memory_space<vmem>>, %arg8: memref<1xf32, #tpu.memory_space<smem>>, %arg9: memref<1x8x8x32xf32, #tpu.memory_space<vmem>>) attributes {dimension_semantics = [#tpu.dimension_semantics<parallel>], iteration_bounds = array<i64: 2>, scalar_prefetch = 0 : i64, scratch_operands = 0 : i64, tpu.core_type = #tpu.core_type<tc>, window_params = [{transform_indices = @transform_0, window_bounds = array<i64: 1, 64, 32>}, {pipeline_mode = #tpu.pipeline_mode<synchronous>, transform_indices = @transform_1, window_bounds = array<i64: 32, 4>}, {pipeline_mode = #tpu.pipeline_mode<synchronous>, transform_indices = @transform_2, window_bounds = array<i64: 1, 4>}, {pipeline_mode = #tpu.pipeline_mode<synchronous>, transform_indices = @transform_3, window_bounds = array<i64: 32, 4>}, {pipeline_mode = #tpu.pipeline_mode<synchronous>, transform_indices = @transform_4, window_bounds = array<i64: 1, 4>}, {pipeline_mode = #tpu.pipeline_mode<synchronous>, transform_indices = @transform_5, window_bounds = array<i64: 32, 32>}, {pipeline_mode = #tpu.pipeline_mode<synchronous>, transform_indices = @transform_6, window_bounds = array<i64: 1, 32>}, {transform_indices = @transform_7, window_bounds = array<i64: 1>}, {transform_indices = @transform_8, window_bounds = array<i64: 1, 8, 8, 32>}]} {
    %c0 = arith.constant 0 : index
    %c0_0 = arith.constant 0 : index
    %c0_1 = arith.constant 0 : index
    %0 = vector.load %arg1[%c0, %c0_0, %c0_1] : memref<1x64x32xf32, #tpu.memory_space<vmem>>, vector<1x64x32xf32>
    %1 = vector.shape_cast %0 : vector<1x64x32xf32> to vector<64x32xf32>
    %2 = arith.truncf %1 : vector<64x32xf32> to vector<64x32xbf16>
    %c0_2 = arith.constant 0 : index
    %c0_3 = arith.constant 0 : index
    %3 = vector.load %arg2[%c0_2, %c0_3] : memref<32x4xf32, #tpu.memory_space<vmem>>, vector<32x4xf32>
    %4 = arith.truncf %3 : vector<32x4xf32> to vector<32x4xbf16>
    %cst = arith.constant dense<0.000000e+00> : vector<64x4xf32>
    %5 = tpu.matmul %2, %4, %cst {dimension_numbers = #tpu.dot_dimension_numbers<[1], [0], [0], [1], [0, 0, 1, 1], [], []>} : vector<64x32xbf16>, vector<32x4xbf16>, vector<64x4xf32> -> vector<64x4xf32>
    %c0_4 = arith.constant 0 : index
    %c0_5 = arith.constant 0 : index
    %6 = vector.load %arg3[%c0_4, %c0_5] : memref<1x4xf32, #tpu.memory_space<vmem>>, vector<1x4xf32>
    %7 = vector.broadcast %6 : vector<1x4xf32> to vector<64x4xf32>
    %8 = arith.addf %5, %7 : vector<64x4xf32>
    %c0_6 = arith.constant 0 : index
    %c0_7 = arith.constant 0 : index
    %9 = vector.load %arg4[%c0_6, %c0_7] : memref<32x4xf32, #tpu.memory_space<vmem>>, vector<32x4xf32>
    %10 = arith.truncf %9 : vector<32x4xf32> to vector<32x4xbf16>
    %cst_8 = arith.constant dense<0.000000e+00> : vector<64x4xf32>
    %11 = tpu.matmul %2, %10, %cst_8 {dimension_numbers = #tpu.dot_dimension_numbers<[1], [0], [0], [1], [0, 0, 1, 1], [], []>} : vector<64x32xbf16>, vector<32x4xbf16>, vector<64x4xf32> -> vector<64x4xf32>
    %c0_9 = arith.constant 0 : index
    %c0_10 = arith.constant 0 : index
    %12 = vector.load %arg5[%c0_9, %c0_10] : memref<1x4xf32, #tpu.memory_space<vmem>>, vector<1x4xf32>
    %13 = vector.broadcast %12 : vector<1x4xf32> to vector<64x4xf32>
    %14 = arith.addf %11, %13 : vector<64x4xf32>
    %c0_11 = arith.constant 0 : index
    %c0_12 = arith.constant 0 : index
    %15 = vector.load %arg6[%c0_11, %c0_12] : memref<32x32xf32, #tpu.memory_space<vmem>>, vector<32x32xf32>
    %16 = arith.truncf %15 : vector<32x32xf32> to vector<32x32xbf16>
    %cst_13 = arith.constant dense<0.000000e+00> : vector<64x32xf32>
    %17 = tpu.matmul %2, %16, %cst_13 {dimension_numbers = #tpu.dot_dimension_numbers<[1], [0], [0], [1], [0, 0, 1, 1], [], []>} : vector<64x32xbf16>, vector<32x32xbf16>, vector<64x32xf32> -> vector<64x32xf32>
    %c0_14 = arith.constant 0 : index
    %c0_15 = arith.constant 0 : index
    %18 = vector.load %arg7[%c0_14, %c0_15] : memref<1x32xf32, #tpu.memory_space<vmem>>, vector<1x32xf32>
    %19 = vector.broadcast %18 : vector<1x32xf32> to vector<64x32xf32>
    %20 = arith.addf %17, %19 : vector<64x32xf32>
    %21 = vector.shape_cast %8 : vector<64x4xf32> to vector<8x8x4xf32>
    %22 = vector.shape_cast %14 : vector<64x4xf32> to vector<8x8x4xf32>
    %23 = vector.shape_cast %20 : vector<64x32xf32> to vector<8x8x32xf32>
    %24 = tpu.transpose %21, [1, 0, 2] : vector<8x8x4xf32> -> vector<8x8x4xf32>
    %25 = tpu.transpose %22, [1, 0, 2] : vector<8x8x4xf32> -> vector<8x8x4xf32>
    %26 = tpu.transpose %23, [1, 0, 2] : vector<8x8x32xf32> -> vector<8x8x32xf32>
    %27 = arith.truncf %21 : vector<8x8x4xf32> to vector<8x8x4xbf16>
    %28 = arith.truncf %22 : vector<8x8x4xf32> to vector<8x8x4xbf16>
    %cst_16 = arith.constant dense<0.000000e+00> : vector<8x8x8xf32>
    %29 = tpu.matmul %27, %28, %cst_16 {dimension_numbers = #tpu.dot_dimension_numbers<[2], [2], [1], [1], [0, 0, 0, 1, 1, 1], [0], [0]>} : vector<8x8x4xbf16>, vector<8x8x4xbf16>, vector<8x8x8xf32> -> vector<8x8x8xf32>
    %30 = arith.truncf %24 : vector<8x8x4xf32> to vector<8x8x4xbf16>
    %31 = arith.truncf %25 : vector<8x8x4xf32> to vector<8x8x4xbf16>
    %cst_17 = arith.constant dense<0.000000e+00> : vector<8x8x8xf32>
    %32 = tpu.matmul %30, %31, %cst_17 {dimension_numbers = #tpu.dot_dimension_numbers<[2], [2], [1], [1], [0, 0, 0, 1, 1, 1], [0], [0]>} : vector<8x8x4xbf16>, vector<8x8x4xbf16>, vector<8x8x8xf32> -> vector<8x8x8xf32>
    %cst_18 = arith.constant dense<0xFF800000> : vector<8x8xf32>
    %33 = vector.multi_reduction <maximumf>, %32, %cst_18 [2] : vector<8x8x8xf32> to vector<8x8xf32>
    %cst_19 = arith.constant dense<0xFF800000> : vector<8x8xf32>
    %34 = vector.multi_reduction <maximumf>, %29, %cst_19 [2] : vector<8x8x8xf32> to vector<8x8xf32>
    %35 = tpu.transpose %33, [1, 0] : vector<8x8xf32> -> vector<8x8xf32>
    %36 = arith.maximumf %35, %34 : vector<8x8xf32>
    %37 = vector.shape_cast %36 : vector<8x8xf32> to vector<8x8x1xf32>
    %38 = vector.broadcast %37 : vector<8x8x1xf32> to vector<8x8x8xf32>
    %39 = arith.subf %29, %38 : vector<8x8x8xf32>
    %40 = math.exp %39 : vector<8x8x8xf32>
    %41 = tpu.transpose %36, [1, 0] : vector<8x8xf32> -> vector<8x8xf32>
    %42 = vector.shape_cast %41 : vector<8x8xf32> to vector<8x8x1xf32>
    %43 = vector.broadcast %42 : vector<8x8x1xf32> to vector<8x8x8xf32>
    %44 = arith.subf %32, %43 : vector<8x8x8xf32>
    %45 = math.exp %44 : vector<8x8x8xf32>
    %46 = tpu.iota {dimensions = array<i32: 0>} : vector<8x8xi32>
    %47 = tpu.iota {dimensions = array<i32: 1>} : vector<8x8xi32>
    %48 = arith.cmpi eq, %46, %47 : vector<8x8xi32>
    %cst_20 = arith.constant 0.000000e+00 : f32
    %cst_21 = arith.constant 1.000000e+00 : f32
    %49 = vector.broadcast %cst_20 : f32 to vector<8x8xf32>
    %50 = vector.broadcast %cst_21 : f32 to vector<8x8xf32>
    %51 = arith.select %48, %49, %50 : vector<8x8xi1>, vector<8x8xf32>
    %52 = vector.shape_cast %51 : vector<8x8xf32> to vector<1x8x8xf32>
    %53 = vector.broadcast %52 : vector<1x8x8xf32> to vector<8x8x8xf32>
    %54 = arith.mulf %45, %53 : vector<8x8x8xf32>
    %cst_22 = arith.constant dense<0.000000e+00> : vector<8x8xf32>
    %55 = vector.multi_reduction <add>, %54, %cst_22 [2] : vector<8x8x8xf32> to vector<8x8xf32>
    %56 = tpu.transpose %55, [1, 0] : vector<8x8xf32> -> vector<8x8xf32>
    %cst_23 = arith.constant dense<0.000000e+00> : vector<8x8xf32>
    %57 = vector.multi_reduction <add>, %40, %cst_23 [2] : vector<8x8x8xf32> to vector<8x8xf32>
    %58 = arith.addf %56, %57 : vector<8x8xf32>
    %59 = tpu.reciprocal %58 {approx = true} : vector<8x8xf32> -> vector<8x8xf32>
    %60 = arith.truncf %40 : vector<8x8x8xf32> to vector<8x8x8xbf16>
    %61 = arith.truncf %23 : vector<8x8x32xf32> to vector<8x8x32xbf16>
    %cst_24 = arith.constant dense<0.000000e+00> : vector<8x8x32xf32>
    %62 = tpu.matmul %60, %61, %cst_24 {dimension_numbers = #tpu.dot_dimension_numbers<[2], [1], [1], [2], [0, 0, 0, 1, 1, 2], [0], [0]>} : vector<8x8x8xbf16>, vector<8x8x32xbf16>, vector<8x8x32xf32> -> vector<8x8x32xf32>
    %63 = arith.truncf %54 : vector<8x8x8xf32> to vector<8x8x8xbf16>
    %64 = arith.truncf %26 : vector<8x8x32xf32> to vector<8x8x32xbf16>
    %cst_25 = arith.constant dense<0.000000e+00> : vector<8x8x32xf32>
    %65 = tpu.matmul %63, %64, %cst_25 {dimension_numbers = #tpu.dot_dimension_numbers<[2], [1], [1], [2], [0, 0, 0, 1, 1, 2], [0], [0]>} : vector<8x8x8xbf16>, vector<8x8x32xbf16>, vector<8x8x32xf32> -> vector<8x8x32xf32>
    %66 = tpu.transpose %65, [1, 0, 2] : vector<8x8x32xf32> -> vector<8x8x32xf32>
    %c0_26 = arith.constant 0 : index
    %67 = memref.load %arg8[%c0_26] : memref<1xf32, #tpu.memory_space<smem>>
    %68 = vector.shape_cast %1 : vector<64x32xf32> to vector<8x8x32xf32>
    %69 = arith.addf %62, %66 : vector<8x8x32xf32>
    %70 = vector.shape_cast %59 : vector<8x8xf32> to vector<8x8x1xf32>
    %71 = vector.broadcast %70 : vector<8x8x1xf32> to vector<8x8x32xf32>
    %72 = arith.mulf %69, %71 : vector<8x8x32xf32>
    %73 = vector.broadcast %67 : f32 to vector<8x8x32xf32>
    %74 = arith.mulf %73, %72 : vector<8x8x32xf32>
    %75 = arith.addf %74, %68 : vector<8x8x32xf32>
    %c0_27 = arith.constant 0 : index
    %c0_28 = arith.constant 0 : index
    %c0_29 = arith.constant 0 : index
    %c0_30 = arith.constant 0 : index
    %76 = vector.load %arg9[%c0_27, %c0_28, %c0_29, %c0_30] : memref<1x8x8x32xf32, #tpu.memory_space<vmem>>, vector<1x8x8x32xf32>
    %77 = vector.shape_cast %76 : vector<1x8x8x32xf32> to vector<8x8x32xf32>
    %78 = vector.shape_cast %75 : vector<8x8x32xf32> to vector<1x8x8x32xf32>
    tpu.vector_store %arg9[%c0_27, %c0_28, %c0_29, %c0_30], %78 {strides = array<i32>} : memref<1x8x8x32xf32, #tpu.memory_space<vmem>>, vector<1x8x8x32xf32>,
    return
  }
  func.func @transform_0(%arg0: i32) -> (i32, i32, i32) {
    %c0_i32 = arith.constant 0 : i32
    %c0_i32_0 = arith.constant 0 : i32
    %c0_i32_1 = arith.constant 0 : i32
    return %arg0, %c0_i32, %c0_i32_0 : i32, i32, i32
  }
  func.func @transform_1(%arg0: i32) -> (i32, i32) {
    %c0_i32 = arith.constant 0 : i32
    %c0_i32_0 = arith.constant 0 : i32
    %c0_i32_1 = arith.constant 0 : i32
    return %c0_i32, %c0_i32_0 : i32, i32
  }
  func.func @transform_2(%arg0: i32) -> (i32, i32) {
    %c0_i32 = arith.constant 0 : i32
    %c0_i32_0 = arith.constant 0 : i32
    %c0_i32_1 = arith.constant 0 : i32
    return %c0_i32, %c0_i32_0 : i32, i32
  }
  func.func @transform_3(%arg0: i32) -> (i32, i32) {
    %c0_i32 = arith.constant 0 : i32
    %c0_i32_0 = arith.constant 0 : i32
    %c0_i32_1 = arith.constant 0 : i32
    return %c0_i32, %c0_i32_0 : i32, i32
  }
  func.func @transform_4(%arg0: i32) -> (i32, i32) {
    %c0_i32 = arith.constant 0 : i32
    %c0_i32_0 = arith.constant 0 : i32
    %c0_i32_1 = arith.constant 0 : i32
    return %c0_i32, %c0_i32_0 : i32, i32
  }
  func.func @transform_5(%arg0: i32) -> (i32, i32) {
    %c0_i32 = arith.constant 0 : i32
    %c0_i32_0 = arith.constant 0 : i32
    %c0_i32_1 = arith.constant 0 : i32
    return %c0_i32, %c0_i32_0 : i32, i32
  }
  func.func @transform_6(%arg0: i32) -> (i32, i32) {
    %c0_i32 = arith.constant 0 : i32
    %c0_i32_0 = arith.constant 0 : i32
    %c0_i32_1 = arith.constant 0 : i32
    return %c0_i32, %c0_i32_0 : i32, i32
  }
  func.func @transform_7(%arg0: i32) -> i32 {
    %c0_i32 = arith.constant 0 : i32
    %c0_i32_0 = arith.constant 0 : i32
    return %c0_i32 : i32
  }
  func.func @transform_8(%arg0: i32) -> (i32, i32, i32, i32) {
    %c0_i32 = arith.constant 0 : i32
    %c0_i32_0 = arith.constant 0 : i32
    %c0_i32_1 = arith.constant 0 : i32
    %c0_i32_2 = arith.constant 0 : i32
    return %arg0, %c0_i32, %c0_i32_0, %c0_i32_1 : i32, i32, i32, i32
  }
}

</mosaic_0001>

<llo_original>
// kernel: cc_module_forward.1
$region0: #{cc_module_forward.1}
  #allocation0 [shape = 'u32[]', space=smem, size = 0x4, offset = 0x4, fixed_abs, tag = 'smem constant byte address 0x4 - core index']
  #allocation1 [shape = 'u32[144,128]{1,0:T(1,128)}', space=vmem, size = 0x12000, scoped, tag = 'internal scratch']
  #allocation2 [shape = 'f32[1]{0:T(128)S(6)}', space=smem, size = 0x200, scoped, tag = 'scoped memory for cc_module_forward.1']
  %s0 = inlined_call_operand.hbm [shape: f32[2,64,32], index: 0, kind: input, shape index: {}]
  %s1 = inlined_call_operand.vmem [shape: f32[32,4], index: 1, kind: input, shape index: {}]
  %s2 = inlined_call_operand.vmem [shape: f32[1,4], index: 2, kind: input, shape index: {}]
  %s3 = inlined_call_operand.vmem [shape: f32[32,4], index: 3, kind: input, shape index: {}]
  %s4 = inlined_call_operand.vmem [shape: f32[1,4], index: 4, kind: input, shape index: {}]
  %s5 = inlined_call_operand.vmem [shape: f32[32,32], index: 5, kind: input, shape index: {}]
  %s6 = inlined_call_operand.vmem [shape: f32[1,32], index: 6, kind: input, shape index: {}]
  %s7 = inlined_call_operand.<no memory space> [shape: f32[1], index: 7, kind: input, shape index: {}]
  %s8 = inlined_call_operand.hbm [shape: f32[2,8,8,32], index: 8, kind: output, shape index: {}]
  %s9 = sld [smem:[#allocation0]]
  $region69: #{cc_module_forward.1} parent=0
    _
  %s11 = ssub.s32 1, %s9
  %s12 = scalar_select 0, %s11, %s9
  %13 = sst [smem:[#allocation2]] %s7
  $region1: #{cc_module_forward.1} parent=0
    #allocation3 [shape = 'u8[65536]{0}', space=vmem, size = 0x10000, scoped, tag = 'input window, operand 0']
    #allocation4 [shape = 's32[2]{0}', space=sflag, size = 0x8, scoped, tag = 'scoped memory for cc_module_forward.1']
    #allocation5 [shape = 's32[2]{0}', space=sflag, size = 0x8, scoped, tag = 'scoped memory for cc_module_forward.1']
    #allocation6 [shape = 'u8[65536]{0}', space=vmem, size = 0x10000, scoped, tag = 'output window, operand 0']
    %14 = vsyncpa [#allocation4], 0
    %s15 = scalar_lea.sflag [#allocation4], 1
    %16 = vsyncpa %s15, 0
    %17 = vsyncpa [#allocation5], 0
    %s18 = scalar_lea.sflag [#allocation5], 1
    %19 = vsyncpa %s18, 0
    loop: start=0, step=1, limit=4
    $region2: #{cc_module_forward.1} parent=1 // loop_pre_header
      _
    $region3: #{cc_module_forward.1} parent=1 // loop_header
      %s21 = sphi 0, %s25
      %p22 = scmp.ge.s32.totalorder %s21, 4
      %s31 = sphi 0, %s33
      %s34 = sphi 0, %s31
      %s35 = sphi 0, %s34
      %s51 = sphi 0, %s35
      %s55 = sphi 0, %s55
      %s57 = sphi 0, %s55
      %s58 = sphi 0, %s57
      %s72 = sphi 0, %s58
      %s76 = sphi 0, %s76
      %s78 = sphi 0, %s76
      %s79 = sphi 0, %s78
      %s93 = sphi 0, %s79
      %s97 = sphi 0, %s97
      %s99 = sphi 0, %s97
      %s100 = sphi 0, %s99
      %s114 = sphi 0, %s100
      %s118 = sphi 0, %s118
      %s120 = sphi 0, %s118
      %s121 = sphi 0, %s120
      %s135 = sphi 0, %s121
      %s139 = sphi 0, %s139
      %s141 = sphi 0, %s139
      %s142 = sphi 0, %s141
      %s156 = sphi 0, %s142
      %s160 = sphi 0, %s160
      %s162 = sphi 0, %s160
      %s163 = sphi 0, %s162
      %s177 = sphi 0, %s163
      %s181 = sphi 0, %s181
      %s183 = sphi 0, %s181
      %s184 = sphi 0, %s183
      %s198 = sphi 0, %s184
      %s204 = sphi 0, %s206
      %s207 = sphi 0, %s204
      %s208 = sphi 0, %s207
      %s224 = sphi 0, %s208
    $region4: #{cc_module_forward.1} parent=1 // loop_header_branch
      %24 = sbr.rel (%p22) target = $region8
    $region5: #{cc_module_forward.1} parent=1 // loop_body
      %s26 = ssub.s32 %s21, 1
      %s27 = ssub.s32 %s21, 2
      %s28 = sadd.s32 %s21, 1
      %s29 = ssub.s32 %s21, %s28
      %p30 = scmp.eq.s32.totalorder %s29, 0
      %s32 = sadd.s32 %s31, 1
      %s33 = scalar_select %p30, %s31, %s32
      %p36 = pneg %p30
      %p37 = scmp.eq.s32.totalorder %s21, 1
      %p38 = por %p36, %p37
      %p39 = scmp.ne.s32.totalorder %s31, %s34
      %p40 = scmp.eq.s32.totalorder %s21, 0
      %p41 = por %p39, %p40
      %p42 = scmp.ne.s32.totalorder %s31, %s34
      %p43 = scmp.eq.s32.totalorder %s26, 1
      %p44 = por %p42, %p43
      %p45 = scmp.ne.s32.totalorder %s34, %s35
      %p46 = scmp.eq.s32.totalorder %s26, 0
      %p47 = por %p45, %p46
      %p48 = scmp.ne.s32.totalorder %s34, %s35
      %p49 = scmp.eq.s32.totalorder %s27, 1
      %p50 = por %p48, %p49
      %p52 = scmp.ne.s32.totalorder %s35, %s51
      %p53 = scmp.eq.s32.totalorder %s27, 0
      %p54 = por %p52, %p53
      %s56 = sadd.s32 %s55, 1
      %p59 = scmp.eq.s32.totalorder %s21, 1
      %p60 = scmp.ne.s32.totalorder %s55, %s57
      %p61 = scmp.eq.s32.totalorder %s21, 0
      %p62 = por %p60, %p61
      %p63 = scmp.ne.s32.totalorder %s55, %s57
      %p64 = scmp.eq.s32.totalorder %s26, 1
      %p65 = por %p63, %p64
      %p66 = scmp.ne.s32.totalorder %s57, %s58
      %p67 = scmp.eq.s32.totalorder %s26, 0
      %p68 = por %p66, %p67
      %p69 = scmp.ne.s32.totalorder %s57, %s58
      %p70 = scmp.eq.s32.totalorder %s27, 1
      %p71 = por %p69, %p70
      %p73 = scmp.ne.s32.totalorder %s58, %s72
      %p74 = scmp.eq.s32.totalorder %s27, 0
      %p75 = por %p73, %p74
      %s77 = sadd.s32 %s76, 1
      %p80 = scmp.eq.s32.totalorder %s21, 1
      %p81 = scmp.ne.s32.totalorder %s76, %s78
      %p82 = scmp.eq.s32.totalorder %s21, 0
      %p83 = por %p81, %p82
      %p84 = scmp.ne.s32.totalorder %s76, %s78
      %p85 = scmp.eq.s32.totalorder %s26, 1
      %p86 = por %p84, %p85
      %p87 = scmp.ne.s32.totalorder %s78, %s79
      %p88 = scmp.eq.s32.totalorder %s26, 0
      %p89 = por %p87, %p88
      %p90 = scmp.ne.s32.totalorder %s78, %s79
      %p91 = scmp.eq.s32.totalorder %s27, 1
      %p92 = por %p90, %p91
      %p94 = scmp.ne.s32.totalorder %s79, %s93
      %p95 = scmp.eq.s32.totalorder %s27, 0
      %p96 = por %p94, %p95
      %s98 = sadd.s32 %s97, 1
      %p101 = scmp.eq.s32.totalorder %s21, 1
      %p102 = scmp.ne.s32.totalorder %s97, %s99
      %p103 = scmp.eq.s32.totalorder %s21, 0
      %p104 = por %p102, %p103
      %p105 = scmp.ne.s32.totalorder %s97, %s99
      %p106 = scmp.eq.s32.totalorder %s26, 1
      %p107 = por %p105, %p106
      %p108 = scmp.ne.s32.totalorder %s99, %s100
      %p109 = scmp.eq.s32.totalorder %s26, 0
      %p110 = por %p108, %p109
      %p111 = scmp.ne.s32.totalorder %s99, %s100
      %p112 = scmp.eq.s32.totalorder %s27, 1
      %p113 = por %p111, %p112
      %p115 = scmp.ne.s32.totalorder %s100, %s114
      %p116 = scmp.eq.s32.totalorder %s27, 0
      %p117 = por %p115, %p116
      %s119 = sadd.s32 %s118, 1
      %p122 = scmp.eq.s32.totalorder %s21, 1
      %p123 = scmp.ne.s32.totalorder %s118, %s120
      %p124 = scmp.eq.s32.totalorder %s21, 0
      %p125 = por %p123, %p124
      %p126 = scmp.ne.s32.totalorder %s118, %s120
      %p127 = scmp.eq.s32.totalorder %s26, 1
      %p128 = por %p126, %p127
      %p129 = scmp.ne.s32.totalorder %s120, %s121
      %p130 = scmp.eq.s32.totalorder %s26, 0
      %p131 = por %p129, %p130
      %p132 = scmp.ne.s32.totalorder %s120, %s121
      %p133 = scmp.eq.s32.totalorder %s27, 1
      %p134 = por %p132, %p133
      %p136 = scmp.ne.s32.totalorder %s121, %s135
      %p137 = scmp.eq.s32.totalorder %s27, 0
      %p138 = por %p136, %p137
      %s140 = sadd.s32 %s139, 1
      %p143 = scmp.eq.s32.totalorder %s21, 1
      %p144 = scmp.ne.s32.totalorder %s139, %s141
      %p145 = scmp.eq.s32.totalorder %s21, 0
      %p146 = por %p144, %p145
      %p147 = scmp.ne.s32.totalorder %s139, %s141
      %p148 = scmp.eq.s32.totalorder %s26, 1
      %p149 = por %p147, %p148
      %p150 = scmp.ne.s32.totalorder %s141, %s142
      %p151 = scmp.eq.s32.totalorder %s26, 0
      %p152 = por %p150, %p151
      %p153 = scmp.ne.s32.totalorder %s141, %s142
      %p154 = scmp.eq.s32.totalorder %s27, 1
      %p155 = por %p153, %p154
      %p157 = scmp.ne.s32.totalorder %s142, %s156
      %p158 = scmp.eq.s32.totalorder %s27, 0
      %p159 = por %p157, %p158
      %s161 = sadd.s32 %s160, 1
      %p164 = scmp.eq.s32.totalorder %s21, 1
      %p165 = scmp.ne.s32.totalorder %s160, %s162
      %p166 = scmp.eq.s32.totalorder %s21, 0
      %p167 = por %p165, %p166
      %p168 = scmp.ne.s32.totalorder %s160, %s162
      %p169 = scmp.eq.s32.totalorder %s26, 1
      %p170 = por %p168, %p169
      %p171 = scmp.ne.s32.totalorder %s162, %s163
      %p172 = scmp.eq.s32.totalorder %s26, 0
      %p173 = por %p171, %p172
      %p174 = scmp.ne.s32.totalorder %s162, %s163
      %p175 = scmp.eq.s32.totalorder %s27, 1
      %p176 = por %p174, %p175
      %p178 = scmp.ne.s32.totalorder %s163, %s177
      %p179 = scmp.eq.s32.totalorder %s27, 0
      %p180 = por %p178, %p179
      %s182 = sadd.s32 %s181, 1
      %p185 = scmp.eq.s32.totalorder %s21, 1
      %p186 = scmp.ne.s32.totalorder %s181, %s183
      %p187 = scmp.eq.s32.totalorder %s21, 0
      %p188 = por %p186, %p187
      %p189 = scmp.ne.s32.totalorder %s181, %s183
      %p190 = scmp.eq.s32.totalorder %s26, 1
      %p191 = por %p189, %p190
      %p192 = scmp.ne.s32.totalorder %s183, %s184
      %p193 = scmp.eq.s32.totalorder %s26, 0
      %p194 = por %p192, %p193
      %p195 = scmp.ne.s32.totalorder %s183, %s184
      %p196 = scmp.eq.s32.totalorder %s27, 1
      %p197 = por %p195, %p196
      %p199 = scmp.ne.s32.totalorder %s184, %s198
      %p200 = scmp.eq.s32.totalorder %s27, 0
      %p201 = por %p199, %p200
      %s202 = ssub.s32 %s21, %s28
      %p203 = scmp.eq.s32.totalorder %s202, 0
      %s205 = sadd.s32 %s204, 1
      %s206 = scalar_select %p203, %s204, %s205
      %p209 = pneg %p203
      %p210 = scmp.eq.s32.totalorder %s21, 1
      %p211 = por %p209, %p210
      %p212 = scmp.ne.s32.totalorder %s204, %s207
      %p213 = scmp.eq.s32.totalorder %s21, 0
      %p214 = por %p212, %p213
      %p215 = scmp.ne.s32.totalorder %s204, %s207
      %p216 = scmp.eq.s32.totalorder %s26, 1
      %p217 = por %p215, %p216
      %p218 = scmp.ne.s32.totalorder %s207, %s208
      %p219 = scmp.eq.s32.totalorder %s26, 0
      %p220 = por %p218, %p219
      %p221 = scmp.ne.s32.totalorder %s207, %s208
      %p222 = scmp.eq.s32.totalorder %s27, 1
      %p223 = por %p221, %p222
      %p225 = scmp.ne.s32.totalorder %s208, %s224
      %p226 = scmp.eq.s32.totalorder %s27, 0
      %p227 = por %p225, %p226
      %p228 = scmp.le.s32.totalorder 1, %s21
      %p229 = scmp.lt.s32.totalorder %s21, 3
      %p230 = pnand %p228, %p229
      %p231 = pneg %p230
      // Predicated region
      $region9: #{cc_module_forward.1} parent=5 // pred_check
        _
      $region10: #{cc_module_forward.1} parent=5 // pred_check_branch
        %233 = sbr.rel (%p230) target = $region12
      $region11: #{cc_module_forward.1} parent=5 // pred_region
        %s234 = ssub.s32 %s21, 1
        // Predicated region
        $region13: #{cc_module_forward.1} parent=11 // pred_check
          %p235 = pneg %p68
        $region14: #{cc_module_forward.1} parent=11 // pred_check_branch
          %237 = sbr.rel (%p235) target = $region16
        $region15: #{cc_module_forward.1} parent=11 // pred_region
          _
        $region16: #{cc_module_forward.1} parent=11 // pred_fallthru
          _
        // Predicated region
        $region17: #{cc_module_forward.1} parent=11 // pred_check
          %p238 = pneg %p89
        $region18: #{cc_module_forward.1} parent=11 // pred_check_branch
          %240 = sbr.rel (%p238) target = $region20
        $region19: #{cc_module_forward.1} parent=11 // pred_region
          _
        $region20: #{cc_module_forward.1} parent=11 // pred_fallthru
          _
        // Predicated region
        $region21: #{cc_module_forward.1} parent=11 // pred_check
          %p241 = pneg %p110
        $region22: #{cc_module_forward.1} parent=11 // pred_check_branch
          %243 = sbr.rel (%p241) target = $region24
        $region23: #{cc_module_forward.1} parent=11 // pred_region
          _
        $region24: #{cc_module_forward.1} parent=11 // pred_fallthru
          _
        // Predicated region
        $region25: #{cc_module_forward.1} parent=11 // pred_check
          %p244 = pneg %p131
        $region26: #{cc_module_forward.1} parent=11 // pred_check_branch
          %246 = sbr.rel (%p244) target = $region28
        $region27: #{cc_module_forward.1} parent=11 // pred_region
          _
        $region28: #{cc_module_forward.1} parent=11 // pred_fallthru
          _
        // Predicated region
        $region29: #{cc_module_forward.1} parent=11 // pred_check
          %p247 = pneg %p152
        $region30: #{cc_module_forward.1} parent=11 // pred_check_branch
          %249 = sbr.rel (%p247) target = $region32
        $region31: #{cc_module_forward.1} parent=11 // pred_region
          _
        $region32: #{cc_module_forward.1} parent=11 // pred_fallthru
          _
        // Predicated region
        $region33: #{cc_module_forward.1} parent=11 // pred_check
          %p250 = pneg %p173
        $region34: #{cc_module_forward.1} parent=11 // pred_check_branch
          %252 = sbr.rel (%p250) target = $region36
        $region35: #{cc_module_forward.1} parent=11 // pred_region
          _
        $region36: #{cc_module_forward.1} parent=11 // pred_fallthru
          _
        // Predicated region
        $region37: #{cc_module_forward.1} parent=11 // pred_check
          %p253 = pneg %p194
        $region38: #{cc_module_forward.1} parent=11 // pred_check_branch
          %255 = sbr.rel (%p253) target = $region40
        $region39: #{cc_module_forward.1} parent=11 // pred_region
          _
        $region40: #{cc_module_forward.1} parent=11 // pred_fallthru
          _
      $region12: #{cc_module_forward.1} parent=5 // pred_fallthru
        _
      %p256 = scmp.lt.s32.totalorder %s21, 2
      // Predicated region
      $region41: #{cc_module_forward.1} parent=5 // pred_check
        %p257 = pneg %p256
      $region42: #{cc_module_forward.1} parent=5 // pred_check_branch
        %259 = sbr.rel (%p257) target = $region44
      $region43: #{cc_module_forward.1} parent=5 // pred_region
        // Predicated region
        $region45: #{cc_module_forward.1} parent=43 // pred_check
          %p260 = pneg %p41
        $region46: #{cc_module_forward.1} parent=43 // pred_check_branch
          %262 = sbr.rel (%p260) target = $region48
        $region47: #{cc_module_forward.1} parent=43 // pred_region
          %s263 = sand.u32 %s31, 1
          %s264 = scalar_lea.sflag [#allocation4], %s263
          %s265 = sand.u32 %s31, 1
          %s266 = smul.addr %s265, 64
          %s267 = scalar_lea.vmem [#allocation3], %s266
          %s269 = ssub.s32 1024, 1024
          %270 = vsyncadd %s264, %s269
          %s271 = smul.addr %s21, 8
          %s272 = smul.addr %s271, 128
          %s273 = scalar_lea.hbm %s0, %s272
          %s274 = sshll.u32 %s267, 4
          %s275 = int_to_ptr.vmem [resolvable:$true] %s274
          %280 = dma.hbm_to_vmem [thread:$0]  %s273, 1024, %s275, %s264, 128, 128, 8
        $region48: #{cc_module_forward.1} parent=43 // pred_fallthru
          _
      $region44: #{cc_module_forward.1} parent=5 // pred_fallthru
        _
      %p281 = scmp.le.s32.totalorder 1, %s21
      %p282 = scmp.lt.s32.totalorder %s21, 3
      %p283 = pnand %p281, %p282
      %p284 = pneg %p283
      // Predicated region
      $region49: #{cc_module_forward.1} parent=5 // pred_check
        _
      $region50: #{cc_module_forward.1} parent=5 // pred_check_branch
        %286 = sbr.rel (%p283) target = $region52
      $region51: #{cc_module_forward.1} parent=5 // pred_region
        %s287 = ssub.s32 %s21, 1
        %s288 = sand.u32 %s34, 1
        %s289 = scalar_lea.sflag [#allocation4], %s288
        %s290 = sand.u32 %s34, 1
        %s291 = smul.addr %s290, 64
        %s292 = scalar_lea.vmem [#allocation3], %s291
        // Predicated region
        $region53: #{cc_module_forward.1} parent=51 // pred_check
          %p293 = pneg %p47
        $region54: #{cc_module_forward.1} parent=51 // pred_check_branch
          %295 = sbr.rel (%p293) target = $region56
        $region55: #{cc_module_forward.1} parent=51 // pred_region
          %296 = dma.done %s289, 1024
        $region56: #{cc_module_forward.1} parent=51 // pred_fallthru
          _
        %s297 = sand.u32 %s34, 1
        %s298 = scalar_lea.sflag [#allocation4], %s297
        %s299 = sand.u32 %s34, 1
        %s300 = smul.addr %s299, 64
        %s301 = scalar_lea.vmem [#allocation3], %s300
        %p302 = pneg %p47
        %p303 = pneg %p44
        %p304 = pneg %p68
        %p305 = pneg %p65
        %p306 = pneg %p89
        %p307 = pneg %p86
        %p308 = pneg %p110
        %p309 = pneg %p107
        %p310 = pneg %p131
        %p311 = pneg %p128
        %p312 = pneg %p152
        %p313 = pneg %p149
        %p314 = pneg %p173
        %p315 = pneg %p170
        %p316 = pneg %p194
        %p317 = pneg %p191
        %p318 = pneg %p220
        %p319 = pneg %p217
        %s320 = sand.u32 %s207, 1
        %s321 = scalar_lea.sflag [#allocation5], %s320
        %s322 = sand.u32 %s207, 1
        %s323 = smul.addr %s322, 64
        %s324 = scalar_lea.vmem [#allocation6], %s323
        %v326 = vld [vmem:[%s292] sm:$0xff]
        %v327 = vld [vmem:[%s292 + $0x8] sm:$0xff]
        %v328 = vld [vmem:[%s292 + $0x10] sm:$0xff]
        %v329 = vld [vmem:[%s292 + $0x18] sm:$0xff]
        %v330 = vld [vmem:[%s292 + $0x20] sm:$0xff]
        %v331 = vld [vmem:[%s292 + $0x28] sm:$0xff]
        %v332 = vld [vmem:[%s292 + $0x30] sm:$0xff]
        %v333 = vld [vmem:[%s292 + $0x38] sm:$0xff]
        %v334 = vpack.c.bf16 %v327, %v326
        %v335 = vpack.c.bf16 %v329, %v328
        %v336 = vpack.c.bf16 %v331, %v330
        %v337 = vpack.c.bf16 %v333, %v332
        %v338 = vld [vmem:[%s1] sm:$0xff]
        %v339 = vld [vmem:[%s1 + $0x8] sm:$0xff]
        %v340 = vld [vmem:[%s1 + $0x10] sm:$0xff]
        %v341 = vld [vmem:[%s1 + $0x18] sm:$0xff]
        %v342 = vpack.c.bf16 %v339, %v338
        %v343 = vpack.c.bf16 %v341, %v340
        %v344 = vld [vmem:[%s2] sm:$0x1]
        %v346 = vlaneseq
        %v347 = vshrl.u32 %v346, 7
        %v348 = vsub.s32 0, %v347
        %v349 = vrot.slane %v344, %v348
        %vm351 = vcmask 261120
        %v353 = vsel %vm351, %v334, 0
        %v356 = vsel %vm351, %v335, 0
        %v359 = vsel %vm351, %v336, 0
        %v362 = vsel %vm351, %v337, 0
        %364 = vmatprep.subr.bf16.mxu0 0
        %365 = vmatpush1.bf16.msra.mxu0 0
        %366 = vmatprep.subr.bf16.mxu0 0
        %367 = vmatpush1.bf16.msra.mxu0 0
        %368 = vmatprep.subr.bf16.mxu0 0
        %369 = vmatpush1.bf16.msra.mxu0 0
        %370 = vmatprep.subr.bf16.mxu0 0
        %371 = vmatpush1.bf16.msra.mxu0 0
        %372 = vmatprep.subr.bf16.mxu0 0
        %373 = vmatpush1.bf16.msra.mxu0 0
        %374 = vmatprep.subr.bf16.mxu0 0
        %375 = vmatpush1.bf16.msra.mxu0 0
        %376 = vmatprep.subr.bf16.mxu0 0
        %377 = vmatpush1.bf16.msra.mxu0 %v343
        %378 = vmatprep.subr.bf16.mxu0 0
        %379 = vmatpush1.bf16.msra.mxu0 %v342
        %380 = vmatprep.subr.bf16.mxu0 0
        %381 = vmatpush2.bf16.msra.mxu0 0
        %382 = vmatprep.subr.bf16.mxu0 0
        %383 = vmatpush2.bf16.msra.mxu0 0
        %384 = vmatprep.subr.bf16.mxu0 0
        %385 = vmatpush2.bf16.msra.mxu0 0
        %386 = vmatprep.subr.bf16.mxu0 0
        %387 = vmatpush2.bf16.msra.mxu0 0
        %388 = vmatprep.subr.bf16.mxu0 0
        %389 = vmatpush2.bf16.msra.mxu0 0
        %390 = vmatprep.subr.bf16.mxu0 0
        %391 = vmatpush2.bf16.msra.mxu0 0
        %392 = vmatprep.subr.bf16.mxu0 0
        %393 = vmatpush2.bf16.msra.mxu0 0
        %394 = vmatprep.subr.bf16.mxu0 0
        %395 = vmatpush2.bf16.msra.mxu0 0
        %396 = vmatprep.mubr.bf16.mxu0 0
        %397 = vmatmul.mubr.bf16.gmra.mxu0 %v353
        %v398 = vpop.f32.mrf.mxu0
        %v399 = vadd.f32 %v349, %v398
        %v400 = vpop.f32.mrf.mxu0
        %v401 = vpop.f32.mrf.mxu0
        %v402 = vadd.f32 %v349, %v401
        %v403 = vpop.f32.mrf.mxu0
        %404 = vmatprep.mubr.bf16.mxu0 0
        %405 = vmatmul.mubr.bf16.gmra.mxu0 %v356
        %v406 = vpop.f32.mrf.mxu0
        %v407 = vadd.f32 %v349, %v406
        %v408 = vpop.f32.mrf.mxu0
        %v409 = vpop.f32.mrf.mxu0
        %v410 = vadd.f32 %v349, %v409
        %v411 = vpop.f32.mrf.mxu0
        %412 = vmatprep.mubr.bf16.mxu0 0
        %413 = vmatmul.mubr.bf16.gmra.mxu0 %v359
        %v414 = vpop.f32.mrf.mxu0
        %v415 = vadd.f32 %v349, %v414
        %v416 = vpop.f32.mrf.mxu0
        %v417 = vpop.f32.mrf.mxu0
        %v418 = vadd.f32 %v349, %v417
        %v419 = vpop.f32.mrf.mxu0
        %420 = vmatprep.mubr.bf16.mxu0 0
        %421 = vmatmul.mubr.bf16.gmra.mxu0 %v362
        %v422 = vpop.f32.mrf.mxu0
        %v423 = vadd.f32 %v349, %v422
        %v424 = vpop.f32.mrf.mxu0
        %v425 = vpop.f32.mrf.mxu0
        %v426 = vadd.f32 %v349, %v425
        %v427 = vpop.f32.mrf.mxu0
        %428 = vdwg.mxu0
        %v429 = vld [vmem:[%s3] sm:$0xff]
        %v430 = vld [vmem:[%s3 + $0x8] sm:$0xff]
        %v431 = vld [vmem:[%s3 + $0x10] sm:$0xff]
        %v432 = vld [vmem:[%s3 + $0x18] sm:$0xff]
        %v433 = vpack.c.bf16 %v430, %v429
        %v434 = vpack.c.bf16 %v432, %v431
        %v435 = vld [vmem:[%s4] sm:$0x1]
        %v437 = vlaneseq
        %v438 = vshrl.u32 %v437, 7
        %v439 = vsub.s32 0, %v438
        %v440 = vrot.slane %v435, %v439
        %442 = vmatprep.subr.bf16.mxu0 0
        %443 = vmatpush1.bf16.msra.mxu0 0
        %444 = vmatprep.subr.bf16.mxu0 0
        %445 = vmatpush1.bf16.msra.mxu0 0
        %446 = vmatprep.subr.bf16.mxu0 0
        %447 = vmatpush1.bf16.msra.mxu0 0
        %448 = vmatprep.subr.bf16.mxu0 0
        %449 = vmatpush1.bf16.msra.mxu0 0
        %450 = vmatprep.subr.bf16.mxu0 0
        %451 = vmatpush1.bf16.msra.mxu0 0
        %452 = vmatprep.subr.bf16.mxu0 0
        %453 = vmatpush1.bf16.msra.mxu0 0
        %454 = vmatprep.subr.bf16.mxu0 0
        %455 = vmatpush1.bf16.msra.mxu0 %v434
        %456 = vmatprep.subr.bf16.mxu0 0
        %457 = vmatpush1.bf16.msra.mxu0 %v433
        %458 = vmatprep.subr.bf16.mxu0 0
        %459 = vmatpush2.bf16.msra.mxu0 0
        %460 = vmatprep.subr.bf16.mxu0 0
        %461 = vmatpush2.bf16.msra.mxu0 0
        %462 = vmatprep.subr.bf16.mxu0 0
        %463 = vmatpush2.bf16.msra.mxu0 0
        %464 = vmatprep.subr.bf16.mxu0 0
        %465 = vmatpush2.bf16.msra.mxu0 0
        %466 = vmatprep.subr.bf16.mxu0 0
        %467 = vmatpush2.bf16.msra.mxu0 0
        %468 = vmatprep.subr.bf16.mxu0 0
        %469 = vmatpush2.bf16.msra.mxu0 0
        %470 = vmatprep.subr.bf16.mxu0 0
        %471 = vmatpush2.bf16.msra.mxu0 0
        %472 = vmatprep.subr.bf16.mxu0 0
        %473 = vmatpush2.bf16.msra.mxu0 0
        %474 = vmatprep.mubr.bf16.mxu0 0
        %475 = vmatmul.mubr.bf16.gmra.mxu0 %v353
        %v476 = vpop.f32.mrf.mxu0
        %v477 = vadd.f32 %v440, %v476
        %v478 = vpop.f32.mrf.mxu0
        %v479 = vpop.f32.mrf.mxu0
        %v480 = vadd.f32 %v440, %v479
        %v481 = vpop.f32.mrf.mxu0
        %482 = vmatprep.mubr.bf16.mxu0 0
        %483 = vmatmul.mubr.bf16.gmra.mxu0 %v356
        %v484 = vpop.f32.mrf.mxu0
        %v485 = vadd.f32 %v440, %v484
        %v486 = vpop.f32.mrf.mxu0
        %v487 = vpop.f32.mrf.mxu0
        %v488 = vadd.f32 %v440, %v487
        %v489 = vpop.f32.mrf.mxu0
        %490 = vmatprep.mubr.bf16.mxu0 0
        %491 = vmatmul.mubr.bf16.gmra.mxu0 %v359
        %v492 = vpop.f32.mrf.mxu0
        %v493 = vadd.f32 %v440, %v492
        %v494 = vpop.f32.mrf.mxu0
        %v495 = vpop.f32.mrf.mxu0
        %v496 = vadd.f32 %v440, %v495
        %v497 = vpop.f32.mrf.mxu0
        %498 = vmatprep.mubr.bf16.mxu0 0
        %499 = vmatmul.mubr.bf16.gmra.mxu0 %v362
        %v500 = vpop.f32.mrf.mxu0
        %v501 = vadd.f32 %v440, %v500
        %v502 = vpop.f32.mrf.mxu0
        %v503 = vpop.f32.mrf.mxu0
        %v504 = vadd.f32 %v440, %v503
        %v505 = vpop.f32.mrf.mxu0
        %506 = vdwg.mxu0
        %v507 = vld [vmem:[%s5] sm:$0xff]
        %v508 = vld [vmem:[%s5 + $0x8] sm:$0xff]
        %v509 = vld [vmem:[%s5 + $0x10] sm:$0xff]
        %v510 = vld [vmem:[%s5 + $0x18] sm:$0xff]
        %v511 = vpack.c.bf16 %v508, %v507
        %v512 = vpack.c.bf16 %v510, %v509
        %v513 = vld [vmem:[%s6] sm:$0x1]
        %v515 = vlaneseq
        %v516 = vshrl.u32 %v515, 7
        %v517 = vsub.s32 0, %v516
        %v518 = vrot.slane %v513, %v517
        %520 = vmatprep.subr.bf16.mxu0 0
        %521 = vmatpush1.bf16.msra.mxu0 0
        %522 = vmatprep.subr.bf16.mxu0 0
        %523 = vmatpush1.bf16.msra.mxu0 0
        %524 = vmatprep.subr.bf16.mxu0 0
        %525 = vmatpush1.bf16.msra.mxu0 0
        %526 = vmatprep.subr.bf16.mxu0 0
        %527 = vmatpush1.bf16.msra.mxu0 0
        %528 = vmatprep.subr.bf16.mxu0 0
        %529 = vmatpush1.bf16.msra.mxu0 0
        %530 = vmatprep.subr.bf16.mxu0 0
        %531 = vmatpush1.bf16.msra.mxu0 0
        %532 = vmatprep.subr.bf16.mxu0 0
        %533 = vmatpush1.bf16.msra.mxu0 %v512
        %534 = vmatprep.subr.bf16.mxu0 0
        %535 = vmatpush1.bf16.msra.mxu0 %v511
        %536 = vmatprep.subr.bf16.mxu0 0
        %537 = vmatpush2.bf16.msra.mxu0 0
        %538 = vmatprep.subr.bf16.mxu0 0
        %539 = vmatpush2.bf16.msra.mxu0 0
        %540 = vmatprep.subr.bf16.mxu0 0
        %541 = vmatpush2.bf16.msra.mxu0 0
        %542 = vmatprep.subr.bf16.mxu0 0
        %543 = vmatpush2.bf16.msra.mxu0 0
        %544 = vmatprep.subr.bf16.mxu0 0
        %545 = vmatpush2.bf16.msra.mxu0 0
        %546 = vmatprep.subr.bf16.mxu0 0
        %547 = vmatpush2.bf16.msra.mxu0 0
        %548 = vmatprep.subr.bf16.mxu0 0
        %549 = vmatpush2.bf16.msra.mxu0 0
        %550 = vmatprep.subr.bf16.mxu0 0
        %551 = vmatpush2.bf16.msra.mxu0 0
        %552 = vmatprep.mubr.bf16.mxu0 0
        %553 = vmatmul.mubr.bf16.gmra.mxu0 %v353
        %v554 = vpop.f32.mrf.mxu0
        %v555 = vadd.f32 %v518, %v554
        %v556 = vpop.f32.mrf.mxu0
        %v557 = vpop.f32.mrf.mxu0
        %v558 = vadd.f32 %v518, %v557
        %v559 = vpop.f32.mrf.mxu0
        %560 = vmatprep.mubr.bf16.mxu0 0
        %561 = vmatmul.mubr.bf16.gmra.mxu0 %v356
        %v562 = vpop.f32.mrf.mxu0
        %v563 = vadd.f32 %v518, %v562
        %v564 = vpop.f32.mrf.mxu0
        %v565 = vpop.f32.mrf.mxu0
        %v566 = vadd.f32 %v518, %v565
        %v567 = vpop.f32.mrf.mxu0
        %568 = vmatprep.mubr.bf16.mxu0 0
        %569 = vmatmul.mubr.bf16.gmra.mxu0 %v359
        %v570 = vpop.f32.mrf.mxu0
        %v571 = vadd.f32 %v518, %v570
        %v572 = vpop.f32.mrf.mxu0
        %v573 = vpop.f32.mrf.mxu0
        %v574 = vadd.f32 %v518, %v573
        %v575 = vpop.f32.mrf.mxu0
        %576 = vmatprep.mubr.bf16.mxu0 0
        %577 = vmatmul.mubr.bf16.gmra.mxu0 %v362
        %v578 = vpop.f32.mrf.mxu0
        %v579 = vadd.f32 %v518, %v578
        %v580 = vpop.f32.mrf.mxu0
        %v581 = vpop.f32.mrf.mxu0
        %v582 = vadd.f32 %v518, %v581
        %v583 = vpop.f32.mrf.mxu0
        %584 = vdwg.mxu0
        %v585 = vcombine.low %v399, %v407
        %v586 = vcombine.high %v399, %v407
        %v588 = vunpack.c.l.s4 1983009808
        %v589 = vunpack.c.0.s8 %v588
        %v590 = vlaneseq
        %v591 = vshrl.u32 %v590, 7
        %v592 = vsub.s32 %v589, %v591
        %v593 = vrot.slane %v585, %v592
        %v595 = vunpack.c.l.s4 1983009808
        %v596 = vunpack.c.0.s8 %v595
        %v597 = vlaneseq
        %v598 = vshrl.u32 %v597, 7
        %v599 = vsub.s32 %v596, %v598
        %v600 = vrot.slane %v586, %v599
        %v601 = vcombine.low %v402, %v410
        %v602 = vcombine.high %v402, %v410
        %v604 = vunpack.c.l.s4 1983009808
        %v605 = vunpack.c.0.s8 %v604
        %v606 = vlaneseq
        %v607 = vshrl.u32 %v606, 7
        %v608 = vsub.s32 %v605, %v607
        %v609 = vrot.slane %v601, %v608
        %v611 = vunpack.c.l.s4 1983009808
        %v612 = vunpack.c.0.s8 %v611
        %v613 = vlaneseq
        %v614 = vshrl.u32 %v613, 7
        %v615 = vsub.s32 %v612, %v614
        %v616 = vrot.slane %v602, %v615
        %v617 = vcombine.low %v415, %v423
        %v618 = vcombine.high %v415, %v423
        %v620 = vunpack.c.l.s4 1983009808
        %v621 = vunpack.c.0.s8 %v620
        %v622 = vlaneseq
        %v623 = vshrl.u32 %v622, 7
        %v624 = vsub.s32 %v621, %v623
        %v625 = vrot.slane %v617, %v624
        %v627 = vunpack.c.l.s4 1983009808
        %v628 = vunpack.c.0.s8 %v627
        %v629 = vlaneseq
        %v630 = vshrl.u32 %v629, 7
        %v631 = vsub.s32 %v628, %v630
        %v632 = vrot.slane %v618, %v631
        %v633 = vcombine.low %v418, %v426
        %v634 = vcombine.high %v418, %v426
        %v636 = vunpack.c.l.s4 1983009808
        %v637 = vunpack.c.0.s8 %v636
        %v638 = vlaneseq
        %v639 = vshrl.u32 %v638, 7
        %v640 = vsub.s32 %v637, %v639
        %v641 = vrot.slane %v633, %v640
        %v643 = vunpack.c.l.s4 1983009808
        %v644 = vunpack.c.0.s8 %v643
        %v645 = vlaneseq
        %v646 = vshrl.u32 %v645, 7
        %v647 = vsub.s32 %v644, %v646
        %v648 = vrot.slane %v634, %v647
        %v649 = vcombine.low %v593, %v609
        %v650 = vcombine.high %v593, %v609
        %v652 = vunpack.c.l.s4 1934713408
        %v653 = vunpack.c.0.s8 %v652
        %v654 = vlaneseq
        %v655 = vshrl.u32 %v654, 7
        %v656 = vsub.s32 %v653, %v655
        %v657 = vrot.slane %v649, %v656
        %v659 = vunpack.c.l.s4 1934713408
        %v660 = vunpack.c.0.s8 %v659
        %v661 = vlaneseq
        %v662 = vshrl.u32 %v661, 7
        %v663 = vsub.s32 %v660, %v662
        %v664 = vrot.slane %v650, %v663
        %v665 = vcombine.low %v600, %v616
        %v666 = vcombine.high %v600, %v616
        %v668 = vunpack.c.l.s4 1934713408
        %v669 = vunpack.c.0.s8 %v668
        %v670 = vlaneseq
        %v671 = vshrl.u32 %v670, 7
        %v672 = vsub.s32 %v669, %v671
        %v673 = vrot.slane %v665, %v672
        %v675 = vunpack.c.l.s4 1934713408
        %v676 = vunpack.c.0.s8 %v675
        %v677 = vlaneseq
        %v678 = vshrl.u32 %v677, 7
        %v679 = vsub.s32 %v676, %v678
        %v680 = vrot.slane %v666, %v679
        %v681 = vcombine.low %v625, %v641
        %v682 = vcombine.high %v625, %v641
        %v684 = vunpack.c.l.s4 1934713408
        %v685 = vunpack.c.0.s8 %v684
        %v686 = vlaneseq
        %v687 = vshrl.u32 %v686, 7
        %v688 = vsub.s32 %v685, %v687
        %v689 = vrot.slane %v681, %v688
        %v691 = vunpack.c.l.s4 1934713408
        %v692 = vunpack.c.0.s8 %v691
        %v693 = vlaneseq
        %v694 = vshrl.u32 %v693, 7
        %v695 = vsub.s32 %v692, %v694
        %v696 = vrot.slane %v682, %v695
        %v697 = vcombine.low %v632, %v648
        %v698 = vcombine.high %v632, %v648
        %v700 = vunpack.c.l.s4 1934713408
        %v701 = vunpack.c.0.s8 %v700
        %v702 = vlaneseq
        %v703 = vshrl.u32 %v702, 7
        %v704 = vsub.s32 %v701, %v703
        %v705 = vrot.slane %v697, %v704
        %v707 = vunpack.c.l.s4 1934713408
        %v708 = vunpack.c.0.s8 %v707
        %v709 = vlaneseq
        %v710 = vshrl.u32 %v709, 7
        %v711 = vsub.s32 %v708, %v710
        %v712 = vrot.slane %v698, %v711
        %v713 = vcombine.low %v657, %v689
        %v714 = vcombine.high %v657, %v689
        %v715 = vcombine.low %v664, %v696
        %v716 = vcombine.high %v664, %v696
        %v717 = vcombine.low %v673, %v705
        %v718 = vcombine.high %v673, %v705
        %v719 = vcombine.low %v680, %v712
        %v720 = vcombine.high %v680, %v712
        %v721 = vcombine.low %v477, %v485
        %v722 = vcombine.high %v477, %v485
        %v724 = vunpack.c.l.s4 1983009808
        %v725 = vunpack.c.0.s8 %v724
        %v726 = vlaneseq
        %v727 = vshrl.u32 %v726, 7
        %v728 = vsub.s32 %v725, %v727
        %v729 = vrot.slane %v721, %v728
        %v731 = vunpack.c.l.s4 1983009808
        %v732 = vunpack.c.0.s8 %v731
        %v733 = vlaneseq
        %v734 = vshrl.u32 %v733, 7
        %v735 = vsub.s32 %v732, %v734
        %v736 = vrot.slane %v722, %v735
        %v737 = vcombine.low %v480, %v488
        %v738 = vcombine.high %v480, %v488
        %v740 = vunpack.c.l.s4 1983009808
        %v741 = vunpack.c.0.s8 %v740
        %v742 = vlaneseq
        %v743 = vshrl.u32 %v742, 7
        %v744 = vsub.s32 %v741, %v743
        %v745 = vrot.slane %v737, %v744
        %v747 = vunpack.c.l.s4 1983009808
        %v748 = vunpack.c.0.s8 %v747
        %v749 = vlaneseq
        %v750 = vshrl.u32 %v749, 7
        %v751 = vsub.s32 %v748, %v750
        %v752 = vrot.slane %v738, %v751
        %v753 = vcombine.low %v493, %v501
        %v754 = vcombine.high %v493, %v501
        %v756 = vunpack.c.l.s4 1983009808
        %v757 = vunpack.c.0.s8 %v756
        %v758 = vlaneseq
        %v759 = vshrl.u32 %v758, 7
        %v760 = vsub.s32 %v757, %v759
        %v761 = vrot.slane %v753, %v760
        %v763 = vunpack.c.l.s4 1983009808
        %v764 = vunpack.c.0.s8 %v763
        %v765 = vlaneseq
        %v766 = vshrl.u32 %v765, 7
        %v767 = vsub.s32 %v764, %v766
        %v768 = vrot.slane %v754, %v767
        %v769 = vcombine.low %v496, %v504
        %v770 = vcombine.high %v496, %v504
        %v772 = vunpack.c.l.s4 1983009808
        %v773 = vunpack.c.0.s8 %v772
        %v774 = vlaneseq
        %v775 = vshrl.u32 %v774, 7
        %v776 = vsub.s32 %v773, %v775
        %v777 = vrot.slane %v769, %v776
        %v779 = vunpack.c.l.s4 1983009808
        %v780 = vunpack.c.0.s8 %v779
        %v781 = vlaneseq
        %v782 = vshrl.u32 %v781, 7
        %v783 = vsub.s32 %v780, %v782
        %v784 = vrot.slane %v770, %v783
        %v785 = vcombine.low %v729, %v745
        %v786 = vcombine.high %v729, %v745
        %v788 = vunpack.c.l.s4 1934713408
        %v789 = vunpack.c.0.s8 %v788
        %v790 = vlaneseq
        %v791 = vshrl.u32 %v790, 7
        %v792 = vsub.s32 %v789, %v791
        %v793 = vrot.slane %v785, %v792
        %v795 = vunpack.c.l.s4 1934713408
        %v796 = vunpack.c.0.s8 %v795
        %v797 = vlaneseq
        %v798 = vshrl.u32 %v797, 7
        %v799 = vsub.s32 %v796, %v798
        %v800 = vrot.slane %v786, %v799
        %v801 = vcombine.low %v736, %v752
        %v802 = vcombine.high %v736, %v752
        %v804 = vunpack.c.l.s4 1934713408
        %v805 = vunpack.c.0.s8 %v804
        %v806 = vlaneseq
        %v807 = vshrl.u32 %v806, 7
        %v808 = vsub.s32 %v805, %v807
        %v809 = vrot.slane %v801, %v808
        %v811 = vunpack.c.l.s4 1934713408
        %v812 = vunpack.c.0.s8 %v811
        %v813 = vlaneseq
        %v814 = vshrl.u32 %v813, 7
        %v815 = vsub.s32 %v812, %v814
        %v816 = vrot.slane %v802, %v815
        %v817 = vcombine.low %v761, %v777
        %v818 = vcombine.high %v761, %v777
        %v820 = vunpack.c.l.s4 1934713408
        %v821 = vunpack.c.0.s8 %v820
        %v822 = vlaneseq
        %v823 = vshrl.u32 %v822, 7
        %v824 = vsub.s32 %v821, %v823
        %v825 = vrot.slane %v817, %v824
        %v827 = vunpack.c.l.s4 1934713408
        %v828 = vunpack.c.0.s8 %v827
        %v829 = vlaneseq
        %v830 = vshrl.u32 %v829, 7
        %v831 = vsub.s32 %v828, %v830
        %v832 = vrot.slane %v818, %v831
        %v833 = vcombine.low %v768, %v784
        %v834 = vcombine.high %v768, %v784
        %v836 = vunpack.c.l.s4 1934713408
        %v837 = vunpack.c.0.s8 %v836
        %v838 = vlaneseq
        %v839 = vshrl.u32 %v838, 7
        %v840 = vsub.s32 %v837, %v839
        %v841 = vrot.slane %v833, %v840
        %v843 = vunpack.c.l.s4 1934713408
        %v844 = vunpack.c.0.s8 %v843
        %v845 = vlaneseq
        %v846 = vshrl.u32 %v845, 7
        %v847 = vsub.s32 %v844, %v846
        %v848 = vrot.slane %v834, %v847
        %v849 = vcombine.low %v793, %v825
        %v850 = vcombine.high %v793, %v825
        %v851 = vcombine.low %v800, %v832
        %v852 = vcombine.high %v800, %v832
        %v853 = vcombine.low %v809, %v841
        %v854 = vcombine.high %v809, %v841
        %v855 = vcombine.low %v816, %v848
        %v856 = vcombine.high %v816, %v848
        %v857 = vcombine.low %v555, %v563
        %v858 = vcombine.high %v555, %v563
        %v860 = vunpack.c.l.s4 1983009808
        %v861 = vunpack.c.0.s8 %v860
        %v862 = vlaneseq
        %v863 = vshrl.u32 %v862, 7
        %v864 = vsub.s32 %v861, %v863
        %v865 = vrot.slane %v857, %v864
        %v867 = vunpack.c.l.s4 1983009808
        %v868 = vunpack.c.0.s8 %v867
        %v869 = vlaneseq
        %v870 = vshrl.u32 %v869, 7
        %v871 = vsub.s32 %v868, %v870
        %v872 = vrot.slane %v858, %v871
        %v873 = vcombine.low %v558, %v566
        %v874 = vcombine.high %v558, %v566
        %v876 = vunpack.c.l.s4 1983009808
        %v877 = vunpack.c.0.s8 %v876
        %v878 = vlaneseq
        %v879 = vshrl.u32 %v878, 7
        %v880 = vsub.s32 %v877, %v879
        %v881 = vrot.slane %v873, %v880
        %v883 = vunpack.c.l.s4 1983009808
        %v884 = vunpack.c.0.s8 %v883
        %v885 = vlaneseq
        %v886 = vshrl.u32 %v885, 7
        %v887 = vsub.s32 %v884, %v886
        %v888 = vrot.slane %v874, %v887
        %v889 = vcombine.low %v571, %v579
        %v890 = vcombine.high %v571, %v579
        %v892 = vunpack.c.l.s4 1983009808
        %v893 = vunpack.c.0.s8 %v892
        %v894 = vlaneseq
        %v895 = vshrl.u32 %v894, 7
        %v896 = vsub.s32 %v893, %v895
        %v897 = vrot.slane %v889, %v896
        %v899 = vunpack.c.l.s4 1983009808
        %v900 = vunpack.c.0.s8 %v899
        %v901 = vlaneseq
        %v902 = vshrl.u32 %v901, 7
        %v903 = vsub.s32 %v900, %v902
        %v904 = vrot.slane %v890, %v903
        %v905 = vcombine.low %v574, %v582
        %v906 = vcombine.high %v574, %v582
        %v908 = vunpack.c.l.s4 1983009808
        %v909 = vunpack.c.0.s8 %v908
        %v910 = vlaneseq
        %v911 = vshrl.u32 %v910, 7
        %v912 = vsub.s32 %v909, %v911
        %v913 = vrot.slane %v905, %v912
        %v915 = vunpack.c.l.s4 1983009808
        %v916 = vunpack.c.0.s8 %v915
        %v917 = vlaneseq
        %v918 = vshrl.u32 %v917, 7
        %v919 = vsub.s32 %v916, %v918
        %v920 = vrot.slane %v906, %v919
        %v921 = vcombine.low %v865, %v881
        %v922 = vcombine.high %v865, %v881
        %v924 = vunpack.c.l.s4 1934713408
        %v925 = vunpack.c.0.s8 %v924
        %v926 = vlaneseq
        %v927 = vshrl.u32 %v926, 7
        %v928 = vsub.s32 %v925, %v927
        %v929 = vrot.slane %v921, %v928
        %v931 = vunpack.c.l.s4 1934713408
        %v932 = vunpack.c.0.s8 %v931
        %v933 = vlaneseq
        %v934 = vshrl.u32 %v933, 7
        %v935 = vsub.s32 %v932, %v934
        %v936 = vrot.slane %v922, %v935
        %v937 = vcombine.low %v872, %v888
        %v938 = vcombine.high %v872, %v888
        %v940 = vunpack.c.l.s4 1934713408
        %v941 = vunpack.c.0.s8 %v940
        %v942 = vlaneseq
        %v943 = vshrl.u32 %v942, 7
        %v944 = vsub.s32 %v941, %v943
        %v945 = vrot.slane %v937, %v944
        %v947 = vunpack.c.l.s4 1934713408
        %v948 = vunpack.c.0.s8 %v947
        %v949 = vlaneseq
        %v950 = vshrl.u32 %v949, 7
        %v951 = vsub.s32 %v948, %v950
        %v952 = vrot.slane %v938, %v951
        %v953 = vcombine.low %v897, %v913
        %v954 = vcombine.high %v897, %v913
        %v956 = vunpack.c.l.s4 1934713408
        %v957 = vunpack.c.0.s8 %v956
        %v958 = vlaneseq
        %v959 = vshrl.u32 %v958, 7
        %v960 = vsub.s32 %v957, %v959
        %v961 = vrot.slane %v953, %v960
        %v963 = vunpack.c.l.s4 1934713408
        %v964 = vunpack.c.0.s8 %v963
        %v965 = vlaneseq
        %v966 = vshrl.u32 %v965, 7
        %v967 = vsub.s32 %v964, %v966
        %v968 = vrot.slane %v954, %v967
        %v969 = vcombine.low %v904, %v920
        %v970 = vcombine.high %v904, %v920
        %v972 = vunpack.c.l.s4 1934713408
        %v973 = vunpack.c.0.s8 %v972
        %v974 = vlaneseq
        %v975 = vshrl.u32 %v974, 7
        %v976 = vsub.s32 %v973, %v975
        %v977 = vrot.slane %v969, %v976
        %v979 = vunpack.c.l.s4 1934713408
        %v980 = vunpack.c.0.s8 %v979
        %v981 = vlaneseq
        %v982 = vshrl.u32 %v981, 7
        %v983 = vsub.s32 %v980, %v982
        %v984 = vrot.slane %v970, %v983
        %v985 = vcombine.low %v929, %v961
        %v986 = vcombine.high %v929, %v961
        %v987 = vcombine.low %v936, %v968
        %v988 = vcombine.high %v936, %v968
        %v989 = vcombine.low %v945, %v977
        %v990 = vcombine.high %v945, %v977
        %v991 = vcombine.low %v952, %v984
        %v992 = vcombine.high %v952, %v984
        %v993 = vpack.c.bf16 %v399, %v399
        %v994 = vpack.c.bf16 %v402, %v402
        %v995 = vpack.c.bf16 %v407, %v407
        %v996 = vpack.c.bf16 %v410, %v410
        %v997 = vpack.c.bf16 %v415, %v415
        %v998 = vpack.c.bf16 %v418, %v418
        %v999 = vpack.c.bf16 %v423, %v423
        %v1000 = vpack.c.bf16 %v426, %v426
        %v1001 = vpack.c.bf16 %v477, %v477
        %v1002 = vpack.c.bf16 %v480, %v480
        %v1003 = vpack.c.bf16 %v485, %v485
        %v1004 = vpack.c.bf16 %v488, %v488
        %v1005 = vpack.c.bf16 %v493, %v493
        %v1006 = vpack.c.bf16 %v496, %v496
        %v1007 = vpack.c.bf16 %v501, %v501
        %v1008 = vpack.c.bf16 %v504, %v504
        %vm1009 = vcmask 31744
        %v1011 = vsel %vm1009, %v993, 0
        %v1014 = vsel %vm1009, %v1001, 0
        %1016 = vmatprep.subr.bf16.mxu0 0
        %1017 = vmatpush1.bf16.xpose.msra.mxu0 0
        %1018 = vmatprep.subr.bf16.mxu0 0
        %1019 = vmatpush1.bf16.xpose.msra.mxu0 0
        %1020 = vmatprep.subr.bf16.mxu0 0
        %1021 = vmatpush1.bf16.xpose.msra.mxu0 0
        %1022 = vmatprep.subr.bf16.mxu0 0
        %1023 = vmatpush1.bf16.xpose.msra.mxu0 0
        %1024 = vmatprep.subr.bf16.mxu0 0
        %1025 = vmatpush1.bf16.xpose.msra.mxu0 0
        %1026 = vmatprep.subr.bf16.mxu0 0
        %1027 = vmatpush1.bf16.xpose.msra.mxu0 0
        %1028 = vmatprep.subr.bf16.mxu0 0
        %1029 = vmatpush1.bf16.xpose.msra.mxu0 0
        %1030 = vmatprep.subr.bf16.mxu0 0
        %1031 = vmatpush1.bf16.xpose.msra.mxu0 %v1014
        %1032 = vmatprep.subr.bf16.mxu0 0
        %1033 = vmatpush2.bf16.xpose.msra.mxu0 0
        %1034 = vmatprep.subr.bf16.mxu0 0
        %1035 = vmatpush2.bf16.xpose.msra.mxu0 0
        %1036 = vmatprep.subr.bf16.mxu0 0
        %1037 = vmatpush2.bf16.xpose.msra.mxu0 0
        %1038 = vmatprep.subr.bf16.mxu0 0
        %1039 = vmatpush2.bf16.xpose.msra.mxu0 0
        %1040 = vmatprep.subr.bf16.mxu0 0
        %1041 = vmatpush2.bf16.xpose.msra.mxu0 0
        %1042 = vmatprep.subr.bf16.mxu0 0
        %1043 = vmatpush2.bf16.xpose.msra.mxu0 0
        %1044 = vmatprep.subr.bf16.mxu0 0
        %1045 = vmatpush2.bf16.xpose.msra.mxu0 0
        %1046 = vmatprep.subr.bf16.mxu0 0
        %1047 = vmatpush2.bf16.xpose.msra.mxu0 0
        %1048 = vmatprep.mubr.bf16.mxu0 0
        %1049 = vmatmul.mubr.bf16.gmra.mxu0 %v1011
        %v1050 = vpop.f32.mrf.mxu0
        %v1051 = vadd.f32 0.0, %v1050
        %v1052 = vpop.f32.mrf.mxu0
        %v1053 = vpop.f32.mrf.mxu0
        %v1054 = vpop.f32.mrf.mxu0
        %1055 = vdwg.mxu0
        %v1057 = vsel %vm1009, %v994, 0
        %v1060 = vsel %vm1009, %v1002, 0
        %1062 = vmatprep.subr.bf16.mxu0 0
        %1063 = vmatpush1.bf16.xpose.msra.mxu0 0
        %1064 = vmatprep.subr.bf16.mxu0 0
        %1065 = vmatpush1.bf16.xpose.msra.mxu0 0
        %1066 = vmatprep.subr.bf16.mxu0 0
        %1067 = vmatpush1.bf16.xpose.msra.mxu0 0
        %1068 = vmatprep.subr.bf16.mxu0 0
        %1069 = vmatpush1.bf16.xpose.msra.mxu0 0
        %1070 = vmatprep.subr.bf16.mxu0 0
        %1071 = vmatpush1.bf16.xpose.msra.mxu0 0
        %1072 = vmatprep.subr.bf16.mxu0 0
        %1073 = vmatpush1.bf16.xpose.msra.mxu0 0
        %1074 = vmatprep.subr.bf16.mxu0 0
        %1075 = vmatpush1.bf16.xpose.msra.mxu0 0
        %1076 = vmatprep.subr.bf16.mxu0 0
        %1077 = vmatpush1.bf16.xpose.msra.mxu0 %v1060
        %1078 = vmatprep.subr.bf16.mxu0 0
        %1079 = vmatpush2.bf16.xpose.msra.mxu0 0
        %1080 = vmatprep.subr.bf16.mxu0 0
        %1081 = vmatpush2.bf16.xpose.msra.mxu0 0
        %1082 = vmatprep.subr.bf16.mxu0 0
        %1083 = vmatpush2.bf16.xpose.msra.mxu0 0
        %1084 = vmatprep.subr.bf16.mxu0 0
        %1085 = vmatpush2.bf16.xpose.msra.mxu0 0
        %1086 = vmatprep.subr.bf16.mxu0 0
        %1087 = vmatpush2.bf16.xpose.msra.mxu0 0
        %1088 = vmatprep.subr.bf16.mxu0 0
        %1089 = vmatpush2.bf16.xpose.msra.mxu0 0
        %1090 = vmatprep.subr.bf16.mxu0 0
        %1091 = vmatpush2.bf16.xpose.msra.mxu0 0
        %1092 = vmatprep.subr.bf16.mxu0 0
        %1093 = vmatpush2.bf16.xpose.msra.mxu0 0
        %1094 = vmatprep.mubr.bf16.mxu0 0
        %1095 = vmatmul.mubr.bf16.gmra.mxu0 %v1057
        %v1096 = vpop.f32.mrf.mxu0
        %v1097 = vadd.f32 0.0, %v1096
        %v1098 = vpop.f32.mrf.mxu0
        %v1099 = vpop.f32.mrf.mxu0
        %v1100 = vpop.f32.mrf.mxu0
        %1101 = vdwg.mxu0
        %v1103 = vsel %vm1009, %v995, 0
        %v1106 = vsel %vm1009, %v1003, 0
        %1108 = vmatprep.subr.bf16.mxu0 0
        %1109 = vmatpush1.bf16.xpose.msra.mxu0 0
        %1110 = vmatprep.subr.bf16.mxu0 0
        %1111 = vmatpush1.bf16.xpose.msra.mxu0 0
        %1112 = vmatprep.subr.bf16.mxu0 0
        %1113 = vmatpush1.bf16.xpose.msra.mxu0 0
        %1114 = vmatprep.subr.bf16.mxu0 0
        %1115 = vmatpush1.bf16.xpose.msra.mxu0 0
        %1116 = vmatprep.subr.bf16.mxu0 0
        %1117 = vmatpush1.bf16.xpose.msra.mxu0 0
        %1118 = vmatprep.subr.bf16.mxu0 0
        %1119 = vmatpush1.bf16.xpose.msra.mxu0 0
        %1120 = vmatprep.subr.bf16.mxu0 0
        %1121 = vmatpush1.bf16.xpose.msra.mxu0 0
        %1122 = vmatprep.subr.bf16.mxu0 0
        %1123 = vmatpush1.bf16.xpose.msra.mxu0 %v1106
        %1124 = vmatprep.subr.bf16.mxu0 0
        %1125 = vmatpush2.bf16.xpose.msra.mxu0 0
        %1126 = vmatprep.subr.bf16.mxu0 0
        %1127 = vmatpush2.bf16.xpose.msra.mxu0 0
        %1128 = vmatprep.subr.bf16.mxu0 0
        %1129 = vmatpush2.bf16.xpose.msra.mxu0 0
        %1130 = vmatprep.subr.bf16.mxu0 0
        %1131 = vmatpush2.bf16.xpose.msra.mxu0 0
        %1132 = vmatprep.subr.bf16.mxu0 0
        %1133 = vmatpush2.bf16.xpose.msra.mxu0 0
        %1134 = vmatprep.subr.bf16.mxu0 0
        %1135 = vmatpush2.bf16.xpose.msra.mxu0 0
        %1136 = vmatprep.subr.bf16.mxu0 0
        %1137 = vmatpush2.bf16.xpose.msra.mxu0 0
        %1138 = vmatprep.subr.bf16.mxu0 0
        %1139 = vmatpush2.bf16.xpose.msra.mxu0 0
        %1140 = vmatprep.mubr.bf16.mxu0 0
        %1141 = vmatmul.mubr.bf16.gmra.mxu0 %v1103
        %v1142 = vpop.f32.mrf.mxu0
        %v1143 = vadd.f32 0.0, %v1142
        %v1144 = vpop.f32.mrf.mxu0
        %v1145 = vpop.f32.mrf.mxu0
        %v1146 = vpop.f32.mrf.mxu0
        %1147 = vdwg.mxu0
        %v1149 = vsel %vm1009, %v996, 0
        %v1152 = vsel %vm1009, %v1004, 0
        %1154 = vmatprep.subr.bf16.mxu0 0
        %1155 = vmatpush1.bf16.xpose.msra.mxu0 0
        %1156 = vmatprep.subr.bf16.mxu0 0
        %1157 = vmatpush1.bf16.xpose.msra.mxu0 0
        %1158 = vmatprep.subr.bf16.mxu0 0
        %1159 = vmatpush1.bf16.xpose.msra.mxu0 0
        %1160 = vmatprep.subr.bf16.mxu0 0
        %1161 = vmatpush1.bf16.xpose.msra.mxu0 0
        %1162 = vmatprep.subr.bf16.mxu0 0
        %1163 = vmatpush1.bf16.xpose.msra.mxu0 0
        %1164 = vmatprep.subr.bf16.mxu0 0
        %1165 = vmatpush1.bf16.xpose.msra.mxu0 0
        %1166 = vmatprep.subr.bf16.mxu0 0
        %1167 = vmatpush1.bf16.xpose.msra.mxu0 0
        %1168 = vmatprep.subr.bf16.mxu0 0
        %1169 = vmatpush1.bf16.xpose.msra.mxu0 %v1152
        %1170 = vmatprep.subr.bf16.mxu0 0
        %1171 = vmatpush2.bf16.xpose.msra.mxu0 0
        %1172 = vmatprep.subr.bf16.mxu0 0
        %1173 = vmatpush2.bf16.xpose.msra.mxu0 0
        %1174 = vmatprep.subr.bf16.mxu0 0
        %1175 = vmatpush2.bf16.xpose.msra.mxu0 0
        %1176 = vmatprep.subr.bf16.mxu0 0
        %1177 = vmatpush2.bf16.xpose.msra.mxu0 0
        %1178 = vmatprep.subr.bf16.mxu0 0
        %1179 = vmatpush2.bf16.xpose.msra.mxu0 0
        %1180 = vmatprep.subr.bf16.mxu0 0
        %1181 = vmatpush2.bf16.xpose.msra.mxu0 0
        %1182 = vmatprep.subr.bf16.mxu0 0
        %1183 = vmatpush2.bf16.xpose.msra.mxu0 0
        %1184 = vmatprep.subr.bf16.mxu0 0
        %1185 = vmatpush2.bf16.xpose.msra.mxu0 0
        %1186 = vmatprep.mubr.bf16.mxu0 0
        %1187 = vmatmul.mubr.bf16.gmra.mxu0 %v1149
        %v1188 = vpop.f32.mrf.mxu0
        %v1189 = vadd.f32 0.0, %v1188
        %v1190 = vpop.f32.mrf.mxu0
        %v1191 = vpop.f32.mrf.mxu0
        %v1192 = vpop.f32.mrf.mxu0
        %1193 = vdwg.mxu0
        %v1195 = vsel %vm1009, %v997, 0
        %v1198 = vsel %vm1009, %v1005, 0
        %1200 = vmatprep.subr.bf16.mxu0 0
        %1201 = vmatpush1.bf16.xpose.msra.mxu0 0
        %1202 = vmatprep.subr.bf16.mxu0 0
        %1203 = vmatpush1.bf16.xpose.msra.mxu0 0
        %1204 = vmatprep.subr.bf16.mxu0 0
        %1205 = vmatpush1.bf16.xpose.msra.mxu0 0
        %1206 = vmatprep.subr.bf16.mxu0 0
        %1207 = vmatpush1.bf16.xpose.msra.mxu0 0
        %1208 = vmatprep.subr.bf16.mxu0 0
        %1209 = vmatpush1.bf16.xpose.msra.mxu0 0
        %1210 = vmatprep.subr.bf16.mxu0 0
        %1211 = vmatpush1.bf16.xpose.msra.mxu0 0
        %1212 = vmatprep.subr.bf16.mxu0 0
        %1213 = vmatpush1.bf16.xpose.msra.mxu0 0
        %1214 = vmatprep.subr.bf16.mxu0 0
        %1215 = vmatpush1.bf16.xpose.msra.mxu0 %v1198
        %1216 = vmatprep.subr.bf16.mxu0 0
        %1217 = vmatpush2.bf16.xpose.msra.mxu0 0
        %1218 = vmatprep.subr.bf16.mxu0 0
        %1219 = vmatpush2.bf16.xpose.msra.mxu0 0
        %1220 = vmatprep.subr.bf16.mxu0 0
        %1221 = vmatpush2.bf16.xpose.msra.mxu0 0
        %1222 = vmatprep.subr.bf16.mxu0 0
        %1223 = vmatpush2.bf16.xpose.msra.mxu0 0
        %1224 = vmatprep.subr.bf16.mxu0 0
        %1225 = vmatpush2.bf16.xpose.msra.mxu0 0
        %1226 = vmatprep.subr.bf16.mxu0 0
        %1227 = vmatpush2.bf16.xpose.msra.mxu0 0
        %1228 = vmatprep.subr.bf16.mxu0 0
        %1229 = vmatpush2.bf16.xpose.msra.mxu0 0
        %1230 = vmatprep.subr.bf16.mxu0 0
        %1231 = vmatpush2.bf16.xpose.msra.mxu0 0
        %1232 = vmatprep.mubr.bf16.mxu0 0
        %1233 = vmatmul.mubr.bf16.gmra.mxu0 %v1195
        %v1234 = vpop.f32.mrf.mxu0
        %v1235 = vadd.f32 0.0, %v1234
        %v1236 = vpop.f32.mrf.mxu0
        %v1237 = vpop.f32.mrf.mxu0
        %v1238 = vpop.f32.mrf.mxu0
        %1239 = vdwg.mxu0
        %v1241 = vsel %vm1009, %v998, 0
        %v1244 = vsel %vm1009, %v1006, 0
        %1246 = vmatprep.subr.bf16.mxu0 0
        %1247 = vmatpush1.bf16.xpose.msra.mxu0 0
        %1248 = vmatprep.subr.bf16.mxu0 0
        %1249 = vmatpush1.bf16.xpose.msra.mxu0 0
        %1250 = vmatprep.subr.bf16.mxu0 0
        %1251 = vmatpush1.bf16.xpose.msra.mxu0 0
        %1252 = vmatprep.subr.bf16.mxu0 0
        %1253 = vmatpush1.bf16.xpose.msra.mxu0 0
        %1254 = vmatprep.subr.bf16.mxu0 0
        %1255 = vmatpush1.bf16.xpose.msra.mxu0 0
        %1256 = vmatprep.subr.bf16.mxu0 0
        %1257 = vmatpush1.bf16.xpose.msra.mxu0 0
        %1258 = vmatprep.subr.bf16.mxu0 0
        %1259 = vmatpush1.bf16.xpose.msra.mxu0 0
        %1260 = vmatprep.subr.bf16.mxu0 0
        %1261 = vmatpush1.bf16.xpose.msra.mxu0 %v1244
        %1262 = vmatprep.subr.bf16.mxu0 0
        %1263 = vmatpush2.bf16.xpose.msra.mxu0 0
        %1264 = vmatprep.subr.bf16.mxu0 0
        %1265 = vmatpush2.bf16.xpose.msra.mxu0 0
        %1266 = vmatprep.subr.bf16.mxu0 0
        %1267 = vmatpush2.bf16.xpose.msra.mxu0 0
        %1268 = vmatprep.subr.bf16.mxu0 0
        %1269 = vmatpush2.bf16.xpose.msra.mxu0 0
        %1270 = vmatprep.subr.bf16.mxu0 0
        %1271 = vmatpush2.bf16.xpose.msra.mxu0 0
        %1272 = vmatprep.subr.bf16.mxu0 0
        %1273 = vmatpush2.bf16.xpose.msra.mxu0 0
        %1274 = vmatprep.subr.bf16.mxu0 0
        %1275 = vmatpush2.bf16.xpose.msra.mxu0 0
        %1276 = vmatprep.subr.bf16.mxu0 0
        %1277 = vmatpush2.bf16.xpose.msra.mxu0 0
        %1278 = vmatprep.mubr.bf16.mxu0 0
        %1279 = vmatmul.mubr.bf16.gmra.mxu0 %v1241
        %v1280 = vpop.f32.mrf.mxu0
        %v1281 = vadd.f32 0.0, %v1280
        %v1282 = vpop.f32.mrf.mxu0
        %v1283 = vpop.f32.mrf.mxu0
        %v1284 = vpop.f32.mrf.mxu0
        %1285 = vdwg.mxu0
        %v1287 = vsel %vm1009, %v999, 0
        %v1290 = vsel %vm1009, %v1007, 0
        %1292 = vmatprep.subr.bf16.mxu0 0
        %1293 = vmatpush1.bf16.xpose.msra.mxu0 0
        %1294 = vmatprep.subr.bf16.mxu0 0
        %1295 = vmatpush1.bf16.xpose.msra.mxu0 0
        %1296 = vmatprep.subr.bf16.mxu0 0
        %1297 = vmatpush1.bf16.xpose.msra.mxu0 0
        %1298 = vmatprep.subr.bf16.mxu0 0
        %1299 = vmatpush1.bf16.xpose.msra.mxu0 0
        %1300 = vmatprep.subr.bf16.mxu0 0
        %1301 = vmatpush1.bf16.xpose.msra.mxu0 0
        %1302 = vmatprep.subr.bf16.mxu0 0
        %1303 = vmatpush1.bf16.xpose.msra.mxu0 0
        %1304 = vmatprep.subr.bf16.mxu0 0
        %1305 = vmatpush1.bf16.xpose.msra.mxu0 0
        %1306 = vmatprep.subr.bf16.mxu0 0
        %1307 = vmatpush1.bf16.xpose.msra.mxu0 %v1290
        %1308 = vmatprep.subr.bf16.mxu0 0
        %1309 = vmatpush2.bf16.xpose.msra.mxu0 0
        %1310 = vmatprep.subr.bf16.mxu0 0
        %1311 = vmatpush2.bf16.xpose.msra.mxu0 0
        %1312 = vmatprep.subr.bf16.mxu0 0
        %1313 = vmatpush2.bf16.xpose.msra.mxu0 0
        %1314 = vmatprep.subr.bf16.mxu0 0
        %1315 = vmatpush2.bf16.xpose.msra.mxu0 0
        %1316 = vmatprep.subr.bf16.mxu0 0
        %1317 = vmatpush2.bf16.xpose.msra.mxu0 0
        %1318 = vmatprep.subr.bf16.mxu0 0
        %1319 = vmatpush2.bf16.xpose.msra.mxu0 0
        %1320 = vmatprep.subr.bf16.mxu0 0
        %1321 = vmatpush2.bf16.xpose.msra.mxu0 0
        %1322 = vmatprep.subr.bf16.mxu0 0
        %1323 = vmatpush2.bf16.xpose.msra.mxu0 0
        %1324 = vmatprep.mubr.bf16.mxu0 0
        %1325 = vmatmul.mubr.bf16.gmra.mxu0 %v1287
        %v1326 = vpop.f32.mrf.mxu0
        %v1327 = vadd.f32 0.0, %v1326
        %v1328 = vpop.f32.mrf.mxu0
        %v1329 = vpop.f32.mrf.mxu0
        %v1330 = vpop.f32.mrf.mxu0
        %1331 = vdwg.mxu0
        %v1333 = vsel %vm1009, %v1000, 0
        %v1336 = vsel %vm1009, %v1008, 0
        %1338 = vmatprep.subr.bf16.mxu0 0
        %1339 = vmatpush1.bf16.xpose.msra.mxu0 0
        %1340 = vmatprep.subr.bf16.mxu0 0
        %1341 = vmatpush1.bf16.xpose.msra.mxu0 0
        %1342 = vmatprep.subr.bf16.mxu0 0
        %1343 = vmatpush1.bf16.xpose.msra.mxu0 0
        %1344 = vmatprep.subr.bf16.mxu0 0
        %1345 = vmatpush1.bf16.xpose.msra.mxu0 0
        %1346 = vmatprep.subr.bf16.mxu0 0
        %1347 = vmatpush1.bf16.xpose.msra.mxu0 0
        %1348 = vmatprep.subr.bf16.mxu0 0
        %1349 = vmatpush1.bf16.xpose.msra.mxu0 0
        %1350 = vmatprep.subr.bf16.mxu0 0
        %1351 = vmatpush1.bf16.xpose.msra.mxu0 0
        %1352 = vmatprep.subr.bf16.mxu0 0
        %1353 = vmatpush1.bf16.xpose.msra.mxu0 %v1336
        %1354 = vmatprep.subr.bf16.mxu0 0
        %1355 = vmatpush2.bf16.xpose.msra.mxu0 0
        %1356 = vmatprep.subr.bf16.mxu0 0
        %1357 = vmatpush2.bf16.xpose.msra.mxu0 0
        %1358 = vmatprep.subr.bf16.mxu0 0
        %1359 = vmatpush2.bf16.xpose.msra.mxu0 0
        %1360 = vmatprep.subr.bf16.mxu0 0
        %1361 = vmatpush2.bf16.xpose.msra.mxu0 0
        %1362 = vmatprep.subr.bf16.mxu0 0
        %1363 = vmatpush2.bf16.xpose.msra.mxu0 0
        %1364 = vmatprep.subr.bf16.mxu0 0
        %1365 = vmatpush2.bf16.xpose.msra.mxu0 0
        %1366 = vmatprep.subr.bf16.mxu0 0
        %1367 = vmatpush2.bf16.xpose.msra.mxu0 0
        %1368 = vmatprep.subr.bf16.mxu0 0
        %1369 = vmatpush2.bf16.xpose.msra.mxu0 0
        %1370 = vmatprep.mubr.bf16.mxu0 0
        %1371 = vmatmul.mubr.bf16.gmra.mxu0 %v1333
        %v1372 = vpop.f32.mrf.mxu0
        %v1373 = vadd.f32 0.0, %v1372
        %v1374 = vpop.f32.mrf.mxu0
        %v1375 = vpop.f32.mrf.mxu0
        %v1376 = vpop.f32.mrf.mxu0
        %1377 = vdwg.mxu0
        %v1378 = vpack.c.bf16 %v713, %v713
        %v1379 = vpack.c.bf16 %v714, %v714
        %v1380 = vpack.c.bf16 %v715, %v715
        %v1381 = vpack.c.bf16 %v716, %v716
        %v1382 = vpack.c.bf16 %v717, %v717
        %v1383 = vpack.c.bf16 %v718, %v718
        %v1384 = vpack.c.bf16 %v719, %v719
        %v1385 = vpack.c.bf16 %v720, %v720
        %v1386 = vpack.c.bf16 %v849, %v849
        %v1387 = vpack.c.bf16 %v850, %v850
        %v1388 = vpack.c.bf16 %v851, %v851
        %v1389 = vpack.c.bf16 %v852, %v852
        %v1390 = vpack.c.bf16 %v853, %v853
        %v1391 = vpack.c.bf16 %v854, %v854
        %v1392 = vpack.c.bf16 %v855, %v855
        %v1393 = vpack.c.bf16 %v856, %v856
        %v1395 = vsel %vm1009, %v1378, 0
        %v1398 = vsel %vm1009, %v1386, 0
        %1400 = vmatprep.subr.bf16.mxu0 0
        %1401 = vmatpush1.bf16.xpose.msra.mxu0 0
        %1402 = vmatprep.subr.bf16.mxu0 0
        %1403 = vmatpush1.bf16.xpose.msra.mxu0 0
        %1404 = vmatprep.subr.bf16.mxu0 0
        %1405 = vmatpush1.bf16.xpose.msra.mxu0 0
        %1406 = vmatprep.subr.bf16.mxu0 0
        %1407 = vmatpush1.bf16.xpose.msra.mxu0 0
        %1408 = vmatprep.subr.bf16.mxu0 0
        %1409 = vmatpush1.bf16.xpose.msra.mxu0 0
        %1410 = vmatprep.subr.bf16.mxu0 0
        %1411 = vmatpush1.bf16.xpose.msra.mxu0 0
        %1412 = vmatprep.subr.bf16.mxu0 0
        %1413 = vmatpush1.bf16.xpose.msra.mxu0 0
        %1414 = vmatprep.subr.bf16.mxu0 0
        %1415 = vmatpush1.bf16.xpose.msra.mxu0 %v1398
        %1416 = vmatprep.subr.bf16.mxu0 0
        %1417 = vmatpush2.bf16.xpose.msra.mxu0 0
        %1418 = vmatprep.subr.bf16.mxu0 0
        %1419 = vmatpush2.bf16.xpose.msra.mxu0 0
        %1420 = vmatprep.subr.bf16.mxu0 0
        %1421 = vmatpush2.bf16.xpose.msra.mxu0 0
        %1422 = vmatprep.subr.bf16.mxu0 0
        %1423 = vmatpush2.bf16.xpose.msra.mxu0 0
        %1424 = vmatprep.subr.bf16.mxu0 0
        %1425 = vmatpush2.bf16.xpose.msra.mxu0 0
        %1426 = vmatprep.subr.bf16.mxu0 0
        %1427 = vmatpush2.bf16.xpose.msra.mxu0 0
        %1428 = vmatprep.subr.bf16.mxu0 0
        %1429 = vmatpush2.bf16.xpose.msra.mxu0 0
        %1430 = vmatprep.subr.bf16.mxu0 0
        %1431 = vmatpush2.bf16.xpose.msra.mxu0 0
        %1432 = vmatprep.mubr.bf16.mxu0 0
        %1433 = vmatmul.mubr.bf16.gmra.mxu0 %v1395
        %v1434 = vpop.f32.mrf.mxu0
        %v1435 = vadd.f32 0.0, %v1434
        %v1436 = vpop.f32.mrf.mxu0
        %v1437 = vpop.f32.mrf.mxu0
        %v1438 = vpop.f32.mrf.mxu0
        %1439 = vdwg.mxu0
        %v1441 = vsel %vm1009, %v1379, 0
        %v1444 = vsel %vm1009, %v1387, 0
        %1446 = vmatprep.subr.bf16.mxu0 0
        %1447 = vmatpush1.bf16.xpose.msra.mxu0 0
        %1448 = vmatprep.subr.bf16.mxu0 0
        %1449 = vmatpush1.bf16.xpose.msra.mxu0 0
        %1450 = vmatprep.subr.bf16.mxu0 0
        %1451 = vmatpush1.bf16.xpose.msra.mxu0 0
        %1452 = vmatprep.subr.bf16.mxu0 0
        %1453 = vmatpush1.bf16.xpose.msra.mxu0 0
        %1454 = vmatprep.subr.bf16.mxu0 0
        %1455 = vmatpush1.bf16.xpose.msra.mxu0 0
        %1456 = vmatprep.subr.bf16.mxu0 0
        %1457 = vmatpush1.bf16.xpose.msra.mxu0 0
        %1458 = vmatprep.subr.bf16.mxu0 0
        %1459 = vmatpush1.bf16.xpose.msra.mxu0 0
        %1460 = vmatprep.subr.bf16.mxu0 0
        %1461 = vmatpush1.bf16.xpose.msra.mxu0 %v1444
        %1462 = vmatprep.subr.bf16.mxu0 0
        %1463 = vmatpush2.bf16.xpose.msra.mxu0 0
        %1464 = vmatprep.subr.bf16.mxu0 0
        %1465 = vmatpush2.bf16.xpose.msra.mxu0 0
        %1466 = vmatprep.subr.bf16.mxu0 0
        %1467 = vmatpush2.bf16.xpose.msra.mxu0 0
        %1468 = vmatprep.subr.bf16.mxu0 0
        %1469 = vmatpush2.bf16.xpose.msra.mxu0 0
        %1470 = vmatprep.subr.bf16.mxu0 0
        %1471 = vmatpush2.bf16.xpose.msra.mxu0 0
        %1472 = vmatprep.subr.bf16.mxu0 0
        %1473 = vmatpush2.bf16.xpose.msra.mxu0 0
        %1474 = vmatprep.subr.bf16.mxu0 0
        %1475 = vmatpush2.bf16.xpose.msra.mxu0 0
        %1476 = vmatprep.subr.bf16.mxu0 0
        %1477 = vmatpush2.bf16.xpose.msra.mxu0 0
        %1478 = vmatprep.mubr.bf16.mxu0 0
        %1479 = vmatmul.mubr.bf16.gmra.mxu0 %v1441
        %v1480 = vpop.f32.mrf.mxu0
        %v1481 = vadd.f32 0.0, %v1480
        %v1482 = vpop.f32.mrf.mxu0
        %v1483 = vpop.f32.mrf.mxu0
        %v1484 = vpop.f32.mrf.mxu0
        %1485 = vdwg.mxu0
        %v1487 = vsel %vm1009, %v1380, 0
        %v1490 = vsel %vm1009, %v1388, 0
        %1492 = vmatprep.subr.bf16.mxu0 0
        %1493 = vmatpush1.bf16.xpose.msra.mxu0 0
        %1494 = vmatprep.subr.bf16.mxu0 0
        %1495 = vmatpush1.bf16.xpose.msra.mxu0 0
        %1496 = vmatprep.subr.bf16.mxu0 0
        %1497 = vmatpush1.bf16.xpose.msra.mxu0 0
        %1498 = vmatprep.subr.bf16.mxu0 0
        %1499 = vmatpush1.bf16.xpose.msra.mxu0 0
        %1500 = vmatprep.subr.bf16.mxu0 0
        %1501 = vmatpush1.bf16.xpose.msra.mxu0 0
        %1502 = vmatprep.subr.bf16.mxu0 0
        %1503 = vmatpush1.bf16.xpose.msra.mxu0 0
        %1504 = vmatprep.subr.bf16.mxu0 0
        %1505 = vmatpush1.bf16.xpose.msra.mxu0 0
        %1506 = vmatprep.subr.bf16.mxu0 0
        %1507 = vmatpush1.bf16.xpose.msra.mxu0 %v1490
        %1508 = vmatprep.subr.bf16.mxu0 0
        %1509 = vmatpush2.bf16.xpose.msra.mxu0 0
        %1510 = vmatprep.subr.bf16.mxu0 0
        %1511 = vmatpush2.bf16.xpose.msra.mxu0 0
        %1512 = vmatprep.subr.bf16.mxu0 0
        %1513 = vmatpush2.bf16.xpose.msra.mxu0 0
        %1514 = vmatprep.subr.bf16.mxu0 0
        %1515 = vmatpush2.bf16.xpose.msra.mxu0 0
        %1516 = vmatprep.subr.bf16.mxu0 0
        %1517 = vmatpush2.bf16.xpose.msra.mxu0 0
        %1518 = vmatprep.subr.bf16.mxu0 0
        %1519 = vmatpush2.bf16.xpose.msra.mxu0 0
        %1520 = vmatprep.subr.bf16.mxu0 0
        %1521 = vmatpush2.bf16.xpose.msra.mxu0 0
        %1522 = vmatprep.subr.bf16.mxu0 0
        %1523 = vmatpush2.bf16.xpose.msra.mxu0 0
        %1524 = vmatprep.mubr.bf16.mxu0 0
        %1525 = vmatmul.mubr.bf16.gmra.mxu0 %v1487
        %v1526 = vpop.f32.mrf.mxu0
        %v1527 = vadd.f32 0.0, %v1526
        %v1528 = vpop.f32.mrf.mxu0
        %v1529 = vpop.f32.mrf.mxu0
        %v1530 = vpop.f32.mrf.mxu0
        %1531 = vdwg.mxu0
        %v1533 = vsel %vm1009, %v1381, 0
        %v1536 = vsel %vm1009, %v1389, 0
        %1538 = vmatprep.subr.bf16.mxu0 0
        %1539 = vmatpush1.bf16.xpose.msra.mxu0 0
        %1540 = vmatprep.subr.bf16.mxu0 0
        %1541 = vmatpush1.bf16.xpose.msra.mxu0 0
        %1542 = vmatprep.subr.bf16.mxu0 0
        %1543 = vmatpush1.bf16.xpose.msra.mxu0 0
        %1544 = vmatprep.subr.bf16.mxu0 0
        %1545 = vmatpush1.bf16.xpose.msra.mxu0 0
        %1546 = vmatprep.subr.bf16.mxu0 0
        %1547 = vmatpush1.bf16.xpose.msra.mxu0 0
        %1548 = vmatprep.subr.bf16.mxu0 0
        %1549 = vmatpush1.bf16.xpose.msra.mxu0 0
        %1550 = vmatprep.subr.bf16.mxu0 0
        %1551 = vmatpush1.bf16.xpose.msra.mxu0 0
        %1552 = vmatprep.subr.bf16.mxu0 0
        %1553 = vmatpush1.bf16.xpose.msra.mxu0 %v1536
        %1554 = vmatprep.subr.bf16.mxu0 0
        %1555 = vmatpush2.bf16.xpose.msra.mxu0 0
        %1556 = vmatprep.subr.bf16.mxu0 0
        %1557 = vmatpush2.bf16.xpose.msra.mxu0 0
        %1558 = vmatprep.subr.bf16.mxu0 0
        %1559 = vmatpush2.bf16.xpose.msra.mxu0 0
        %1560 = vmatprep.subr.bf16.mxu0 0
        %1561 = vmatpush2.bf16.xpose.msra.mxu0 0
        %1562 = vmatprep.subr.bf16.mxu0 0
        %1563 = vmatpush2.bf16.xpose.msra.mxu0 0
        %1564 = vmatprep.subr.bf16.mxu0 0
        %1565 = vmatpush2.bf16.xpose.msra.mxu0 0
        %1566 = vmatprep.subr.bf16.mxu0 0
        %1567 = vmatpush2.bf16.xpose.msra.mxu0 0
        %1568 = vmatprep.subr.bf16.mxu0 0
        %1569 = vmatpush2.bf16.xpose.msra.mxu0 0
        %1570 = vmatprep.mubr.bf16.mxu0 0
        %1571 = vmatmul.mubr.bf16.gmra.mxu0 %v1533
        %v1572 = vpop.f32.mrf.mxu0
        %v1573 = vadd.f32 0.0, %v1572
        %v1574 = vpop.f32.mrf.mxu0
        %v1575 = vpop.f32.mrf.mxu0
        %v1576 = vpop.f32.mrf.mxu0
        %1577 = vdwg.mxu0
        %v1579 = vsel %vm1009, %v1382, 0
        %v1582 = vsel %vm1009, %v1390, 0
        %1584 = vmatprep.subr.bf16.mxu0 0
        %1585 = vmatpush1.bf16.xpose.msra.mxu0 0
        %1586 = vmatprep.subr.bf16.mxu0 0
        %1587 = vmatpush1.bf16.xpose.msra.mxu0 0
        %1588 = vmatprep.subr.bf16.mxu0 0
        %1589 = vmatpush1.bf16.xpose.msra.mxu0 0
        %1590 = vmatprep.subr.bf16.mxu0 0
        %1591 = vmatpush1.bf16.xpose.msra.mxu0 0
        %1592 = vmatprep.subr.bf16.mxu0 0
        %1593 = vmatpush1.bf16.xpose.msra.mxu0 0
        %1594 = vmatprep.subr.bf16.mxu0 0
        %1595 = vmatpush1.bf16.xpose.msra.mxu0 0
        %1596 = vmatprep.subr.bf16.mxu0 0
        %1597 = vmatpush1.bf16.xpose.msra.mxu0 0
        %1598 = vmatprep.subr.bf16.mxu0 0
        %1599 = vmatpush1.bf16.xpose.msra.mxu0 %v1582
        %1600 = vmatprep.subr.bf16.mxu0 0
        %1601 = vmatpush2.bf16.xpose.msra.mxu0 0
        %1602 = vmatprep.subr.bf16.mxu0 0
        %1603 = vmatpush2.bf16.xpose.msra.mxu0 0
        %1604 = vmatprep.subr.bf16.mxu0 0
        %1605 = vmatpush2.bf16.xpose.msra.mxu0 0
        %1606 = vmatprep.subr.bf16.mxu0 0
        %1607 = vmatpush2.bf16.xpose.msra.mxu0 0
        %1608 = vmatprep.subr.bf16.mxu0 0
        %1609 = vmatpush2.bf16.xpose.msra.mxu0 0
        %1610 = vmatprep.subr.bf16.mxu0 0
        %1611 = vmatpush2.bf16.xpose.msra.mxu0 0
        %1612 = vmatprep.subr.bf16.mxu0 0
        %1613 = vmatpush2.bf16.xpose.msra.mxu0 0
        %1614 = vmatprep.subr.bf16.mxu0 0
        %1615 = vmatpush2.bf16.xpose.msra.mxu0 0
        %1616 = vmatprep.mubr.bf16.mxu0 0
        %1617 = vmatmul.mubr.bf16.gmra.mxu0 %v1579
        %v1618 = vpop.f32.mrf.mxu0
        %v1619 = vadd.f32 0.0, %v1618
        %v1620 = vpop.f32.mrf.mxu0
        %v1621 = vpop.f32.mrf.mxu0
        %v1622 = vpop.f32.mrf.mxu0
        %1623 = vdwg.mxu0
        %v1625 = vsel %vm1009, %v1383, 0
        %v1628 = vsel %vm1009, %v1391, 0
        %1630 = vmatprep.subr.bf16.mxu0 0
        %1631 = vmatpush1.bf16.xpose.msra.mxu0 0
        %1632 = vmatprep.subr.bf16.mxu0 0
        %1633 = vmatpush1.bf16.xpose.msra.mxu0 0
        %1634 = vmatprep.subr.bf16.mxu0 0
        %1635 = vmatpush1.bf16.xpose.msra.mxu0 0
        %1636 = vmatprep.subr.bf16.mxu0 0
        %1637 = vmatpush1.bf16.xpose.msra.mxu0 0
        %1638 = vmatprep.subr.bf16.mxu0 0
        %1639 = vmatpush1.bf16.xpose.msra.mxu0 0
        %1640 = vmatprep.subr.bf16.mxu0 0
        %1641 = vmatpush1.bf16.xpose.msra.mxu0 0
        %1642 = vmatprep.subr.bf16.mxu0 0
        %1643 = vmatpush1.bf16.xpose.msra.mxu0 0
        %1644 = vmatprep.subr.bf16.mxu0 0
        %1645 = vmatpush1.bf16.xpose.msra.mxu0 %v1628
        %1646 = vmatprep.subr.bf16.mxu0 0
        %1647 = vmatpush2.bf16.xpose.msra.mxu0 0
        %1648 = vmatprep.subr.bf16.mxu0 0
        %1649 = vmatpush2.bf16.xpose.msra.mxu0 0
        %1650 = vmatprep.subr.bf16.mxu0 0
        %1651 = vmatpush2.bf16.xpose.msra.mxu0 0
        %1652 = vmatprep.subr.bf16.mxu0 0
        %1653 = vmatpush2.bf16.xpose.msra.mxu0 0
        %1654 = vmatprep.subr.bf16.mxu0 0
        %1655 = vmatpush2.bf16.xpose.msra.mxu0 0
        %1656 = vmatprep.subr.bf16.mxu0 0
        %1657 = vmatpush2.bf16.xpose.msra.mxu0 0
        %1658 = vmatprep.subr.bf16.mxu0 0
        %1659 = vmatpush2.bf16.xpose.msra.mxu0 0
        %1660 = vmatprep.subr.bf16.mxu0 0
        %1661 = vmatpush2.bf16.xpose.msra.mxu0 0
        %1662 = vmatprep.mubr.bf16.mxu0 0
        %1663 = vmatmul.mubr.bf16.gmra.mxu0 %v1625
        %v1664 = vpop.f32.mrf.mxu0
        %v1665 = vadd.f32 0.0, %v1664
        %v1666 = vpop.f32.mrf.mxu0
        %v1667 = vpop.f32.mrf.mxu0
        %v1668 = vpop.f32.mrf.mxu0
        %1669 = vdwg.mxu0
        %v1671 = vsel %vm1009, %v1384, 0
        %v1674 = vsel %vm1009, %v1392, 0
        %1676 = vmatprep.subr.bf16.mxu0 0
        %1677 = vmatpush1.bf16.xpose.msra.mxu0 0
        %1678 = vmatprep.subr.bf16.mxu0 0
        %1679 = vmatpush1.bf16.xpose.msra.mxu0 0
        %1680 = vmatprep.subr.bf16.mxu0 0
        %1681 = vmatpush1.bf16.xpose.msra.mxu0 0
        %1682 = vmatprep.subr.bf16.mxu0 0
        %1683 = vmatpush1.bf16.xpose.msra.mxu0 0
        %1684 = vmatprep.subr.bf16.mxu0 0
        %1685 = vmatpush1.bf16.xpose.msra.mxu0 0
        %1686 = vmatprep.subr.bf16.mxu0 0
        %1687 = vmatpush1.bf16.xpose.msra.mxu0 0
        %1688 = vmatprep.subr.bf16.mxu0 0
        %1689 = vmatpush1.bf16.xpose.msra.mxu0 0
        %1690 = vmatprep.subr.bf16.mxu0 0
        %1691 = vmatpush1.bf16.xpose.msra.mxu0 %v1674
        %1692 = vmatprep.subr.bf16.mxu0 0
        %1693 = vmatpush2.bf16.xpose.msra.mxu0 0
        %1694 = vmatprep.subr.bf16.mxu0 0
        %1695 = vmatpush2.bf16.xpose.msra.mxu0 0
        %1696 = vmatprep.subr.bf16.mxu0 0
        %1697 = vmatpush2.bf16.xpose.msra.mxu0 0
        %1698 = vmatprep.subr.bf16.mxu0 0
        %1699 = vmatpush2.bf16.xpose.msra.mxu0 0
        %1700 = vmatprep.subr.bf16.mxu0 0
        %1701 = vmatpush2.bf16.xpose.msra.mxu0 0
        %1702 = vmatprep.subr.bf16.mxu0 0
        %1703 = vmatpush2.bf16.xpose.msra.mxu0 0
        %1704 = vmatprep.subr.bf16.mxu0 0
        %1705 = vmatpush2.bf16.xpose.msra.mxu0 0
        %1706 = vmatprep.subr.bf16.mxu0 0
        %1707 = vmatpush2.bf16.xpose.msra.mxu0 0
        %1708 = vmatprep.mubr.bf16.mxu0 0
        %1709 = vmatmul.mubr.bf16.gmra.mxu0 %v1671
        %v1710 = vpop.f32.mrf.mxu0
        %v1711 = vadd.f32 0.0, %v1710
        %v1712 = vpop.f32.mrf.mxu0
        %v1713 = vpop.f32.mrf.mxu0
        %v1714 = vpop.f32.mrf.mxu0
        %1715 = vdwg.mxu0
        %v1717 = vsel %vm1009, %v1385, 0
        %v1720 = vsel %vm1009, %v1393, 0
        %1722 = vmatprep.subr.bf16.mxu0 0
        %1723 = vmatpush1.bf16.xpose.msra.mxu0 0
        %1724 = vmatprep.subr.bf16.mxu0 0
        %1725 = vmatpush1.bf16.xpose.msra.mxu0 0
        %1726 = vmatprep.subr.bf16.mxu0 0
        %1727 = vmatpush1.bf16.xpose.msra.mxu0 0
        %1728 = vmatprep.subr.bf16.mxu0 0
        %1729 = vmatpush1.bf16.xpose.msra.mxu0 0
        %1730 = vmatprep.subr.bf16.mxu0 0
        %1731 = vmatpush1.bf16.xpose.msra.mxu0 0
        %1732 = vmatprep.subr.bf16.mxu0 0
        %1733 = vmatpush1.bf16.xpose.msra.mxu0 0
        %1734 = vmatprep.subr.bf16.mxu0 0
        %1735 = vmatpush1.bf16.xpose.msra.mxu0 0
        %1736 = vmatprep.subr.bf16.mxu0 0
        %1737 = vmatpush1.bf16.xpose.msra.mxu0 %v1720
        %1738 = vmatprep.subr.bf16.mxu0 0
        %1739 = vmatpush2.bf16.xpose.msra.mxu0 0
        %1740 = vmatprep.subr.bf16.mxu0 0
        %1741 = vmatpush2.bf16.xpose.msra.mxu0 0
        %1742 = vmatprep.subr.bf16.mxu0 0
        %1743 = vmatpush2.bf16.xpose.msra.mxu0 0
        %1744 = vmatprep.subr.bf16.mxu0 0
        %1745 = vmatpush2.bf16.xpose.msra.mxu0 0
        %1746 = vmatprep.subr.bf16.mxu0 0
        %1747 = vmatpush2.bf16.xpose.msra.mxu0 0
        %1748 = vmatprep.subr.bf16.mxu0 0
        %1749 = vmatpush2.bf16.xpose.msra.mxu0 0
        %1750 = vmatprep.subr.bf16.mxu0 0
        %1751 = vmatpush2.bf16.xpose.msra.mxu0 0
        %1752 = vmatprep.subr.bf16.mxu0 0
        %1753 = vmatpush2.bf16.xpose.msra.mxu0 0
        %1754 = vmatprep.mubr.bf16.mxu0 0
        %1755 = vmatmul.mubr.bf16.gmra.mxu0 %v1717
        %v1756 = vpop.f32.mrf.mxu0
        %v1757 = vadd.f32 0.0, %v1756
        %v1758 = vpop.f32.mrf.mxu0
        %v1759 = vpop.f32.mrf.mxu0
        %v1760 = vpop.f32.mrf.mxu0
        %1761 = vdwg.mxu0
        %vm1762 = vcmask 64512
        %v1763 = vsel %vm1762, %v1435, -inf
        %1764 = vmax.xlane.f32.xlu0 %v1763
        %v1765 = vpop.xlane.xlu0 %1764
        %v1766 = vsel %vm1762, %v1481, -inf
        %1767 = vmax.xlane.f32.xlu0 %v1766
        %v1768 = vpop.xlane.xlu0 %1767
        %v1769 = vsel %vm1762, %v1527, -inf
        %1770 = vmax.xlane.f32.xlu0 %v1769
        %v1771 = vpop.xlane.xlu0 %1770
        %v1772 = vsel %vm1762, %v1573, -inf
        %1773 = vmax.xlane.f32.xlu0 %v1772
        %v1774 = vpop.xlane.xlu0 %1773
        %v1775 = vsel %vm1762, %v1619, -inf
        %1776 = vmax.xlane.f32.xlu0 %v1775
        %v1777 = vpop.xlane.xlu0 %1776
        %v1778 = vsel %vm1762, %v1665, -inf
        %1779 = vmax.xlane.f32.xlu0 %v1778
        %v1780 = vpop.xlane.xlu0 %1779
        %v1781 = vsel %vm1762, %v1711, -inf
        %1782 = vmax.xlane.f32.xlu0 %v1781
        %v1783 = vpop.xlane.xlu0 %1782
        %v1784 = vsel %vm1762, %v1757, -inf
        %1785 = vmax.xlane.f32.xlu0 %v1784
        %v1786 = vpop.xlane.xlu0 %1785
        %v1787 = vsel %vm1762, %v1051, -inf
        %1788 = vmax.xlane.f32.xlu0 %v1787
        %v1789 = vpop.xlane.xlu0 %1788
        %v1790 = vsel %vm1762, %v1097, -inf
        %1791 = vmax.xlane.f32.xlu0 %v1790
        %v1792 = vpop.xlane.xlu0 %1791
        %v1793 = vsel %vm1762, %v1143, -inf
        %1794 = vmax.xlane.f32.xlu0 %v1793
        %v1795 = vpop.xlane.xlu0 %1794
        %v1796 = vsel %vm1762, %v1189, -inf
        %1797 = vmax.xlane.f32.xlu0 %v1796
        %v1798 = vpop.xlane.xlu0 %1797
        %v1799 = vsel %vm1762, %v1235, -inf
        %1800 = vmax.xlane.f32.xlu0 %v1799
        %v1801 = vpop.xlane.xlu0 %1800
        %v1802 = vsel %vm1762, %v1281, -inf
        %1803 = vmax.xlane.f32.xlu0 %v1802
        %v1804 = vpop.xlane.xlu0 %1803
        %v1805 = vsel %vm1762, %v1327, -inf
        %1806 = vmax.xlane.f32.xlu0 %v1805
        %v1807 = vpop.xlane.xlu0 %1806
        %v1808 = vsel %vm1762, %v1373, -inf
        %1809 = vmax.xlane.f32.xlu0 %v1808
        %v1810 = vpop.xlane.xlu0 %1809
        %v1819 = vlaneseq
        %v1820 = vand.u32 %v1819, 127
        %v1821 = vlaneseq
        %v1822 = vshrl.u32 %v1821, 7
        %v1823 = vsub.s32 %v1820, %v1822
        %v1824 = vrot.slane %v1765, %v1823
        %v1825 = vlaneseq
        %v1826 = vshrl.u32 %v1825, 7
        %v1827 = vsub.s32 %v1820, %v1826
        %v1828 = vrot.slane %v1768, %v1827
        %v1829 = vlaneseq
        %v1830 = vshrl.u32 %v1829, 7
        %v1831 = vsub.s32 %v1820, %v1830
        %v1832 = vrot.slane %v1771, %v1831
        %v1833 = vlaneseq
        %v1834 = vshrl.u32 %v1833, 7
        %v1835 = vsub.s32 %v1820, %v1834
        %v1836 = vrot.slane %v1774, %v1835
        %v1837 = vlaneseq
        %v1838 = vshrl.u32 %v1837, 7
        %v1839 = vsub.s32 %v1820, %v1838
        %v1840 = vrot.slane %v1777, %v1839
        %v1841 = vlaneseq
        %v1842 = vshrl.u32 %v1841, 7
        %v1843 = vsub.s32 %v1820, %v1842
        %v1844 = vrot.slane %v1780, %v1843
        %v1845 = vlaneseq
        %v1846 = vshrl.u32 %v1845, 7
        %v1847 = vsub.s32 %v1820, %v1846
        %v1848 = vrot.slane %v1783, %v1847
        %v1849 = vlaneseq
        %v1850 = vshrl.u32 %v1849, 7
        %v1851 = vsub.s32 %v1820, %v1850
        %v1852 = vrot.slane %v1786, %v1851
        %vm1853 = vcmask 1041409
        %v1854 = vsel %vm1853, %v1828, %v1824
        %vm1855 = vcmask 1042434
        %v1856 = vsel %vm1855, %v1832, %v1854
        %vm1857 = vcmask 1043459
        %v1858 = vsel %vm1857, %v1836, %v1856
        %vm1859 = vcmask 1044484
        %v1860 = vsel %vm1859, %v1840, %v1858
        %vm1861 = vcmask 1045509
        %v1862 = vsel %vm1861, %v1844, %v1860
        %vm1863 = vcmask 1046534
        %v1864 = vsel %vm1863, %v1848, %v1862
        %vm1865 = vcmask 1047559
        %v1866 = vsel %vm1865, %v1852, %v1864
        %1868 = vxpose.xlu0.b32.start [1/16] %v1866, 128
        %1869 = vxpose.xlu0.b32.cont [2/16] 0.0, 128
        %1870 = vxpose.xlu0.b32.cont [3/16] 0.0, 128
        %1871 = vxpose.xlu0.b32.cont [4/16] 0.0, 128
        %1872 = vxpose.xlu0.b32.cont [5/16] 0.0, 128
        %1873 = vxpose.xlu0.b32.cont [6/16] 0.0, 128
        %1874 = vxpose.xlu0.b32.cont [7/16] 0.0, 128
        %1875 = vxpose.xlu0.b32.cont [8/16] 0.0, 128
        %1876 = vxpose.xlu0.b32.cont [9/16] 0.0, 128
        %1877 = vxpose.xlu0.b32.cont [10/16] 0.0, 128
        %1878 = vxpose.xlu0.b32.cont [11/16] 0.0, 128
        %1879 = vxpose.xlu0.b32.cont [12/16] 0.0, 128
        %1880 = vxpose.xlu0.b32.cont [13/16] 0.0, 128
        %1881 = vxpose.xlu0.b32.cont [14/16] 0.0, 128
        %1882 = vxpose.xlu0.b32.cont [15/16] 0.0, 128
        %1883 = vxpose.xlu0.b32.end [16/16] 0.0, 128
        %v1884 = vpop.trf.xlu0
        %v1885 = vpop.trf.xlu0
        %v1886 = vpop.trf.xlu0
        %v1887 = vpop.trf.xlu0
        %v1888 = vpop.trf.xlu0
        %v1889 = vpop.trf.xlu0
        %v1890 = vpop.trf.xlu0
        %v1891 = vpop.trf.xlu0
        %v1892 = vpop.trf.xlu0
        %v1893 = vpop.trf.xlu0
        %v1894 = vpop.trf.xlu0
        %v1895 = vpop.trf.xlu0
        %v1896 = vpop.trf.xlu0
        %v1897 = vpop.trf.xlu0
        %v1898 = vpop.trf.xlu0
        %v1899 = vpop.trf.xlu0
        %v1908 = vlaneseq
        %v1909 = vshrl.u32 %v1908, 7
        %v1910 = vsub.s32 %v1820, %v1909
        %v1911 = vrot.slane %v1789, %v1910
        %v1912 = vlaneseq
        %v1913 = vshrl.u32 %v1912, 7
        %v1914 = vsub.s32 %v1820, %v1913
        %v1915 = vrot.slane %v1792, %v1914
        %v1916 = vlaneseq
        %v1917 = vshrl.u32 %v1916, 7
        %v1918 = vsub.s32 %v1820, %v1917
        %v1919 = vrot.slane %v1795, %v1918
        %v1920 = vlaneseq
        %v1921 = vshrl.u32 %v1920, 7
        %v1922 = vsub.s32 %v1820, %v1921
        %v1923 = vrot.slane %v1798, %v1922
        %v1924 = vlaneseq
        %v1925 = vshrl.u32 %v1924, 7
        %v1926 = vsub.s32 %v1820, %v1925
        %v1927 = vrot.slane %v1801, %v1926
        %v1928 = vlaneseq
        %v1929 = vshrl.u32 %v1928, 7
        %v1930 = vsub.s32 %v1820, %v1929
        %v1931 = vrot.slane %v1804, %v1930
        %v1932 = vlaneseq
        %v1933 = vshrl.u32 %v1932, 7
        %v1934 = vsub.s32 %v1820, %v1933
        %v1935 = vrot.slane %v1807, %v1934
        %v1936 = vlaneseq
        %v1937 = vshrl.u32 %v1936, 7
        %v1938 = vsub.s32 %v1820, %v1937
        %v1939 = vrot.slane %v1810, %v1938
        %v1940 = vsel %vm1853, %v1915, %v1911
        %v1941 = vsel %vm1855, %v1919, %v1940
        %v1942 = vsel %vm1857, %v1923, %v1941
        %v1943 = vsel %vm1859, %v1927, %v1942
        %v1944 = vsel %vm1861, %v1931, %v1943
        %v1945 = vsel %vm1863, %v1935, %v1944
        %v1946 = vsel %vm1865, %v1939, %v1945
        %v1948 = vmax.f32 %v1884, %v1946
        %v1949 = vlaneseq
        %v1950 = vshrl.u32 %v1949, 7
        %v1951 = vsub.s32 0, %v1950
        %v1952 = vrot.slane %v1948, %v1951
        %1954 = vbcast.lane.b32.xlu0 %v1952, 256
        %v1955 = vpop.permute.xlu0 %1954
        %v1956 = vlaneseq
        %v1957 = vshrl.u32 %v1956, 7
        %v1958 = vsub.s32 1, %v1957
        %v1959 = vrot.slane %v1948, %v1958
        %1961 = vbcast.lane.b32.xlu0 %v1959, 256
        %v1962 = vpop.permute.xlu0 %1961
        %v1963 = vlaneseq
        %v1964 = vshrl.u32 %v1963, 7
        %v1965 = vsub.s32 2, %v1964
        %v1966 = vrot.slane %v1948, %v1965
        %1968 = vbcast.lane.b32.xlu0 %v1966, 256
        %v1969 = vpop.permute.xlu0 %1968
        %v1970 = vlaneseq
        %v1971 = vshrl.u32 %v1970, 7
        %v1972 = vsub.s32 3, %v1971
        %v1973 = vrot.slane %v1948, %v1972
        %1975 = vbcast.lane.b32.xlu0 %v1973, 256
        %v1976 = vpop.permute.xlu0 %1975
        %v1977 = vlaneseq
        %v1978 = vshrl.u32 %v1977, 7
        %v1979 = vsub.s32 4, %v1978
        %v1980 = vrot.slane %v1948, %v1979
        %1982 = vbcast.lane.b32.xlu0 %v1980, 256
        %v1983 = vpop.permute.xlu0 %1982
        %v1984 = vlaneseq
        %v1985 = vshrl.u32 %v1984, 7
        %v1986 = vsub.s32 5, %v1985
        %v1987 = vrot.slane %v1948, %v1986
        %1989 = vbcast.lane.b32.xlu0 %v1987, 256
        %v1990 = vpop.permute.xlu0 %1989
        %v1991 = vlaneseq
        %v1992 = vshrl.u32 %v1991, 7
        %v1993 = vsub.s32 6, %v1992
        %v1994 = vrot.slane %v1948, %v1993
        %1996 = vbcast.lane.b32.xlu0 %v1994, 256
        %v1997 = vpop.permute.xlu0 %1996
        %v1998 = vlaneseq
        %v1999 = vshrl.u32 %v1998, 7
        %v2000 = vsub.s32 7, %v1999
        %v2001 = vrot.slane %v1948, %v2000
        %2003 = vbcast.lane.b32.xlu0 %v2001, 256
        %v2004 = vpop.permute.xlu0 %2003
        %v2005 = vsub.f32 %v1051, %v1955
        %v2006 = vsub.f32 %v1097, %v1962
        %v2007 = vsub.f32 %v1143, %v1969
        %v2008 = vsub.f32 %v1189, %v1976
        %v2009 = vsub.f32 %v1235, %v1983
        %v2010 = vsub.f32 %v1281, %v1990
        %v2011 = vsub.f32 %v1327, %v1997
        %v2012 = vsub.f32 %v1373, %v2004
        %v2013 = vmul.f32 %v2005, 1.442695
        %v2014 = vpow.pop %v2013
        %v2015 = vmul.f32 %v2006, 1.442695
        %v2016 = vpow.pop %v2015
        %v2017 = vmul.f32 %v2007, 1.442695
        %v2018 = vpow.pop %v2017
        %v2019 = vmul.f32 %v2008, 1.442695
        %v2020 = vpow.pop %v2019
        %v2021 = vmul.f32 %v2009, 1.442695
        %v2022 = vpow.pop %v2021
        %v2023 = vmul.f32 %v2010, 1.442695
        %v2024 = vpow.pop %v2023
        %v2025 = vmul.f32 %v2011, 1.442695
        %v2026 = vpow.pop %v2025
        %v2027 = vmul.f32 %v2012, 1.442695
        %v2028 = vpow.pop %v2027
        %2029 = vxpose.xlu0.b32.start [1/16] %v1948, 128
        %2030 = vxpose.xlu0.b32.cont [2/16] 0.0, 128
        %2031 = vxpose.xlu0.b32.cont [3/16] 0.0, 128
        %2032 = vxpose.xlu0.b32.cont [4/16] 0.0, 128
        %2033 = vxpose.xlu0.b32.cont [5/16] 0.0, 128
        %2034 = vxpose.xlu0.b32.cont [6/16] 0.0, 128
        %2035 = vxpose.xlu0.b32.cont [7/16] 0.0, 128
        %2036 = vxpose.xlu0.b32.cont [8/16] 0.0, 128
        %2037 = vxpose.xlu0.b32.cont [9/16] 0.0, 128
        %2038 = vxpose.xlu0.b32.cont [10/16] 0.0, 128
        %2039 = vxpose.xlu0.b32.cont [11/16] 0.0, 128
        %2040 = vxpose.xlu0.b32.cont [12/16] 0.0, 128
        %2041 = vxpose.xlu0.b32.cont [13/16] 0.0, 128
        %2042 = vxpose.xlu0.b32.cont [14/16] 0.0, 128
        %2043 = vxpose.xlu0.b32.cont [15/16] 0.0, 128
        %2044 = vxpose.xlu0.b32.end [16/16] 0.0, 128
        %v2045 = vpop.trf.xlu0
        %v2046 = vpop.trf.xlu0
        %v2047 = vpop.trf.xlu0
        %v2048 = vpop.trf.xlu0
        %v2049 = vpop.trf.xlu0
        %v2050 = vpop.trf.xlu0
        %v2051 = vpop.trf.xlu0
        %v2052 = vpop.trf.xlu0
        %v2053 = vpop.trf.xlu0
        %v2054 = vpop.trf.xlu0
        %v2055 = vpop.trf.xlu0
        %v2056 = vpop.trf.xlu0
        %v2057 = vpop.trf.xlu0
        %v2058 = vpop.trf.xlu0
        %v2059 = vpop.trf.xlu0
        %v2060 = vpop.trf.xlu0
        %v2061 = vlaneseq
        %v2062 = vshrl.u32 %v2061, 7
        %v2063 = vsub.s32 0, %v2062
        %v2064 = vrot.slane %v2045, %v2063
        %2066 = vbcast.lane.b32.xlu0 %v2064, 256
        %v2067 = vpop.permute.xlu0 %2066
        %v2068 = vlaneseq
        %v2069 = vshrl.u32 %v2068, 7
        %v2070 = vsub.s32 1, %v2069
        %v2071 = vrot.slane %v2045, %v2070
        %2073 = vbcast.lane.b32.xlu0 %v2071, 256
        %v2074 = vpop.permute.xlu0 %2073
        %v2075 = vlaneseq
        %v2076 = vshrl.u32 %v2075, 7
        %v2077 = vsub.s32 2, %v2076
        %v2078 = vrot.slane %v2045, %v2077
        %2080 = vbcast.lane.b32.xlu0 %v2078, 256
        %v2081 = vpop.permute.xlu0 %2080
        %v2082 = vlaneseq
        %v2083 = vshrl.u32 %v2082, 7
        %v2084 = vsub.s32 3, %v2083
        %v2085 = vrot.slane %v2045, %v2084
        %2087 = vbcast.lane.b32.xlu0 %v2085, 256
        %v2088 = vpop.permute.xlu0 %2087
        %v2089 = vlaneseq
        %v2090 = vshrl.u32 %v2089, 7
        %v2091 = vsub.s32 4, %v2090
        %v2092 = vrot.slane %v2045, %v2091
        %2094 = vbcast.lane.b32.xlu0 %v2092, 256
        %v2095 = vpop.permute.xlu0 %2094
        %v2096 = vlaneseq
        %v2097 = vshrl.u32 %v2096, 7
        %v2098 = vsub.s32 5, %v2097
        %v2099 = vrot.slane %v2045, %v2098
        %2101 = vbcast.lane.b32.xlu0 %v2099, 256
        %v2102 = vpop.permute.xlu0 %2101
        %v2103 = vlaneseq
        %v2104 = vshrl.u32 %v2103, 7
        %v2105 = vsub.s32 6, %v2104
        %v2106 = vrot.slane %v2045, %v2105
        %2108 = vbcast.lane.b32.xlu0 %v2106, 256
        %v2109 = vpop.permute.xlu0 %2108
        %v2110 = vlaneseq
        %v2111 = vshrl.u32 %v2110, 7
        %v2112 = vsub.s32 7, %v2111
        %v2113 = vrot.slane %v2045, %v2112
        %2115 = vbcast.lane.b32.xlu0 %v2113, 256
        %v2116 = vpop.permute.xlu0 %2115
        %v2117 = vsub.f32 %v1435, %v2067
        %v2118 = vsub.f32 %v1481, %v2074
        %v2119 = vsub.f32 %v1527, %v2081
        %v2120 = vsub.f32 %v1573, %v2088
        %v2121 = vsub.f32 %v1619, %v2095
        %v2122 = vsub.f32 %v1665, %v2102
        %v2123 = vsub.f32 %v1711, %v2109
        %v2124 = vsub.f32 %v1757, %v2116
        %v2125 = vmul.f32 %v2117, 1.442695
        %v2126 = vpow.pop %v2125
        %v2127 = vmul.f32 %v2118, 1.442695
        %v2128 = vpow.pop %v2127
        %v2129 = vmul.f32 %v2119, 1.442695
        %v2130 = vpow.pop %v2129
        %v2131 = vmul.f32 %v2120, 1.442695
        %v2132 = vpow.pop %v2131
        %v2133 = vmul.f32 %v2121, 1.442695
        %v2134 = vpow.pop %v2133
        %v2135 = vmul.f32 %v2122, 1.442695
        %v2136 = vpow.pop %v2135
        %v2137 = vmul.f32 %v2123, 1.442695
        %v2138 = vpow.pop %v2137
        %v2139 = vmul.f32 %v2124, 1.442695
        %v2140 = vpow.pop %v2139
        %v2141 = vlaneseq
        %v2142 = vshrl.u32 %v2141, 7
        %vm2143 = vcmp.eq.s32.totalorder %v2142, %v1820
        %v2144 = vsel %vm2143, 0.0, 1.0
        %v2145 = vmul.f32 %v2126, %v2144
        %v2146 = vmul.f32 %v2128, %v2144
        %v2147 = vmul.f32 %v2130, %v2144
        %v2148 = vmul.f32 %v2132, %v2144
        %v2149 = vmul.f32 %v2134, %v2144
        %v2150 = vmul.f32 %v2136, %v2144
        %v2151 = vmul.f32 %v2138, %v2144
        %v2152 = vmul.f32 %v2140, %v2144
        %v2153 = vsel %vm1762, %v2145, 0.0
        %2154 = vadd.xlane.f32.xlu0 %v2153
        %v2155 = vpop.xlane.xlu0 %2154
        %v2156 = vsel %vm1762, %v2146, 0.0
        %2157 = vadd.xlane.f32.xlu0 %v2156
        %v2158 = vpop.xlane.xlu0 %2157
        %v2159 = vsel %vm1762, %v2147, 0.0
        %2160 = vadd.xlane.f32.xlu0 %v2159
        %v2161 = vpop.xlane.xlu0 %2160
        %v2162 = vsel %vm1762, %v2148, 0.0
        %2163 = vadd.xlane.f32.xlu0 %v2162
        %v2164 = vpop.xlane.xlu0 %2163
        %v2165 = vsel %vm1762, %v2149, 0.0
        %2166 = vadd.xlane.f32.xlu0 %v2165
        %v2167 = vpop.xlane.xlu0 %2166
        %v2168 = vsel %vm1762, %v2150, 0.0
        %2169 = vadd.xlane.f32.xlu0 %v2168
        %v2170 = vpop.xlane.xlu0 %2169
        %v2171 = vsel %vm1762, %v2151, 0.0
        %2172 = vadd.xlane.f32.xlu0 %v2171
        %v2173 = vpop.xlane.xlu0 %2172
        %v2174 = vsel %vm1762, %v2152, 0.0
        %2175 = vadd.xlane.f32.xlu0 %v2174
        %v2176 = vpop.xlane.xlu0 %2175
        %v2185 = vlaneseq
        %v2186 = vshrl.u32 %v2185, 7
        %v2187 = vsub.s32 %v1820, %v2186
        %v2188 = vrot.slane %v2155, %v2187
        %v2189 = vlaneseq
        %v2190 = vshrl.u32 %v2189, 7
        %v2191 = vsub.s32 %v1820, %v2190
        %v2192 = vrot.slane %v2158, %v2191
        %v2193 = vlaneseq
        %v2194 = vshrl.u32 %v2193, 7
        %v2195 = vsub.s32 %v1820, %v2194
        %v2196 = vrot.slane %v2161, %v2195
        %v2197 = vlaneseq
        %v2198 = vshrl.u32 %v2197, 7
        %v2199 = vsub.s32 %v1820, %v2198
        %v2200 = vrot.slane %v2164, %v2199
        %v2201 = vlaneseq
        %v2202 = vshrl.u32 %v2201, 7
        %v2203 = vsub.s32 %v1820, %v2202
        %v2204 = vrot.slane %v2167, %v2203
        %v2205 = vlaneseq
        %v2206 = vshrl.u32 %v2205, 7
        %v2207 = vsub.s32 %v1820, %v2206
        %v2208 = vrot.slane %v2170, %v2207
        %v2209 = vlaneseq
        %v2210 = vshrl.u32 %v2209, 7
        %v2211 = vsub.s32 %v1820, %v2210
        %v2212 = vrot.slane %v2173, %v2211
        %v2213 = vlaneseq
        %v2214 = vshrl.u32 %v2213, 7
        %v2215 = vsub.s32 %v1820, %v2214
        %v2216 = vrot.slane %v2176, %v2215
        %v2217 = vsel %vm1853, %v2192, %v2188
        %v2218 = vsel %vm1855, %v2196, %v2217
        %v2219 = vsel %vm1857, %v2200, %v2218
        %v2220 = vsel %vm1859, %v2204, %v2219
        %v2221 = vsel %vm1861, %v2208, %v2220
        %v2222 = vsel %vm1863, %v2212, %v2221
        %v2223 = vsel %vm1865, %v2216, %v2222
        %2225 = vxpose.xlu0.b32.start [1/16] %v2223, 128
        %2226 = vxpose.xlu0.b32.cont [2/16] 0.0, 128
        %2227 = vxpose.xlu0.b32.cont [3/16] 0.0, 128
        %2228 = vxpose.xlu0.b32.cont [4/16] 0.0, 128
        %2229 = vxpose.xlu0.b32.cont [5/16] 0.0, 128
        %2230 = vxpose.xlu0.b32.cont [6/16] 0.0, 128
        %2231 = vxpose.xlu0.b32.cont [7/16] 0.0, 128
        %2232 = vxpose.xlu0.b32.cont [8/16] 0.0, 128
        %2233 = vxpose.xlu0.b32.cont [9/16] 0.0, 128
        %2234 = vxpose.xlu0.b32.cont [10/16] 0.0, 128
        %2235 = vxpose.xlu0.b32.cont [11/16] 0.0, 128
        %2236 = vxpose.xlu0.b32.cont [12/16] 0.0, 128
        %2237 = vxpose.xlu0.b32.cont [13/16] 0.0, 128
        %2238 = vxpose.xlu0.b32.cont [14/16] 0.0, 128
        %2239 = vxpose.xlu0.b32.cont [15/16] 0.0, 128
        %2240 = vxpose.xlu0.b32.end [16/16] 0.0, 128
        %v2241 = vpop.trf.xlu0
        %v2242 = vpop.trf.xlu0
        %v2243 = vpop.trf.xlu0
        %v2244 = vpop.trf.xlu0
        %v2245 = vpop.trf.xlu0
        %v2246 = vpop.trf.xlu0
        %v2247 = vpop.trf.xlu0
        %v2248 = vpop.trf.xlu0
        %v2249 = vpop.trf.xlu0
        %v2250 = vpop.trf.xlu0
        %v2251 = vpop.trf.xlu0
        %v2252 = vpop.trf.xlu0
        %v2253 = vpop.trf.xlu0
        %v2254 = vpop.trf.xlu0
        %v2255 = vpop.trf.xlu0
        %v2256 = vpop.trf.xlu0
        %v2257 = vsel %vm1762, %v2014, 0.0
        %2258 = vadd.xlane.f32.xlu0 %v2257
        %v2259 = vpop.xlane.xlu0 %2258
        %v2260 = vsel %vm1762, %v2016, 0.0
        %2261 = vadd.xlane.f32.xlu0 %v2260
        %v2262 = vpop.xlane.xlu0 %2261
        %v2263 = vsel %vm1762, %v2018, 0.0
        %2264 = vadd.xlane.f32.xlu0 %v2263
        %v2265 = vpop.xlane.xlu0 %2264
        %v2266 = vsel %vm1762, %v2020, 0.0
        %2267 = vadd.xlane.f32.xlu0 %v2266
        %v2268 = vpop.xlane.xlu0 %2267
        %v2269 = vsel %vm1762, %v2022, 0.0
        %2270 = vadd.xlane.f32.xlu0 %v2269
        %v2271 = vpop.xlane.xlu0 %2270
        %v2272 = vsel %vm1762, %v2024, 0.0
        %2273 = vadd.xlane.f32.xlu0 %v2272
        %v2274 = vpop.xlane.xlu0 %2273
        %v2275 = vsel %vm1762, %v2026, 0.0
        %2276 = vadd.xlane.f32.xlu0 %v2275
        %v2277 = vpop.xlane.xlu0 %2276
        %v2278 = vsel %vm1762, %v2028, 0.0
        %2279 = vadd.xlane.f32.xlu0 %v2278
        %v2280 = vpop.xlane.xlu0 %2279
        %v2289 = vlaneseq
        %v2290 = vshrl.u32 %v2289, 7
        %v2291 = vsub.s32 %v1820, %v2290
        %v2292 = vrot.slane %v2259, %v2291
        %v2293 = vlaneseq
        %v2294 = vshrl.u32 %v2293, 7
        %v2295 = vsub.s32 %v1820, %v2294
        %v2296 = vrot.slane %v2262, %v2295
        %v2297 = vlaneseq
        %v2298 = vshrl.u32 %v2297, 7
        %v2299 = vsub.s32 %v1820, %v2298
        %v2300 = vrot.slane %v2265, %v2299
        %v2301 = vlaneseq
        %v2302 = vshrl.u32 %v2301, 7
        %v2303 = vsub.s32 %v1820, %v2302
        %v2304 = vrot.slane %v2268, %v2303
        %v2305 = vlaneseq
        %v2306 = vshrl.u32 %v2305, 7
        %v2307 = vsub.s32 %v1820, %v2306
        %v2308 = vrot.slane %v2271, %v2307
        %v2309 = vlaneseq
        %v2310 = vshrl.u32 %v2309, 7
        %v2311 = vsub.s32 %v1820, %v2310
        %v2312 = vrot.slane %v2274, %v2311
        %v2313 = vlaneseq
        %v2314 = vshrl.u32 %v2313, 7
        %v2315 = vsub.s32 %v1820, %v2314
        %v2316 = vrot.slane %v2277, %v2315
        %v2317 = vlaneseq
        %v2318 = vshrl.u32 %v2317, 7
        %v2319 = vsub.s32 %v1820, %v2318
        %v2320 = vrot.slane %v2280, %v2319
        %v2321 = vsel %vm1853, %v2296, %v2292
        %v2322 = vsel %vm1855, %v2300, %v2321
        %v2323 = vsel %vm1857, %v2304, %v2322
        %v2324 = vsel %vm1859, %v2308, %v2323
        %v2325 = vsel %vm1861, %v2312, %v2324
        %v2326 = vsel %vm1863, %v2316, %v2325
        %v2327 = vsel %vm1865, %v2320, %v2326
        %v2329 = vadd.f32 %v2241, %v2327
        %v2330 = vrcp.pop %v2329
        %v2331 = vpack.c.bf16 %v2014, %v2014
        %v2332 = vpack.c.bf16 %v2016, %v2016
        %v2333 = vpack.c.bf16 %v2018, %v2018
        %v2334 = vpack.c.bf16 %v2020, %v2020
        %v2335 = vpack.c.bf16 %v2022, %v2022
        %v2336 = vpack.c.bf16 %v2024, %v2024
        %v2337 = vpack.c.bf16 %v2026, %v2026
        %v2338 = vpack.c.bf16 %v2028, %v2028
        %v2339 = vpack.c.bf16 %v555, %v555
        %v2340 = vpack.c.bf16 %v558, %v558
        %v2341 = vpack.c.bf16 %v563, %v563
        %v2342 = vpack.c.bf16 %v566, %v566
        %v2343 = vpack.c.bf16 %v571, %v571
        %v2344 = vpack.c.bf16 %v574, %v574
        %v2345 = vpack.c.bf16 %v579, %v579
        %v2346 = vpack.c.bf16 %v582, %v582
        %v2347 = vpack.c.bf16 %v2145, %v2145
        %v2348 = vpack.c.bf16 %v2146, %v2146
        %v2349 = vpack.c.bf16 %v2147, %v2147
        %v2350 = vpack.c.bf16 %v2148, %v2148
        %v2351 = vpack.c.bf16 %v2149, %v2149
        %v2352 = vpack.c.bf16 %v2150, %v2150
        %v2353 = vpack.c.bf16 %v2151, %v2151
        %v2354 = vpack.c.bf16 %v2152, %v2152
        %v2355 = vpack.c.bf16 %v985, %v985
        %v2356 = vpack.c.bf16 %v986, %v986
        %v2357 = vpack.c.bf16 %v987, %v987
        %v2358 = vpack.c.bf16 %v988, %v988
        %v2359 = vpack.c.bf16 %v989, %v989
        %v2360 = vpack.c.bf16 %v990, %v990
        %v2361 = vpack.c.bf16 %v991, %v991
        %v2362 = vpack.c.bf16 %v992, %v992
        %v2364 = vsel %vm1762, %v2347, 0
        %vm2366 = vcmask 1043456
        %v2368 = vsel %vm2366, %v2355, 0
        %2370 = vmatprep.subr.bf16.mxu0 0
        %2371 = vmatpush1.bf16.msra.mxu0 0
        %2372 = vmatprep.subr.bf16.mxu0 0
        %2373 = vmatpush1.bf16.msra.mxu0 0
        %2374 = vmatprep.subr.bf16.mxu0 0
        %2375 = vmatpush1.bf16.msra.mxu0 0
        %2376 = vmatprep.subr.bf16.mxu0 0
        %2377 = vmatpush1.bf16.msra.mxu0 0
        %2378 = vmatprep.subr.bf16.mxu0 0
        %2379 = vmatpush1.bf16.msra.mxu0 0
        %2380 = vmatprep.subr.bf16.mxu0 0
        %2381 = vmatpush1.bf16.msra.mxu0 0
        %2382 = vmatprep.subr.bf16.mxu0 0
        %2383 = vmatpush1.bf16.msra.mxu0 0
        %2384 = vmatprep.subr.bf16.mxu0 0
        %2385 = vmatpush1.bf16.msra.mxu0 %v2368
        %2386 = vmatprep.subr.bf16.mxu0 0
        %2387 = vmatpush2.bf16.msra.mxu0 0
        %2388 = vmatprep.subr.bf16.mxu0 0
        %2389 = vmatpush2.bf16.msra.mxu0 0
        %2390 = vmatprep.subr.bf16.mxu0 0
        %2391 = vmatpush2.bf16.msra.mxu0 0
        %2392 = vmatprep.subr.bf16.mxu0 0
        %2393 = vmatpush2.bf16.msra.mxu0 0
        %2394 = vmatprep.subr.bf16.mxu0 0
        %2395 = vmatpush2.bf16.msra.mxu0 0
        %2396 = vmatprep.subr.bf16.mxu0 0
        %2397 = vmatpush2.bf16.msra.mxu0 0
        %2398 = vmatprep.subr.bf16.mxu0 0
        %2399 = vmatpush2.bf16.msra.mxu0 0
        %2400 = vmatprep.subr.bf16.mxu0 0
        %2401 = vmatpush2.bf16.msra.mxu0 0
        %2402 = vmatprep.mubr.bf16.mxu0 0
        %2403 = vmatmul.mubr.bf16.gmra.mxu0 %v2364
        %v2404 = vpop.f32.mrf.mxu0
        %v2405 = vadd.f32 0.0, %v2404
        %v2406 = vpop.f32.mrf.mxu0
        %v2407 = vpop.f32.mrf.mxu0
        %v2408 = vpop.f32.mrf.mxu0
        %2409 = vdwg.mxu0
        %v2411 = vsel %vm1762, %v2348, 0
        %v2414 = vsel %vm2366, %v2356, 0
        %2416 = vmatprep.subr.bf16.mxu0 0
        %2417 = vmatpush1.bf16.msra.mxu0 0
        %2418 = vmatprep.subr.bf16.mxu0 0
        %2419 = vmatpush1.bf16.msra.mxu0 0
        %2420 = vmatprep.subr.bf16.mxu0 0
        %2421 = vmatpush1.bf16.msra.mxu0 0
        %2422 = vmatprep.subr.bf16.mxu0 0
        %2423 = vmatpush1.bf16.msra.mxu0 0
        %2424 = vmatprep.subr.bf16.mxu0 0
        %2425 = vmatpush1.bf16.msra.mxu0 0
        %2426 = vmatprep.subr.bf16.mxu0 0
        %2427 = vmatpush1.bf16.msra.mxu0 0
        %2428 = vmatprep.subr.bf16.mxu0 0
        %2429 = vmatpush1.bf16.msra.mxu0 0
        %2430 = vmatprep.subr.bf16.mxu0 0
        %2431 = vmatpush1.bf16.msra.mxu0 %v2414
        %2432 = vmatprep.subr.bf16.mxu0 0
        %2433 = vmatpush2.bf16.msra.mxu0 0
        %2434 = vmatprep.subr.bf16.mxu0 0
        %2435 = vmatpush2.bf16.msra.mxu0 0
        %2436 = vmatprep.subr.bf16.mxu0 0
        %2437 = vmatpush2.bf16.msra.mxu0 0
        %2438 = vmatprep.subr.bf16.mxu0 0
        %2439 = vmatpush2.bf16.msra.mxu0 0
        %2440 = vmatprep.subr.bf16.mxu0 0
        %2441 = vmatpush2.bf16.msra.mxu0 0
        %2442 = vmatprep.subr.bf16.mxu0 0
        %2443 = vmatpush2.bf16.msra.mxu0 0
        %2444 = vmatprep.subr.bf16.mxu0 0
        %2445 = vmatpush2.bf16.msra.mxu0 0
        %2446 = vmatprep.subr.bf16.mxu0 0
        %2447 = vmatpush2.bf16.msra.mxu0 0
        %2448 = vmatprep.mubr.bf16.mxu0 0
        %2449 = vmatmul.mubr.bf16.gmra.mxu0 %v2411
        %v2450 = vpop.f32.mrf.mxu0
        %v2451 = vadd.f32 0.0, %v2450
        %v2452 = vpop.f32.mrf.mxu0
        %v2453 = vpop.f32.mrf.mxu0
        %v2454 = vpop.f32.mrf.mxu0
        %2455 = vdwg.mxu0
        %v2457 = vsel %vm1762, %v2349, 0
        %v2460 = vsel %vm2366, %v2357, 0
        %2462 = vmatprep.subr.bf16.mxu0 0
        %2463 = vmatpush1.bf16.msra.mxu0 0
        %2464 = vmatprep.subr.bf16.mxu0 0
        %2465 = vmatpush1.bf16.msra.mxu0 0
        %2466 = vmatprep.subr.bf16.mxu0 0
        %2467 = vmatpush1.bf16.msra.mxu0 0
        %2468 = vmatprep.subr.bf16.mxu0 0
        %2469 = vmatpush1.bf16.msra.mxu0 0
        %2470 = vmatprep.subr.bf16.mxu0 0
        %2471 = vmatpush1.bf16.msra.mxu0 0
        %2472 = vmatprep.subr.bf16.mxu0 0
        %2473 = vmatpush1.bf16.msra.mxu0 0
        %2474 = vmatprep.subr.bf16.mxu0 0
        %2475 = vmatpush1.bf16.msra.mxu0 0
        %2476 = vmatprep.subr.bf16.mxu0 0
        %2477 = vmatpush1.bf16.msra.mxu0 %v2460
        %2478 = vmatprep.subr.bf16.mxu0 0
        %2479 = vmatpush2.bf16.msra.mxu0 0
        %2480 = vmatprep.subr.bf16.mxu0 0
        %2481 = vmatpush2.bf16.msra.mxu0 0
        %2482 = vmatprep.subr.bf16.mxu0 0
        %2483 = vmatpush2.bf16.msra.mxu0 0
        %2484 = vmatprep.subr.bf16.mxu0 0
        %2485 = vmatpush2.bf16.msra.mxu0 0
        %2486 = vmatprep.subr.bf16.mxu0 0
        %2487 = vmatpush2.bf16.msra.mxu0 0
        %2488 = vmatprep.subr.bf16.mxu0 0
        %2489 = vmatpush2.bf16.msra.mxu0 0
        %2490 = vmatprep.subr.bf16.mxu0 0
        %2491 = vmatpush2.bf16.msra.mxu0 0
        %2492 = vmatprep.subr.bf16.mxu0 0
        %2493 = vmatpush2.bf16.msra.mxu0 0
        %2494 = vmatprep.mubr.bf16.mxu0 0
        %2495 = vmatmul.mubr.bf16.gmra.mxu0 %v2457
        %v2496 = vpop.f32.mrf.mxu0
        %v2497 = vadd.f32 0.0, %v2496
        %v2498 = vpop.f32.mrf.mxu0
        %v2499 = vpop.f32.mrf.mxu0
        %v2500 = vpop.f32.mrf.mxu0
        %2501 = vdwg.mxu0
        %v2503 = vsel %vm1762, %v2350, 0
        %v2506 = vsel %vm2366, %v2358, 0
        %2508 = vmatprep.subr.bf16.mxu0 0
        %2509 = vmatpush1.bf16.msra.mxu0 0
        %2510 = vmatprep.subr.bf16.mxu0 0
        %2511 = vmatpush1.bf16.msra.mxu0 0
        %2512 = vmatprep.subr.bf16.mxu0 0
        %2513 = vmatpush1.bf16.msra.mxu0 0
        %2514 = vmatprep.subr.bf16.mxu0 0
        %2515 = vmatpush1.bf16.msra.mxu0 0
        %2516 = vmatprep.subr.bf16.mxu0 0
        %2517 = vmatpush1.bf16.msra.mxu0 0
        %2518 = vmatprep.subr.bf16.mxu0 0
        %2519 = vmatpush1.bf16.msra.mxu0 0
        %2520 = vmatprep.subr.bf16.mxu0 0
        %2521 = vmatpush1.bf16.msra.mxu0 0
        %2522 = vmatprep.subr.bf16.mxu0 0
        %2523 = vmatpush1.bf16.msra.mxu0 %v2506
        %2524 = vmatprep.subr.bf16.mxu0 0
        %2525 = vmatpush2.bf16.msra.mxu0 0
        %2526 = vmatprep.subr.bf16.mxu0 0
        %2527 = vmatpush2.bf16.msra.mxu0 0
        %2528 = vmatprep.subr.bf16.mxu0 0
        %2529 = vmatpush2.bf16.msra.mxu0 0
        %2530 = vmatprep.subr.bf16.mxu0 0
        %2531 = vmatpush2.bf16.msra.mxu0 0
        %2532 = vmatprep.subr.bf16.mxu0 0
        %2533 = vmatpush2.bf16.msra.mxu0 0
        %2534 = vmatprep.subr.bf16.mxu0 0
        %2535 = vmatpush2.bf16.msra.mxu0 0
        %2536 = vmatprep.subr.bf16.mxu0 0
        %2537 = vmatpush2.bf16.msra.mxu0 0
        %2538 = vmatprep.subr.bf16.mxu0 0
        %2539 = vmatpush2.bf16.msra.mxu0 0
        %2540 = vmatprep.mubr.bf16.mxu0 0
        %2541 = vmatmul.mubr.bf16.gmra.mxu0 %v2503
        %v2542 = vpop.f32.mrf.mxu0
        %v2543 = vadd.f32 0.0, %v2542
        %v2544 = vpop.f32.mrf.mxu0
        %v2545 = vpop.f32.mrf.mxu0
        %v2546 = vpop.f32.mrf.mxu0
        %2547 = vdwg.mxu0
        %v2549 = vsel %vm1762, %v2351, 0
        %v2552 = vsel %vm2366, %v2359, 0
        %2554 = vmatprep.subr.bf16.mxu0 0
        %2555 = vmatpush1.bf16.msra.mxu0 0
        %2556 = vmatprep.subr.bf16.mxu0 0
        %2557 = vmatpush1.bf16.msra.mxu0 0
        %2558 = vmatprep.subr.bf16.mxu0 0
        %2559 = vmatpush1.bf16.msra.mxu0 0
        %2560 = vmatprep.subr.bf16.mxu0 0
        %2561 = vmatpush1.bf16.msra.mxu0 0
        %2562 = vmatprep.subr.bf16.mxu0 0
        %2563 = vmatpush1.bf16.msra.mxu0 0
        %2564 = vmatprep.subr.bf16.mxu0 0
        %2565 = vmatpush1.bf16.msra.mxu0 0
        %2566 = vmatprep.subr.bf16.mxu0 0
        %2567 = vmatpush1.bf16.msra.mxu0 0
        %2568 = vmatprep.subr.bf16.mxu0 0
        %2569 = vmatpush1.bf16.msra.mxu0 %v2552
        %2570 = vmatprep.subr.bf16.mxu0 0
        %2571 = vmatpush2.bf16.msra.mxu0 0
        %2572 = vmatprep.subr.bf16.mxu0 0
        %2573 = vmatpush2.bf16.msra.mxu0 0
        %2574 = vmatprep.subr.bf16.mxu0 0
        %2575 = vmatpush2.bf16.msra.mxu0 0
        %2576 = vmatprep.subr.bf16.mxu0 0
        %2577 = vmatpush2.bf16.msra.mxu0 0
        %2578 = vmatprep.subr.bf16.mxu0 0
        %2579 = vmatpush2.bf16.msra.mxu0 0
        %2580 = vmatprep.subr.bf16.mxu0 0
        %2581 = vmatpush2.bf16.msra.mxu0 0
        %2582 = vmatprep.subr.bf16.mxu0 0
        %2583 = vmatpush2.bf16.msra.mxu0 0
        %2584 = vmatprep.subr.bf16.mxu0 0
        %2585 = vmatpush2.bf16.msra.mxu0 0
        %2586 = vmatprep.mubr.bf16.mxu0 0
        %2587 = vmatmul.mubr.bf16.gmra.mxu0 %v2549
        %v2588 = vpop.f32.mrf.mxu0
        %v2589 = vadd.f32 0.0, %v2588
        %v2590 = vpop.f32.mrf.mxu0
        %v2591 = vpop.f32.mrf.mxu0
        %v2592 = vpop.f32.mrf.mxu0
        %2593 = vdwg.mxu0
        %v2595 = vsel %vm1762, %v2352, 0
        %v2598 = vsel %vm2366, %v2360, 0
        %2600 = vmatprep.subr.bf16.mxu0 0
        %2601 = vmatpush1.bf16.msra.mxu0 0
        %2602 = vmatprep.subr.bf16.mxu0 0
        %2603 = vmatpush1.bf16.msra.mxu0 0
        %2604 = vmatprep.subr.bf16.mxu0 0
        %2605 = vmatpush1.bf16.msra.mxu0 0
        %2606 = vmatprep.subr.bf16.mxu0 0
        %2607 = vmatpush1.bf16.msra.mxu0 0
        %2608 = vmatprep.subr.bf16.mxu0 0
        %2609 = vmatpush1.bf16.msra.mxu0 0
        %2610 = vmatprep.subr.bf16.mxu0 0
        %2611 = vmatpush1.bf16.msra.mxu0 0
        %2612 = vmatprep.subr.bf16.mxu0 0
        %2613 = vmatpush1.bf16.msra.mxu0 0
        %2614 = vmatprep.subr.bf16.mxu0 0
        %2615 = vmatpush1.bf16.msra.mxu0 %v2598
        %2616 = vmatprep.subr.bf16.mxu0 0
        %2617 = vmatpush2.bf16.msra.mxu0 0
        %2618 = vmatprep.subr.bf16.mxu0 0
        %2619 = vmatpush2.bf16.msra.mxu0 0
        %2620 = vmatprep.subr.bf16.mxu0 0
        %2621 = vmatpush2.bf16.msra.mxu0 0
        %2622 = vmatprep.subr.bf16.mxu0 0
        %2623 = vmatpush2.bf16.msra.mxu0 0
        %2624 = vmatprep.subr.bf16.mxu0 0
        %2625 = vmatpush2.bf16.msra.mxu0 0
        %2626 = vmatprep.subr.bf16.mxu0 0
        %2627 = vmatpush2.bf16.msra.mxu0 0
        %2628 = vmatprep.subr.bf16.mxu0 0
        %2629 = vmatpush2.bf16.msra.mxu0 0
        %2630 = vmatprep.subr.bf16.mxu0 0
        %2631 = vmatpush2.bf16.msra.mxu0 0
        %2632 = vmatprep.mubr.bf16.mxu0 0
        %2633 = vmatmul.mubr.bf16.gmra.mxu0 %v2595
        %v2634 = vpop.f32.mrf.mxu0
        %v2635 = vadd.f32 0.0, %v2634
        %v2636 = vpop.f32.mrf.mxu0
        %v2637 = vpop.f32.mrf.mxu0
        %v2638 = vpop.f32.mrf.mxu0
        %2639 = vdwg.mxu0
        %v2641 = vsel %vm1762, %v2353, 0
        %v2644 = vsel %vm2366, %v2361, 0
        %2646 = vmatprep.subr.bf16.mxu0 0
        %2647 = vmatpush1.bf16.msra.mxu0 0
        %2648 = vmatprep.subr.bf16.mxu0 0
        %2649 = vmatpush1.bf16.msra.mxu0 0
        %2650 = vmatprep.subr.bf16.mxu0 0
        %2651 = vmatpush1.bf16.msra.mxu0 0
        %2652 = vmatprep.subr.bf16.mxu0 0
        %2653 = vmatpush1.bf16.msra.mxu0 0
        %2654 = vmatprep.subr.bf16.mxu0 0
        %2655 = vmatpush1.bf16.msra.mxu0 0
        %2656 = vmatprep.subr.bf16.mxu0 0
        %2657 = vmatpush1.bf16.msra.mxu0 0
        %2658 = vmatprep.subr.bf16.mxu0 0
        %2659 = vmatpush1.bf16.msra.mxu0 0
        %2660 = vmatprep.subr.bf16.mxu0 0
        %2661 = vmatpush1.bf16.msra.mxu0 %v2644
        %2662 = vmatprep.subr.bf16.mxu0 0
        %2663 = vmatpush2.bf16.msra.mxu0 0
        %2664 = vmatprep.subr.bf16.mxu0 0
        %2665 = vmatpush2.bf16.msra.mxu0 0
        %2666 = vmatprep.subr.bf16.mxu0 0
        %2667 = vmatpush2.bf16.msra.mxu0 0
        %2668 = vmatprep.subr.bf16.mxu0 0
        %2669 = vmatpush2.bf16.msra.mxu0 0
        %2670 = vmatprep.subr.bf16.mxu0 0
        %2671 = vmatpush2.bf16.msra.mxu0 0
        %2672 = vmatprep.subr.bf16.mxu0 0
        %2673 = vmatpush2.bf16.msra.mxu0 0
        %2674 = vmatprep.subr.bf16.mxu0 0
        %2675 = vmatpush2.bf16.msra.mxu0 0
        %2676 = vmatprep.subr.bf16.mxu0 0
        %2677 = vmatpush2.bf16.msra.mxu0 0
        %2678 = vmatprep.mubr.bf16.mxu0 0
        %2679 = vmatmul.mubr.bf16.gmra.mxu0 %v2641
        %v2680 = vpop.f32.mrf.mxu0
        %v2681 = vadd.f32 0.0, %v2680
        %v2682 = vpop.f32.mrf.mxu0
        %v2683 = vpop.f32.mrf.mxu0
        %v2684 = vpop.f32.mrf.mxu0
        %2685 = vdwg.mxu0
        %v2687 = vsel %vm1762, %v2354, 0
        %v2690 = vsel %vm2366, %v2362, 0
        %2692 = vmatprep.subr.bf16.mxu0 0
        %2693 = vmatpush1.bf16.msra.mxu0 0
        %2694 = vmatprep.subr.bf16.mxu0 0
        %2695 = vmatpush1.bf16.msra.mxu0 0
        %2696 = vmatprep.subr.bf16.mxu0 0
        %2697 = vmatpush1.bf16.msra.mxu0 0
        %2698 = vmatprep.subr.bf16.mxu0 0
        %2699 = vmatpush1.bf16.msra.mxu0 0
        %2700 = vmatprep.subr.bf16.mxu0 0
        %2701 = vmatpush1.bf16.msra.mxu0 0
        %2702 = vmatprep.subr.bf16.mxu0 0
        %2703 = vmatpush1.bf16.msra.mxu0 0
        %2704 = vmatprep.subr.bf16.mxu0 0
        %2705 = vmatpush1.bf16.msra.mxu0 0
        %2706 = vmatprep.subr.bf16.mxu0 0
        %2707 = vmatpush1.bf16.msra.mxu0 %v2690
        %2708 = vmatprep.subr.bf16.mxu0 0
        %2709 = vmatpush2.bf16.msra.mxu0 0
        %2710 = vmatprep.subr.bf16.mxu0 0
        %2711 = vmatpush2.bf16.msra.mxu0 0
        %2712 = vmatprep.subr.bf16.mxu0 0
        %2713 = vmatpush2.bf16.msra.mxu0 0
        %2714 = vmatprep.subr.bf16.mxu0 0
        %2715 = vmatpush2.bf16.msra.mxu0 0
        %2716 = vmatprep.subr.bf16.mxu0 0
        %2717 = vmatpush2.bf16.msra.mxu0 0
        %2718 = vmatprep.subr.bf16.mxu0 0
        %2719 = vmatpush2.bf16.msra.mxu0 0
        %2720 = vmatprep.subr.bf16.mxu0 0
        %2721 = vmatpush2.bf16.msra.mxu0 0
        %2722 = vmatprep.subr.bf16.mxu0 0
        %2723 = vmatpush2.bf16.msra.mxu0 0
        %2724 = vmatprep.mubr.bf16.mxu0 0
        %2725 = vmatmul.mubr.bf16.gmra.mxu0 %v2687
        %v2726 = vpop.f32.mrf.mxu0
        %v2727 = vadd.f32 0.0, %v2726
        %v2728 = vpop.f32.mrf.mxu0
        %v2729 = vpop.f32.mrf.mxu0
        %v2730 = vpop.f32.mrf.mxu0
        %2731 = vdwg.mxu0
        %v2732 = vcombine.low %v2405, %v2497
        %v2733 = vcombine.high %v2405, %v2497
        %v2735 = vunpack.c.l.s4 1983009808
        %v2736 = vunpack.c.0.s8 %v2735
        %v2737 = vlaneseq
        %v2738 = vshrl.u32 %v2737, 7
        %v2739 = vsub.s32 %v2736, %v2738
        %v2740 = vrot.slane %v2732, %v2739
        %v2742 = vunpack.c.l.s4 1983009808
        %v2743 = vunpack.c.0.s8 %v2742
        %v2744 = vlaneseq
        %v2745 = vshrl.u32 %v2744, 7
        %v2746 = vsub.s32 %v2743, %v2745
        %v2747 = vrot.slane %v2733, %v2746
        %v2748 = vcombine.low %v2451, %v2543
        %v2749 = vcombine.high %v2451, %v2543
        %v2751 = vunpack.c.l.s4 1983009808
        %v2752 = vunpack.c.0.s8 %v2751
        %v2753 = vlaneseq
        %v2754 = vshrl.u32 %v2753, 7
        %v2755 = vsub.s32 %v2752, %v2754
        %v2756 = vrot.slane %v2748, %v2755
        %v2758 = vunpack.c.l.s4 1983009808
        %v2759 = vunpack.c.0.s8 %v2758
        %v2760 = vlaneseq
        %v2761 = vshrl.u32 %v2760, 7
        %v2762 = vsub.s32 %v2759, %v2761
        %v2763 = vrot.slane %v2749, %v2762
        %v2764 = vcombine.low %v2589, %v2681
        %v2765 = vcombine.high %v2589, %v2681
        %v2767 = vunpack.c.l.s4 1983009808
        %v2768 = vunpack.c.0.s8 %v2767
        %v2769 = vlaneseq
        %v2770 = vshrl.u32 %v2769, 7
        %v2771 = vsub.s32 %v2768, %v2770
        %v2772 = vrot.slane %v2764, %v2771
        %v2774 = vunpack.c.l.s4 1983009808
        %v2775 = vunpack.c.0.s8 %v2774
        %v2776 = vlaneseq
        %v2777 = vshrl.u32 %v2776, 7
        %v2778 = vsub.s32 %v2775, %v2777
        %v2779 = vrot.slane %v2765, %v2778
        %v2780 = vcombine.low %v2635, %v2727
        %v2781 = vcombine.high %v2635, %v2727
        %v2783 = vunpack.c.l.s4 1983009808
        %v2784 = vunpack.c.0.s8 %v2783
        %v2785 = vlaneseq
        %v2786 = vshrl.u32 %v2785, 7
        %v2787 = vsub.s32 %v2784, %v2786
        %v2788 = vrot.slane %v2780, %v2787
        %v2790 = vunpack.c.l.s4 1983009808
        %v2791 = vunpack.c.0.s8 %v2790
        %v2792 = vlaneseq
        %v2793 = vshrl.u32 %v2792, 7
        %v2794 = vsub.s32 %v2791, %v2793
        %v2795 = vrot.slane %v2781, %v2794
        %v2796 = vcombine.low %v2740, %v2756
        %v2797 = vcombine.high %v2740, %v2756
        %v2799 = vunpack.c.l.s4 1934713408
        %v2800 = vunpack.c.0.s8 %v2799
        %v2801 = vlaneseq
        %v2802 = vshrl.u32 %v2801, 7
        %v2803 = vsub.s32 %v2800, %v2802
        %v2804 = vrot.slane %v2796, %v2803
        %v2806 = vunpack.c.l.s4 1934713408
        %v2807 = vunpack.c.0.s8 %v2806
        %v2808 = vlaneseq
        %v2809 = vshrl.u32 %v2808, 7
        %v2810 = vsub.s32 %v2807, %v2809
        %v2811 = vrot.slane %v2797, %v2810
        %v2812 = vcombine.low %v2747, %v2763
        %v2813 = vcombine.high %v2747, %v2763
        %v2815 = vunpack.c.l.s4 1934713408
        %v2816 = vunpack.c.0.s8 %v2815
        %v2817 = vlaneseq
        %v2818 = vshrl.u32 %v2817, 7
        %v2819 = vsub.s32 %v2816, %v2818
        %v2820 = vrot.slane %v2812, %v2819
        %v2822 = vunpack.c.l.s4 1934713408
        %v2823 = vunpack.c.0.s8 %v2822
        %v2824 = vlaneseq
        %v2825 = vshrl.u32 %v2824, 7
        %v2826 = vsub.s32 %v2823, %v2825
        %v2827 = vrot.slane %v2813, %v2826
        %v2828 = vcombine.low %v2772, %v2788
        %v2829 = vcombine.high %v2772, %v2788
        %v2831 = vunpack.c.l.s4 1934713408
        %v2832 = vunpack.c.0.s8 %v2831
        %v2833 = vlaneseq
        %v2834 = vshrl.u32 %v2833, 7
        %v2835 = vsub.s32 %v2832, %v2834
        %v2836 = vrot.slane %v2828, %v2835
        %v2838 = vunpack.c.l.s4 1934713408
        %v2839 = vunpack.c.0.s8 %v2838
        %v2840 = vlaneseq
        %v2841 = vshrl.u32 %v2840, 7
        %v2842 = vsub.s32 %v2839, %v2841
        %v2843 = vrot.slane %v2829, %v2842
        %v2844 = vcombine.low %v2779, %v2795
        %v2845 = vcombine.high %v2779, %v2795
        %v2847 = vunpack.c.l.s4 1934713408
        %v2848 = vunpack.c.0.s8 %v2847
        %v2849 = vlaneseq
        %v2850 = vshrl.u32 %v2849, 7
        %v2851 = vsub.s32 %v2848, %v2850
        %v2852 = vrot.slane %v2844, %v2851
        %v2854 = vunpack.c.l.s4 1934713408
        %v2855 = vunpack.c.0.s8 %v2854
        %v2856 = vlaneseq
        %v2857 = vshrl.u32 %v2856, 7
        %v2858 = vsub.s32 %v2855, %v2857
        %v2859 = vrot.slane %v2845, %v2858
        %v2860 = vcombine.low %v2804, %v2836
        %v2861 = vcombine.high %v2804, %v2836
        %v2862 = vcombine.low %v2811, %v2843
        %v2863 = vcombine.high %v2811, %v2843
        %v2864 = vcombine.low %v2820, %v2852
        %v2865 = vcombine.high %v2820, %v2852
        %v2866 = vcombine.low %v2827, %v2859
        %v2867 = vcombine.high %v2827, %v2859
        %s2868 = sld [smem:[#allocation2]]
        %v2870 = vsel %vm1762, %v2331, 0
        %v2873 = vsel %vm2366, %v2339, 0
        %2875 = vmatprep.subr.bf16.mxu0 0
        %2876 = vmatpush1.bf16.msra.mxu0 0
        %2877 = vmatprep.subr.bf16.mxu0 0
        %2878 = vmatpush1.bf16.msra.mxu0 0
        %2879 = vmatprep.subr.bf16.mxu0 0
        %2880 = vmatpush1.bf16.msra.mxu0 0
        %2881 = vmatprep.subr.bf16.mxu0 0
        %2882 = vmatpush1.bf16.msra.mxu0 0
        %2883 = vmatprep.subr.bf16.mxu0 0
        %2884 = vmatpush1.bf16.msra.mxu0 0
        %2885 = vmatprep.subr.bf16.mxu0 0
        %2886 = vmatpush1.bf16.msra.mxu0 0
        %2887 = vmatprep.subr.bf16.mxu0 0
        %2888 = vmatpush1.bf16.msra.mxu0 0
        %2889 = vmatprep.subr.bf16.mxu0 0
        %2890 = vmatpush1.bf16.msra.mxu0 %v2873
        %2891 = vmatprep.subr.bf16.mxu0 0
        %2892 = vmatpush2.bf16.msra.mxu0 0
        %2893 = vmatprep.subr.bf16.mxu0 0
        %2894 = vmatpush2.bf16.msra.mxu0 0
        %2895 = vmatprep.subr.bf16.mxu0 0
        %2896 = vmatpush2.bf16.msra.mxu0 0
        %2897 = vmatprep.subr.bf16.mxu0 0
        %2898 = vmatpush2.bf16.msra.mxu0 0
        %2899 = vmatprep.subr.bf16.mxu0 0
        %2900 = vmatpush2.bf16.msra.mxu0 0
        %2901 = vmatprep.subr.bf16.mxu0 0
        %2902 = vmatpush2.bf16.msra.mxu0 0
        %2903 = vmatprep.subr.bf16.mxu0 0
        %2904 = vmatpush2.bf16.msra.mxu0 0
        %2905 = vmatprep.subr.bf16.mxu0 0
        %2906 = vmatpush2.bf16.msra.mxu0 0
        %2907 = vmatprep.mubr.bf16.mxu0 0
        %2908 = vmatmul.mubr.bf16.gmra.mxu0 %v2870
        %v2909 = vpop.f32.mrf.mxu0
        %v2910 = vadd.f32 %v2860, %v2909
        %v2911 = vpop.f32.mrf.mxu0
        %v2912 = vpop.f32.mrf.mxu0
        %v2913 = vpop.f32.mrf.mxu0
        %2914 = vdwg.mxu0
        %v2916 = vsel %vm1762, %v2332, 0
        %v2919 = vsel %vm2366, %v2340, 0
        %2921 = vmatprep.subr.bf16.mxu0 0
        %2922 = vmatpush1.bf16.msra.mxu0 0
        %2923 = vmatprep.subr.bf16.mxu0 0
        %2924 = vmatpush1.bf16.msra.mxu0 0
        %2925 = vmatprep.subr.bf16.mxu0 0
        %2926 = vmatpush1.bf16.msra.mxu0 0
        %2927 = vmatprep.subr.bf16.mxu0 0
        %2928 = vmatpush1.bf16.msra.mxu0 0
        %2929 = vmatprep.subr.bf16.mxu0 0
        %2930 = vmatpush1.bf16.msra.mxu0 0
        %2931 = vmatprep.subr.bf16.mxu0 0
        %2932 = vmatpush1.bf16.msra.mxu0 0
        %2933 = vmatprep.subr.bf16.mxu0 0
        %2934 = vmatpush1.bf16.msra.mxu0 0
        %2935 = vmatprep.subr.bf16.mxu0 0
        %2936 = vmatpush1.bf16.msra.mxu0 %v2919
        %2937 = vmatprep.subr.bf16.mxu0 0
        %2938 = vmatpush2.bf16.msra.mxu0 0
        %2939 = vmatprep.subr.bf16.mxu0 0
        %2940 = vmatpush2.bf16.msra.mxu0 0
        %2941 = vmatprep.subr.bf16.mxu0 0
        %2942 = vmatpush2.bf16.msra.mxu0 0
        %2943 = vmatprep.subr.bf16.mxu0 0
        %2944 = vmatpush2.bf16.msra.mxu0 0
        %2945 = vmatprep.subr.bf16.mxu0 0
        %2946 = vmatpush2.bf16.msra.mxu0 0
        %2947 = vmatprep.subr.bf16.mxu0 0
        %2948 = vmatpush2.bf16.msra.mxu0 0
        %2949 = vmatprep.subr.bf16.mxu0 0
        %2950 = vmatpush2.bf16.msra.mxu0 0
        %2951 = vmatprep.subr.bf16.mxu0 0
        %2952 = vmatpush2.bf16.msra.mxu0 0
        %2953 = vmatprep.mubr.bf16.mxu0 0
        %2954 = vmatmul.mubr.bf16.gmra.mxu0 %v2916
        %v2955 = vpop.f32.mrf.mxu0
        %v2956 = vadd.f32 %v2861, %v2955
        %v2957 = vpop.f32.mrf.mxu0
        %v2958 = vpop.f32.mrf.mxu0
        %v2959 = vpop.f32.mrf.mxu0
        %2960 = vdwg.mxu0
        %v2962 = vsel %vm1762, %v2333, 0
        %v2965 = vsel %vm2366, %v2341, 0
        %2967 = vmatprep.subr.bf16.mxu0 0
        %2968 = vmatpush1.bf16.msra.mxu0 0
        %2969 = vmatprep.subr.bf16.mxu0 0
        %2970 = vmatpush1.bf16.msra.mxu0 0
        %2971 = vmatprep.subr.bf16.mxu0 0
        %2972 = vmatpush1.bf16.msra.mxu0 0
        %2973 = vmatprep.subr.bf16.mxu0 0
        %2974 = vmatpush1.bf16.msra.mxu0 0
        %2975 = vmatprep.subr.bf16.mxu0 0
        %2976 = vmatpush1.bf16.msra.mxu0 0
        %2977 = vmatprep.subr.bf16.mxu0 0
        %2978 = vmatpush1.bf16.msra.mxu0 0
        %2979 = vmatprep.subr.bf16.mxu0 0
        %2980 = vmatpush1.bf16.msra.mxu0 0
        %2981 = vmatprep.subr.bf16.mxu0 0
        %2982 = vmatpush1.bf16.msra.mxu0 %v2965
        %2983 = vmatprep.subr.bf16.mxu0 0
        %2984 = vmatpush2.bf16.msra.mxu0 0
        %2985 = vmatprep.subr.bf16.mxu0 0
        %2986 = vmatpush2.bf16.msra.mxu0 0
        %2987 = vmatprep.subr.bf16.mxu0 0
        %2988 = vmatpush2.bf16.msra.mxu0 0
        %2989 = vmatprep.subr.bf16.mxu0 0
        %2990 = vmatpush2.bf16.msra.mxu0 0
        %2991 = vmatprep.subr.bf16.mxu0 0
        %2992 = vmatpush2.bf16.msra.mxu0 0
        %2993 = vmatprep.subr.bf16.mxu0 0
        %2994 = vmatpush2.bf16.msra.mxu0 0
        %2995 = vmatprep.subr.bf16.mxu0 0
        %2996 = vmatpush2.bf16.msra.mxu0 0
        %2997 = vmatprep.subr.bf16.mxu0 0
        %2998 = vmatpush2.bf16.msra.mxu0 0
        %2999 = vmatprep.mubr.bf16.mxu0 0
        %3000 = vmatmul.mubr.bf16.gmra.mxu0 %v2962
        %v3001 = vpop.f32.mrf.mxu0
        %v3002 = vadd.f32 %v2862, %v3001
        %v3003 = vpop.f32.mrf.mxu0
        %v3004 = vpop.f32.mrf.mxu0
        %v3005 = vpop.f32.mrf.mxu0
        %3006 = vdwg.mxu0
        %v3008 = vsel %vm1762, %v2334, 0
        %v3011 = vsel %vm2366, %v2342, 0
        %3013 = vmatprep.subr.bf16.mxu0 0
        %3014 = vmatpush1.bf16.msra.mxu0 0
        %3015 = vmatprep.subr.bf16.mxu0 0
        %3016 = vmatpush1.bf16.msra.mxu0 0
        %3017 = vmatprep.subr.bf16.mxu0 0
        %3018 = vmatpush1.bf16.msra.mxu0 0
        %3019 = vmatprep.subr.bf16.mxu0 0
        %3020 = vmatpush1.bf16.msra.mxu0 0
        %3021 = vmatprep.subr.bf16.mxu0 0
        %3022 = vmatpush1.bf16.msra.mxu0 0
        %3023 = vmatprep.subr.bf16.mxu0 0
        %3024 = vmatpush1.bf16.msra.mxu0 0
        %3025 = vmatprep.subr.bf16.mxu0 0
        %3026 = vmatpush1.bf16.msra.mxu0 0
        %3027 = vmatprep.subr.bf16.mxu0 0
        %3028 = vmatpush1.bf16.msra.mxu0 %v3011
        %3029 = vmatprep.subr.bf16.mxu0 0
        %3030 = vmatpush2.bf16.msra.mxu0 0
        %3031 = vmatprep.subr.bf16.mxu0 0
        %3032 = vmatpush2.bf16.msra.mxu0 0
        %3033 = vmatprep.subr.bf16.mxu0 0
        %3034 = vmatpush2.bf16.msra.mxu0 0
        %3035 = vmatprep.subr.bf16.mxu0 0
        %3036 = vmatpush2.bf16.msra.mxu0 0
        %3037 = vmatprep.subr.bf16.mxu0 0
        %3038 = vmatpush2.bf16.msra.mxu0 0
        %3039 = vmatprep.subr.bf16.mxu0 0
        %3040 = vmatpush2.bf16.msra.mxu0 0
        %3041 = vmatprep.subr.bf16.mxu0 0
        %3042 = vmatpush2.bf16.msra.mxu0 0
        %3043 = vmatprep.subr.bf16.mxu0 0
        %3044 = vmatpush2.bf16.msra.mxu0 0
        %3045 = vmatprep.mubr.bf16.mxu0 0
        %3046 = vmatmul.mubr.bf16.gmra.mxu0 %v3008
        %v3047 = vpop.f32.mrf.mxu0
        %v3048 = vadd.f32 %v2863, %v3047
        %v3049 = vpop.f32.mrf.mxu0
        %v3050 = vpop.f32.mrf.mxu0
        %v3051 = vpop.f32.mrf.mxu0
        %3052 = vdwg.mxu0
        %v3054 = vsel %vm1762, %v2335, 0
        %v3057 = vsel %vm2366, %v2343, 0
        %3059 = vmatprep.subr.bf16.mxu0 0
        %3060 = vmatpush1.bf16.msra.mxu0 0
        %3061 = vmatprep.subr.bf16.mxu0 0
        %3062 = vmatpush1.bf16.msra.mxu0 0
        %3063 = vmatprep.subr.bf16.mxu0 0
        %3064 = vmatpush1.bf16.msra.mxu0 0
        %3065 = vmatprep.subr.bf16.mxu0 0
        %3066 = vmatpush1.bf16.msra.mxu0 0
        %3067 = vmatprep.subr.bf16.mxu0 0
        %3068 = vmatpush1.bf16.msra.mxu0 0
        %3069 = vmatprep.subr.bf16.mxu0 0
        %3070 = vmatpush1.bf16.msra.mxu0 0
        %3071 = vmatprep.subr.bf16.mxu0 0
        %3072 = vmatpush1.bf16.msra.mxu0 0
        %3073 = vmatprep.subr.bf16.mxu0 0
        %3074 = vmatpush1.bf16.msra.mxu0 %v3057
        %3075 = vmatprep.subr.bf16.mxu0 0
        %3076 = vmatpush2.bf16.msra.mxu0 0
        %3077 = vmatprep.subr.bf16.mxu0 0
        %3078 = vmatpush2.bf16.msra.mxu0 0
        %3079 = vmatprep.subr.bf16.mxu0 0
        %3080 = vmatpush2.bf16.msra.mxu0 0
        %3081 = vmatprep.subr.bf16.mxu0 0
        %3082 = vmatpush2.bf16.msra.mxu0 0
        %3083 = vmatprep.subr.bf16.mxu0 0
        %3084 = vmatpush2.bf16.msra.mxu0 0
        %3085 = vmatprep.subr.bf16.mxu0 0
        %3086 = vmatpush2.bf16.msra.mxu0 0
        %3087 = vmatprep.subr.bf16.mxu0 0
        %3088 = vmatpush2.bf16.msra.mxu0 0
        %3089 = vmatprep.subr.bf16.mxu0 0
        %3090 = vmatpush2.bf16.msra.mxu0 0
        %3091 = vmatprep.mubr.bf16.mxu0 0
        %3092 = vmatmul.mubr.bf16.gmra.mxu0 %v3054
        %v3093 = vpop.f32.mrf.mxu0
        %v3094 = vadd.f32 %v2864, %v3093
        %v3095 = vpop.f32.mrf.mxu0
        %v3096 = vpop.f32.mrf.mxu0
        %v3097 = vpop.f32.mrf.mxu0
        %3098 = vdwg.mxu0
        %v3100 = vsel %vm1762, %v2336, 0
        %v3103 = vsel %vm2366, %v2344, 0
        %3105 = vmatprep.subr.bf16.mxu0 0
        %3106 = vmatpush1.bf16.msra.mxu0 0
        %3107 = vmatprep.subr.bf16.mxu0 0
        %3108 = vmatpush1.bf16.msra.mxu0 0
        %3109 = vmatprep.subr.bf16.mxu0 0
        %3110 = vmatpush1.bf16.msra.mxu0 0
        %3111 = vmatprep.subr.bf16.mxu0 0
        %3112 = vmatpush1.bf16.msra.mxu0 0
        %3113 = vmatprep.subr.bf16.mxu0 0
        %3114 = vmatpush1.bf16.msra.mxu0 0
        %3115 = vmatprep.subr.bf16.mxu0 0
        %3116 = vmatpush1.bf16.msra.mxu0 0
        %3117 = vmatprep.subr.bf16.mxu0 0
        %3118 = vmatpush1.bf16.msra.mxu0 0
        %3119 = vmatprep.subr.bf16.mxu0 0
        %3120 = vmatpush1.bf16.msra.mxu0 %v3103
        %3121 = vmatprep.subr.bf16.mxu0 0
        %3122 = vmatpush2.bf16.msra.mxu0 0
        %3123 = vmatprep.subr.bf16.mxu0 0
        %3124 = vmatpush2.bf16.msra.mxu0 0
        %3125 = vmatprep.subr.bf16.mxu0 0
        %3126 = vmatpush2.bf16.msra.mxu0 0
        %3127 = vmatprep.subr.bf16.mxu0 0
        %3128 = vmatpush2.bf16.msra.mxu0 0
        %3129 = vmatprep.subr.bf16.mxu0 0
        %3130 = vmatpush2.bf16.msra.mxu0 0
        %3131 = vmatprep.subr.bf16.mxu0 0
        %3132 = vmatpush2.bf16.msra.mxu0 0
        %3133 = vmatprep.subr.bf16.mxu0 0
        %3134 = vmatpush2.bf16.msra.mxu0 0
        %3135 = vmatprep.subr.bf16.mxu0 0
        %3136 = vmatpush2.bf16.msra.mxu0 0
        %3137 = vmatprep.mubr.bf16.mxu0 0
        %3138 = vmatmul.mubr.bf16.gmra.mxu0 %v3100
        %v3139 = vpop.f32.mrf.mxu0
        %v3140 = vadd.f32 %v2865, %v3139
        %v3141 = vpop.f32.mrf.mxu0
        %v3142 = vpop.f32.mrf.mxu0
        %v3143 = vpop.f32.mrf.mxu0
        %3144 = vdwg.mxu0
        %v3146 = vsel %vm1762, %v2337, 0
        %v3149 = vsel %vm2366, %v2345, 0
        %3151 = vmatprep.subr.bf16.mxu0 0
        %3152 = vmatpush1.bf16.msra.mxu0 0
        %3153 = vmatprep.subr.bf16.mxu0 0
        %3154 = vmatpush1.bf16.msra.mxu0 0
        %3155 = vmatprep.subr.bf16.mxu0 0
        %3156 = vmatpush1.bf16.msra.mxu0 0
        %3157 = vmatprep.subr.bf16.mxu0 0
        %3158 = vmatpush1.bf16.msra.mxu0 0
        %3159 = vmatprep.subr.bf16.mxu0 0
        %3160 = vmatpush1.bf16.msra.mxu0 0
        %3161 = vmatprep.subr.bf16.mxu0 0
        %3162 = vmatpush1.bf16.msra.mxu0 0
        %3163 = vmatprep.subr.bf16.mxu0 0
        %3164 = vmatpush1.bf16.msra.mxu0 0
        %3165 = vmatprep.subr.bf16.mxu0 0
        %3166 = vmatpush1.bf16.msra.mxu0 %v3149
        %3167 = vmatprep.subr.bf16.mxu0 0
        %3168 = vmatpush2.bf16.msra.mxu0 0
        %3169 = vmatprep.subr.bf16.mxu0 0
        %3170 = vmatpush2.bf16.msra.mxu0 0
        %3171 = vmatprep.subr.bf16.mxu0 0
        %3172 = vmatpush2.bf16.msra.mxu0 0
        %3173 = vmatprep.subr.bf16.mxu0 0
        %3174 = vmatpush2.bf16.msra.mxu0 0
        %3175 = vmatprep.subr.bf16.mxu0 0
        %3176 = vmatpush2.bf16.msra.mxu0 0
        %3177 = vmatprep.subr.bf16.mxu0 0
        %3178 = vmatpush2.bf16.msra.mxu0 0
        %3179 = vmatprep.subr.bf16.mxu0 0
        %3180 = vmatpush2.bf16.msra.mxu0 0
        %3181 = vmatprep.subr.bf16.mxu0 0
        %3182 = vmatpush2.bf16.msra.mxu0 0
        %3183 = vmatprep.mubr.bf16.mxu0 0
        %3184 = vmatmul.mubr.bf16.gmra.mxu0 %v3146
        %v3185 = vpop.f32.mrf.mxu0
        %v3186 = vadd.f32 %v2866, %v3185
        %v3187 = vpop.f32.mrf.mxu0
        %v3188 = vpop.f32.mrf.mxu0
        %v3189 = vpop.f32.mrf.mxu0
        %3190 = vdwg.mxu0
        %v3192 = vsel %vm1762, %v2338, 0
        %v3195 = vsel %vm2366, %v2346, 0
        %3197 = vmatprep.subr.bf16.mxu0 0
        %3198 = vmatpush1.bf16.msra.mxu0 0
        %3199 = vmatprep.subr.bf16.mxu0 0
        %3200 = vmatpush1.bf16.msra.mxu0 0
        %3201 = vmatprep.subr.bf16.mxu0 0
        %3202 = vmatpush1.bf16.msra.mxu0 0
        %3203 = vmatprep.subr.bf16.mxu0 0
        %3204 = vmatpush1.bf16.msra.mxu0 0
        %3205 = vmatprep.subr.bf16.mxu0 0
        %3206 = vmatpush1.bf16.msra.mxu0 0
        %3207 = vmatprep.subr.bf16.mxu0 0
        %3208 = vmatpush1.bf16.msra.mxu0 0
        %3209 = vmatprep.subr.bf16.mxu0 0
        %3210 = vmatpush1.bf16.msra.mxu0 0
        %3211 = vmatprep.subr.bf16.mxu0 0
        %3212 = vmatpush1.bf16.msra.mxu0 %v3195
        %3213 = vmatprep.subr.bf16.mxu0 0
        %3214 = vmatpush2.bf16.msra.mxu0 0
        %3215 = vmatprep.subr.bf16.mxu0 0
        %3216 = vmatpush2.bf16.msra.mxu0 0
        %3217 = vmatprep.subr.bf16.mxu0 0
        %3218 = vmatpush2.bf16.msra.mxu0 0
        %3219 = vmatprep.subr.bf16.mxu0 0
        %3220 = vmatpush2.bf16.msra.mxu0 0
        %3221 = vmatprep.subr.bf16.mxu0 0
        %3222 = vmatpush2.bf16.msra.mxu0 0
        %3223 = vmatprep.subr.bf16.mxu0 0
        %3224 = vmatpush2.bf16.msra.mxu0 0
        %3225 = vmatprep.subr.bf16.mxu0 0
        %3226 = vmatpush2.bf16.msra.mxu0 0
        %3227 = vmatprep.subr.bf16.mxu0 0
        %3228 = vmatpush2.bf16.msra.mxu0 0
        %3229 = vmatprep.mubr.bf16.mxu0 0
        %3230 = vmatmul.mubr.bf16.gmra.mxu0 %v3192
        %v3231 = vpop.f32.mrf.mxu0
        %v3232 = vadd.f32 %v2867, %v3231
        %v3233 = vpop.f32.mrf.mxu0
        %v3234 = vpop.f32.mrf.mxu0
        %v3235 = vpop.f32.mrf.mxu0
        %3236 = vdwg.mxu0
        %v3237 = vlaneseq
        %v3238 = vshrl.u32 %v3237, 7
        %v3239 = vsub.s32 0, %v3238
        %v3240 = vrot.slane %v2330, %v3239
        %3242 = vbcast.lane.b32.xlu0 %v3240, 256
        %v3243 = vpop.permute.xlu0 %3242
        %v3244 = vlaneseq
        %v3245 = vshrl.u32 %v3244, 7
        %v3246 = vsub.s32 1, %v3245
        %v3247 = vrot.slane %v2330, %v3246
        %3249 = vbcast.lane.b32.xlu0 %v3247, 256
        %v3250 = vpop.permute.xlu0 %3249
        %v3251 = vlaneseq
        %v3252 = vshrl.u32 %v3251, 7
        %v3253 = vsub.s32 2, %v3252
        %v3254 = vrot.slane %v2330, %v3253
        %3256 = vbcast.lane.b32.xlu0 %v3254, 256
        %v3257 = vpop.permute.xlu0 %3256
        %v3258 = vlaneseq
        %v3259 = vshrl.u32 %v3258, 7
        %v3260 = vsub.s32 3, %v3259
        %v3261 = vrot.slane %v2330, %v3260
        %3263 = vbcast.lane.b32.xlu0 %v3261, 256
        %v3264 = vpop.permute.xlu0 %3263
        %v3265 = vlaneseq
        %v3266 = vshrl.u32 %v3265, 7
        %v3267 = vsub.s32 4, %v3266
        %v3268 = vrot.slane %v2330, %v3267
        %3270 = vbcast.lane.b32.xlu0 %v3268, 256
        %v3271 = vpop.permute.xlu0 %3270
        %v3272 = vlaneseq
        %v3273 = vshrl.u32 %v3272, 7
        %v3274 = vsub.s32 5, %v3273
        %v3275 = vrot.slane %v2330, %v3274
        %3277 = vbcast.lane.b32.xlu0 %v3275, 256
        %v3278 = vpop.permute.xlu0 %3277
        %v3279 = vlaneseq
        %v3280 = vshrl.u32 %v3279, 7
        %v3281 = vsub.s32 6, %v3280
        %v3282 = vrot.slane %v2330, %v3281
        %3284 = vbcast.lane.b32.xlu0 %v3282, 256
        %v3285 = vpop.permute.xlu0 %3284
        %v3286 = vlaneseq
        %v3287 = vshrl.u32 %v3286, 7
        %v3288 = vsub.s32 7, %v3287
        %v3289 = vrot.slane %v2330, %v3288
        %3291 = vbcast.lane.b32.xlu0 %v3289, 256
        %v3292 = vpop.permute.xlu0 %3291
        %v3293 = vmul.f32 %v2910, %v3243
        %v3294 = vmul.f32 %v2956, %v3250
        %v3295 = vmul.f32 %v3002, %v3257
        %v3296 = vmul.f32 %v3048, %v3264
        %v3297 = vmul.f32 %v3094, %v3271
        %v3298 = vmul.f32 %v3140, %v3278
        %v3299 = vmul.f32 %v3186, %v3285
        %v3300 = vmul.f32 %v3232, %v3292
        %v3301 = vstv %s2868
        %v3302 = vmul.f32 %v3301, %v3293
        %v3303 = vmul.f32 %v3301, %v3294
        %v3304 = vmul.f32 %v3301, %v3295
        %v3305 = vmul.f32 %v3301, %v3296
        %v3306 = vmul.f32 %v3301, %v3297
        %v3307 = vmul.f32 %v3301, %v3298
        %v3308 = vmul.f32 %v3301, %v3299
        %v3309 = vmul.f32 %v3301, %v3300
        %v3310 = vadd.f32 %v3302, %v326
        %v3311 = vadd.f32 %v3303, %v327
        %v3312 = vadd.f32 %v3304, %v328
        %v3313 = vadd.f32 %v3305, %v329
        %v3314 = vadd.f32 %v3306, %v330
        %v3315 = vadd.f32 %v3307, %v331
        %v3316 = vadd.f32 %v3308, %v332
        %v3317 = vadd.f32 %v3309, %v333
        %3318 = vst.msk [vmem:[%s324] sm:$0xff] %vm351, %v3310
        %3319 = vst.msk [vmem:[%s324 + $0x8] sm:$0xff] %vm351, %v3311
        %3320 = vst.msk [vmem:[%s324 + $0x10] sm:$0xff] %vm351, %v3312
        %3321 = vst.msk [vmem:[%s324 + $0x18] sm:$0xff] %vm351, %v3313
        %3322 = vst.msk [vmem:[%s324 + $0x20] sm:$0xff] %vm351, %v3314
        %3323 = vst.msk [vmem:[%s324 + $0x28] sm:$0xff] %vm351, %v3315
        %3324 = vst.msk [vmem:[%s324 + $0x30] sm:$0xff] %vm351, %v3316
        %3325 = vst.msk [vmem:[%s324 + $0x38] sm:$0xff] %vm351, %v3317
        %s3326 = sand.u32 %s207, 1
        %s3327 = scalar_lea.sflag [#allocation5], %s3326
        %s3328 = sand.u32 %s207, 1
        %s3329 = smul.addr %s3328, 64
        %s3330 = scalar_lea.vmem [#allocation6], %s3329
        // Predicated region
        $region57: #{cc_module_forward.1} parent=51 // pred_check
          %p3331 = pneg %p217
        $region58: #{cc_module_forward.1} parent=51 // pred_check_branch
          %3333 = sbr.rel (%p3331) target = $region60
        $region59: #{cc_module_forward.1} parent=51 // pred_region
          %s3335 = ssub.s32 1024, 1024
          %3336 = vsyncadd %s3327, %s3335
          %s3337 = smul.addr %s26, 8
          %s3338 = smul.addr %s3337, 128
          %s3339 = scalar_lea.hbm %s8, %s3338
          %s3340 = sshll.u32 %s3330, 4
          %s3341 = int_to_ptr.vmem [resolvable:$true] %s3340
          %3346 = dma.vmem_to_hbm [thread:$0]  %s3341, 1024, %s3339, %s3327, 128, 128, 8
        $region60: #{cc_module_forward.1} parent=51 // pred_fallthru
          _
      $region52: #{cc_module_forward.1} parent=5 // pred_fallthru
        _
      %p3347 = scmp.le.s32.totalorder 2, %s21
      // Predicated region
      $region61: #{cc_module_forward.1} parent=5 // pred_check
        %p3348 = pneg %p3347
      $region62: #{cc_module_forward.1} parent=5 // pred_check_branch
        %3350 = sbr.rel (%p3348) target = $region64
      $region63: #{cc_module_forward.1} parent=5 // pred_region
        %s3351 = ssub.s32 %s21, 2
        // Predicated region
        $region65: #{cc_module_forward.1} parent=63 // pred_check
          %p3352 = pneg %p223
        $region66: #{cc_module_forward.1} parent=63 // pred_check_branch
          %3354 = sbr.rel (%p3352) target = $region68
        $region67: #{cc_module_forward.1} parent=63 // pred_region
          %s3355 = sand.u32 %s208, 1
          %s3356 = scalar_lea.sflag [#allocation5], %s3355
          %s3357 = sand.u32 %s208, 1
          %s3358 = smul.addr %s3357, 64
          %s3359 = scalar_lea.vmem [#allocation6], %s3358
          %3360 = dma.done %s3356, 1024
        $region68: #{cc_module_forward.1} parent=63 // pred_fallthru
          _
      $region64: #{cc_module_forward.1} parent=5 // pred_fallthru
        _
    $region6: #{cc_module_forward.1} parent=1 // loop_footer
      %s25 = sadd.s32 1, %s21
    $region7: #{cc_module_forward.1} parent=1 // loop_footer_branch
      %20 = sbr.rel target = $region3
    $region8: #{cc_module_forward.1} parent=1 // loop_exit
      _
    %3361 = vsyncpa [#allocation4], 1
    %s3362 = scalar_lea.sflag [#allocation4], 1
    %3363 = vsyncpa %s3362, 1
    %3364 = vsyncpa [#allocation5], 1
    %s3365 = scalar_lea.sflag [#allocation5], 1
    %3366 = vsyncpa %s3365, 1

</llo_original>
